<compile_context>
chip_gen: v7x
topology: tpu7x:2x2x1
jax: 0.10.0
libtpu: 0.0.40
codegen_flags: <defaults>
</compile_context>

<pallas_src>
import functools

import jax
import jax.numpy as jnp
from jax import lax
from jax.experimental import pallas as pl
from jax.experimental.pallas import tpu as pltpu


def _conv3_same(x, w_cat, b):
    """kernel_size=3, padding='same' Conv1d as ONE MXU matmul.

    x:     (T, Cin)        channel-last activation
    w_cat: (3*Cin, Cout)   = [W0; W1; W2] stacked along the contraction axis
    b:     (1, Cout)

    y[t] = x[t-1] @ W0 + x[t] @ W1 + x[t+1] @ W2 + b   (zero-padded edges)
    """
    cin = x.shape[1]
    zrow = jnp.zeros((1, cin), dtype=x.dtype)
    x_prev = jnp.concatenate([zrow, x[:-1, :]], axis=0)   # x[t-1], zero at t=0
    x_next = jnp.concatenate([x[1:, :], zrow], axis=0)    # x[t+1], zero at t=T-1
    x3 = jnp.concatenate([x_prev, x, x_next], axis=1)     # (T, 3*Cin)
    return jnp.dot(x3, w_cat, preferred_element_type=jnp.float32) + b


def _alignment_kernel(q_ref, k_ref, prior_ref, keep_ref,
                      qw1_ref, qb1_ref, qw2_ref, qb2_ref, qw3_ref, qb3_ref,
                      kw1_ref, kb1_ref, kw2_ref, kb2_ref,
                      attn_ref, logprob_ref,
                      a_scr, b_scr,
                      *, temperature, tile_t1):
    t1 = pl.program_id(1)

    # Projections are computed once per batch row (first T1 tile) and cached in
    # VMEM scratch, already packed for the fused distance matmul.
    @pl.when(t1 == 0)
    def _():
        # query_proj: Conv(k=3) -> ReLU -> Conv(k=1) -> ReLU -> Conv(k=1)
        q = q_ref[0]                                              # (T1, Cq)
        h = jnp.maximum(_conv3_same(q, qw1_ref[...], qb1_ref[...]), 0.0)
        h = jnp.maximum(
            jnp.dot(h, qw2_ref[...], preferred_element_type=jnp.float32)
            + qb2_ref[...], 0.0)
        q_enc = (jnp.dot(h, qw3_ref[...], preferred_element_type=jnp.float32)
                 + qb3_ref[...])                                  # (T1, Ca)

        # key_proj: Conv(k=3) -> ReLU -> Conv(k=1)
        k = k_ref[0]                                              # (T2, Ck)
        g = jnp.maximum(_conv3_same(k, kw1_ref[...], kb1_ref[...]), 0.0)
        k_enc = (jnp.dot(g, kw2_ref[...], preferred_element_type=jnp.float32)
                 + kb2_ref[...])                                  # (T2, Ca)

        # Fold the distance bias terms and the -temperature scale into the MXU:
        #   -temp*(||q||^2 - 2 q.k + ||k||^2)
        #     = [q_enc | q2 | 1] @ [2*temp*k_enc | -temp*1 | -temp*k2]^T
        q2 = jnp.sum(q_enc * q_enc, axis=-1, keepdims=True)       # (T1, 1)
        k2 = jnp.sum(k_enc * k_enc, axis=-1, keepdims=True)       # (T2, 1)
        a_scr[...] = jnp.concatenate([q_enc, q2, jnp.ones_like(q2)], axis=1)
        b_scr[...] = jnp.concatenate(
            [(2.0 * temperature) * k_enc,
             (-temperature) * jnp.ones_like(k2),
             (-temperature) * k2], axis=1)

    start = t1 * tile_t1
    a_tile = a_scr[pl.ds(start, tile_t1), :]                      # (tile, Ca+2)
    b_full = b_scr[...]                                           # (T2,   Ca+2)
    attn = lax.dot_general(a_tile, b_full, (((1,), (1,)), ((), ())),
                           preferred_element_type=jnp.float32)    # (tile, T2)

    prior_eps = prior_ref[0] + 1e-8                               # (tile, T2)
    keep = keep_ref[0]                                            # (1, T2)

    # log_softmax over T2 + log prior  -> attn_logprob (unmasked, as in torch)
    m = jnp.max(attn, axis=-1, keepdims=True)
    e1 = jnp.exp(attn - m)
    s1 = jnp.sum(e1, axis=-1, keepdims=True)
    log_attn = (attn - m - jnp.log(s1)) + jnp.log(prior_eps)
    logprob_ref[0] = log_attn.astype(logprob_ref.dtype)

    # masked softmax over T2, reusing e1 (the row-constant lse cancels):
    #   softmax(where(keep, log_attn, -inf)) == normalize(e1 * prior_eps * keep)
    num = e1 * prior_eps * keep
    inv = 1.0 / jnp.sum(num, axis=-1, keepdims=True)              # (tile, 1)
    attn_ref[0] = (num * inv).astype(attn_ref.dtype)


def _pick_tile_t1(t1):
    if t1 <= 512:
        return t1
    for cand in (512, 384, 256, 128):
        if t1 % cand == 0:
            return cand
    return t1


def alignment_encoder(queries, keys, mask, attn_prior, params, temperature):
    """Pallas AlignmentEncoder forward.

    queries:    (B, n_mel, T1)  float32  (mel data, NCL like torch)
    keys:       (B, n_text, T2) float32  (text data, NCL like torch)
    mask:       (B, T2) bool, True = padded text position
    attn_prior: (B, T1, T2) float32
    Returns (attn, attn_logprob), each (B, 1, T1, T2).
    """
    B, Cq, T1 = queries.shape
    _, Ck, T2 = keys.shape
    Ca = params["q_conv3_w"].shape[0]

    q_nlc = jnp.transpose(queries, (0, 2, 1))               # (B, T1, Cq)
    k_nlc = jnp.transpose(keys, (0, 2, 1))                  # (B, T2, Ck)
    keep = (1.0 - mask.astype(jnp.float32))[:, None, :]     # (B, 1, T2) lane-dense

    def cat3(w):   # torch conv weight (Cout, Cin, 3) -> (3*Cin, Cout)
        return jnp.concatenate([w[:, :, t].T for t in range(3)], axis=0)

    def m1(w):     # torch conv weight (Cout, Cin, 1) -> (Cin, Cout)
        return w[:, :, 0].T

    def rowb(b):   # (Cout,) -> (1, Cout)
        return b[None, :]

    qw1, qb1 = cat3(params["q_conv1_w"]), rowb(params["q_conv1_b"])
    qw2, qb2 = m1(params["q_conv2_w"]), rowb(params["q_conv2_b"])
    qw3, qb3 = m1(params["q_conv3_w"]), rowb(params["q_conv3_b"])
    kw1, kb1 = cat3(params["k_conv1_w"]), rowb(params["k_conv1_b"])
    kw2, kb2 = m1(params["k_conv2_w"]), rowb(params["k_conv2_b"])

    tile_t1 = _pick_tile_t1(T1)
    assert T1 % tile_t1 == 0
    n_t1 = T1 // tile_t1

    def wfull(arr):
        nd = arr.ndim
        return pl.BlockSpec(arr.shape, lambda b, t, _n=nd: (0,) * _n)

    kernel = functools.partial(_alignment_kernel,
                               temperature=float(temperature),
                               tile_t1=tile_t1)

    attn, attn_logprob = pl.pallas_call(
        kernel,
        out_shape=(jax.ShapeDtypeStruct((B, T1, T2), jnp.float32),
                   jax.ShapeDtypeStruct((B, T1, T2), jnp.float32)),
        grid_spec=pltpu.PrefetchScalarGridSpec(
            num_scalar_prefetch=0,
            grid=(B, n_t1),
            in_specs=[
                pl.BlockSpec((1, T1, Cq), lambda b, t: (b, 0, 0)),
                pl.BlockSpec((1, T2, Ck), lambda b, t: (b, 0, 0)),
                pl.BlockSpec((1, tile_t1, T2), lambda b, t: (b, t, 0)),
                pl.BlockSpec((1, 1, T2), lambda b, t: (b, 0, 0)),
                wfull(qw1), wfull(qb1),
                wfull(qw2), wfull(qb2),
                wfull(qw3), wfull(qb3),
                wfull(kw1), wfull(kb1),
                wfull(kw2), wfull(kb2),
            ],
            out_specs=[pl.BlockSpec((1, tile_t1, T2), lambda b, t: (b, t, 0)),
                       pl.BlockSpec((1, tile_t1, T2), lambda b, t: (b, t, 0))],
            scratch_shapes=[pltpu.VMEM((T1, Ca + 2), jnp.float32),
                            pltpu.VMEM((T2, Ca + 2), jnp.float32)],
        ),
        compiler_params=pltpu.CompilerParams(
            dimension_semantics=("parallel", "arbitrary"),
            vmem_limit_bytes=56 * 1024 * 1024),
    )(q_nlc, k_nlc, attn_prior, keep,
      qw1, qb1, qw2, qb2, qw3, qb3, kw1, kb1, kw2, kb2)

    return attn[:, None], attn_logprob[:, None]


# ---------------------------------------------------------------------------
# Pure-JAX reference replicating the PyTorch forward semantics (NCL convs).
# ---------------------------------------------------------------------------
def ref_forward(queries, keys, mask, attn_prior, params, temperature):
    dn = ("NCH", "OIH", "NCH")

    def conv(x, w, b, pad):
        y = lax.conv_general_dilated(x, w, window_strides=(1,),
                                     padding=[(pad, pad)],
                                     dimension_numbers=dn)
        return y + b[None, :, None]

    kx = jnp.maximum(conv(keys, params["k_conv1_w"], params["k_conv1_b"], 1), 0.0)
    keys_enc = conv(kx, params["k_conv2_w"], params["k_conv2_b"], 0)

    qx = jnp.maximum(conv(queries, params["q_conv1_w"], params["q_conv1_b"], 1), 0.0)
    qx = jnp.maximum(conv(qx, params["q_conv2_w"], params["q_conv2_b"], 0), 0.0)
    queries_enc = conv(qx, params["q_conv3_w"], params["q_conv3_b"], 0)

    attn = (queries_enc[:, :, :, None] - keys_enc[:, :, None, :]) ** 2
    attn = -temperature * jnp.sum(attn, axis=1, keepdims=True)          # (B,1,T1,T2)
    attn = jax.nn.log_softmax(attn, axis=3) + jnp.log(attn_prior[:, None] + 1e-8)
    attn_logprob = attn
    attn = jnp.where(mask[:, None, None, :], -jnp.inf, attn)
    attn = jax.nn.softmax(attn, axis=3)
    return attn, attn_logprob


def make_params(key, n_mel, n_text, n_att):
    ks = jax.random.split(key, 10)
    s = 0.1
    return {
        "q_conv1_w": s * jax.random.normal(ks[0], (2 * n_mel, n_mel, 3), jnp.float32),
        "q_conv1_b": s * jax.random.normal(ks[1], (2 * n_mel,), jnp.float32),
        "q_conv2_w": s * jax.random.normal(ks[2], (n_mel, 2 * n_mel, 1), jnp.float32),
        "q_conv2_b": s * jax.random.normal(ks[3], (n_mel,), jnp.float32),
        "q_conv3_w": s * jax.random.normal(ks[4], (n_att, n_mel, 1), jnp.float32),
        "q_conv3_b": s * jax.random.normal(ks[5], (n_att,), jnp.float32),
        "k_conv1_w": s * jax.random.normal(ks[6], (2 * n_text, n_text, 3), jnp.float32),
        "k_conv1_b": s * jax.random.normal(ks[7], (2 * n_text,), jnp.float32),
        "k_conv2_w": s * jax.random.normal(ks[8], (n_att, 2 * n_text, 1), jnp.float32),
        "k_conv2_b": s * jax.random.normal(ks[9], (n_att,), jnp.float32),
    }


if __name__ == "__main__":
    B, T1, T2 = 2, 128, 128              # T1 = mel frames, T2 = text tokens
    n_mel, n_text, n_att = 16, 8, 16
    temperature = 0.0005

    key = jax.random.PRNGKey(0)
    kq, kk, kp, kpr = jax.random.split(key, 4)
    queries = jax.random.normal(kq, (B, n_mel, T1), jnp.float32)
    keys = jax.random.normal(kk, (B, n_text, T2), jnp.float32)

    # second sequence has 96 valid text tokens; True = padded
    text_lens = jnp.array([T2, 96], dtype=jnp.int32)
    mask = jnp.arange(T2)[None, :] >= text_lens[:, None]          # (B, T2) bool

    prior = jax.random.uniform(kpr, (B, T1, T2), jnp.float32, 0.1, 1.0)
    prior = prior / jnp.sum(prior, axis=-1, keepdims=True)        # row-normalized prior

    params = make_params(kp, n_mel, n_text, n_att)

    attn, attn_logprob = alignment_encoder(queries, keys, mask, prior, params,
                                           temperature)
    attn = jax.block_until_ready(attn)
    attn_logprob = jax.block_until_ready(attn_logprob)

    ref_attn, ref_lp = ref_forward(queries, keys, mask, prior, params, temperature)

    assert attn.shape == (B, 1, T1, T2), attn.shape
    assert attn_logprob.shape == (B, 1, T1, T2), attn_logprob.shape
    assert jnp.allclose(attn, ref_attn, rtol=1e-3, atol=1e-4), (
        float(jnp.max(jnp.abs(attn - ref_attn))))
    assert jnp.allclose(attn_logprob, ref_lp, rtol=1e-3, atol=1e-4), (
        float(jnp.max(jnp.abs(attn_logprob - ref_lp))))

    print("KERNEL_OK")
</pallas_src>

<mosaic_0001>
module attributes {stable_mosaic.version = 11 : i64} {
  func.func @_alignment_kernel(%arg0: i32, %arg1: i32, %arg2: memref<1x128x16xf32, #tpu.memory_space<vmem>>, %arg3: memref<1x128x8xf32, #tpu.memory_space<vmem>>, %arg4: memref<1x128x128xf32, #tpu.memory_space<vmem>>, %arg5: memref<1x1x128xf32, #tpu.memory_space<vmem>>, %arg6: memref<48x32xf32, #tpu.memory_space<vmem>>, %arg7: memref<1x32xf32, #tpu.memory_space<vmem>>, %arg8: memref<32x16xf32, #tpu.memory_space<vmem>>, %arg9: memref<1x16xf32, #tpu.memory_space<vmem>>, %arg10: memref<16x16xf32, #tpu.memory_space<vmem>>, %arg11: memref<1x16xf32, #tpu.memory_space<vmem>>, %arg12: memref<24x16xf32, #tpu.memory_space<vmem>>, %arg13: memref<1x16xf32, #tpu.memory_space<vmem>>, %arg14: memref<16x16xf32, #tpu.memory_space<vmem>>, %arg15: memref<1x16xf32, #tpu.memory_space<vmem>>, %arg16: memref<1x128x128xf32, #tpu.memory_space<vmem>>, %arg17: memref<1x128x128xf32, #tpu.memory_space<vmem>>, %arg18: memref<128x18xf32, #tpu.memory_space<vmem>>, %arg19: memref<128x18xf32, #tpu.memory_space<vmem>>) attributes {dimension_semantics = [#tpu.dimension_semantics<parallel>, #tpu.dimension_semantics<arbitrary>], iteration_bounds = array<i64: 2, 1>, scalar_prefetch = 0 : i64, scratch_operands = 2 : i64, tpu.core_type = #tpu.core_type<tc>, window_params = [{transform_indices = @transform_0, window_bounds = array<i64: 1, 128, 16>}, {transform_indices = @transform_1, window_bounds = array<i64: 1, 128, 8>}, {transform_indices = @transform_2, window_bounds = array<i64: 1, 128, 128>}, {transform_indices = @transform_3, window_bounds = array<i64: 1, 1, 128>}, {pipeline_mode = #tpu.pipeline_mode<synchronous>, transform_indices = @transform_4, window_bounds = array<i64: 48, 32>}, {pipeline_mode = #tpu.pipeline_mode<synchronous>, transform_indices = @transform_5, window_bounds = array<i64: 1, 32>}, {pipeline_mode = #tpu.pipeline_mode<synchronous>, transform_indices = @transform_6, window_bounds = array<i64: 32, 16>}, {pipeline_mode = #tpu.pipeline_mode<synchronous>, transform_indices = @transform_7, window_bounds = array<i64: 1, 16>}, {pipeline_mode = #tpu.pipeline_mode<synchronous>, transform_indices = @transform_8, window_bounds = array<i64: 16, 16>}, {pipeline_mode = #tpu.pipeline_mode<synchronous>, transform_indices = @transform_9, window_bounds = array<i64: 1, 16>}, {pipeline_mode = #tpu.pipeline_mode<synchronous>, transform_indices = @transform_10, window_bounds = array<i64: 24, 16>}, {pipeline_mode = #tpu.pipeline_mode<synchronous>, transform_indices = @transform_11, window_bounds = array<i64: 1, 16>}, {pipeline_mode = #tpu.pipeline_mode<synchronous>, transform_indices = @transform_12, window_bounds = array<i64: 16, 16>}, {pipeline_mode = #tpu.pipeline_mode<synchronous>, transform_indices = @transform_13, window_bounds = array<i64: 1, 16>}, {transform_indices = @transform_14, window_bounds = array<i64: 1, 128, 128>}, {transform_indices = @transform_15, window_bounds = array<i64: 1, 128, 128>}]} {
    %c0_i32 = arith.constant 0 : i32
    %0 = arith.cmpi eq, %arg1, %c0_i32 : i32
    %1 = arith.extui %0 : i1 to i32
    %c0_i32_0 = arith.constant 0 : i32
    %2 = arith.cmpi ne, %1, %c0_i32_0 : i32
    scf.if %2 {
      %c0_20 = arith.constant 0 : index
      %c0_21 = arith.constant 0 : index
      %c0_22 = arith.constant 0 : index
      %43 = vector.load %arg2[%c0_20, %c0_21, %c0_22] : memref<1x128x16xf32, #tpu.memory_space<vmem>>, vector<1x128x16xf32>
      %44 = vector.shape_cast %43 : vector<1x128x16xf32> to vector<128x16xf32>
      %c0_23 = arith.constant 0 : index
      %c0_24 = arith.constant 0 : index
      %45 = vector.load %arg6[%c0_23, %c0_24] : memref<48x32xf32, #tpu.memory_space<vmem>>, vector<48x32xf32>
      %c0_25 = arith.constant 0 : index
      %c0_26 = arith.constant 0 : index
      %46 = vector.load %arg7[%c0_25, %c0_26] : memref<1x32xf32, #tpu.memory_space<vmem>>, vector<1x32xf32>
      %cst_27 = arith.constant 0.000000e+00 : f32
      %47 = vector.broadcast %cst_27 : f32 to vector<1x16xf32>
      %48 = vector.extract_strided_slice %44 {offsets = [0, 0], sizes = [127, 16], strides = [1, 1]} : vector<128x16xf32> to vector<127x16xf32>
      %49 = tpu.concatenate %47, %48 in 0 : vector<1x16xf32>, vector<127x16xf32> -> vector<128x16xf32>
      %50 = vector.extract_strided_slice %44 {offsets = [1, 0], sizes = [127, 16], strides = [1, 1]} : vector<128x16xf32> to vector<127x16xf32>
      %51 = tpu.concatenate %50, %47 in 0 : vector<127x16xf32>, vector<1x16xf32> -> vector<128x16xf32>
      %52 = tpu.concatenate %49, %44, %51 in 1 : vector<128x16xf32>, vector<128x16xf32>, vector<128x16xf32> -> vector<128x48xf32>
      %cst_28 = arith.constant dense<0.000000e+00> : vector<128x32xf32>
      %53 = tpu.matmul %52, %45, %cst_28 {dimension_numbers = #tpu.dot_dimension_numbers<[1], [0], [0], [1], [0, 0, 1, 1], [], []>} : vector<128x48xf32>, vector<48x32xf32>, vector<128x32xf32> -> vector<128x32xf32>
      %54 = vector.broadcast %46 : vector<1x32xf32> to vector<128x32xf32>
      %55 = arith.addf %53, %54 : vector<128x32xf32>
      %cst_29 = arith.constant 0.000000e+00 : f32
      %56 = vector.broadcast %cst_29 : f32 to vector<128x32xf32>
      %57 = arith.maximumf %55, %56 : vector<128x32xf32>
      %c0_30 = arith.constant 0 : index
      %c0_31 = arith.constant 0 : index
      %58 = vector.load %arg8[%c0_30, %c0_31] : memref<32x16xf32, #tpu.memory_space<vmem>>, vector<32x16xf32>
      %cst_32 = arith.constant dense<0.000000e+00> : vector<128x16xf32>
      %59 = tpu.matmul %57, %58, %cst_32 {dimension_numbers = #tpu.dot_dimension_numbers<[1], [0], [0], [1], [0, 0, 1, 1], [], []>} : vector<128x32xf32>, vector<32x16xf32>, vector<128x16xf32> -> vector<128x16xf32>
      %c0_33 = arith.constant 0 : index
      %c0_34 = arith.constant 0 : index
      %60 = vector.load %arg9[%c0_33, %c0_34] : memref<1x16xf32, #tpu.memory_space<vmem>>, vector<1x16xf32>
      %61 = vector.broadcast %60 : vector<1x16xf32> to vector<128x16xf32>
      %62 = arith.addf %59, %61 : vector<128x16xf32>
      %cst_35 = arith.constant 0.000000e+00 : f32
      %63 = vector.broadcast %cst_35 : f32 to vector<128x16xf32>
      %64 = arith.maximumf %62, %63 : vector<128x16xf32>
      %c0_36 = arith.constant 0 : index
      %c0_37 = arith.constant 0 : index
      %65 = vector.load %arg10[%c0_36, %c0_37] : memref<16x16xf32, #tpu.memory_space<vmem>>, vector<16x16xf32>
      %cst_38 = arith.constant dense<0.000000e+00> : vector<128x16xf32>
      %66 = tpu.matmul %64, %65, %cst_38 {dimension_numbers = #tpu.dot_dimension_numbers<[1], [0], [0], [1], [0, 0, 1, 1], [], []>} : vector<128x16xf32>, vector<16x16xf32>, vector<128x16xf32> -> vector<128x16xf32>
      %c0_39 = arith.constant 0 : index
      %c0_40 = arith.constant 0 : index
      %67 = vector.load %arg11[%c0_39, %c0_40] : memref<1x16xf32, #tpu.memory_space<vmem>>, vector<1x16xf32>
      %68 = vector.broadcast %67 : vector<1x16xf32> to vector<128x16xf32>
      %69 = arith.addf %66, %68 : vector<128x16xf32>
      %c0_41 = arith.constant 0 : index
      %c0_42 = arith.constant 0 : index
      %c0_43 = arith.constant 0 : index
      %70 = vector.load %arg3[%c0_41, %c0_42, %c0_43] : memref<1x128x8xf32, #tpu.memory_space<vmem>>, vector<1x128x8xf32>
      %71 = vector.shape_cast %70 : vector<1x128x8xf32> to vector<128x8xf32>
      %c0_44 = arith.constant 0 : index
      %c0_45 = arith.constant 0 : index
      %72 = vector.load %arg12[%c0_44, %c0_45] : memref<24x16xf32, #tpu.memory_space<vmem>>, vector<24x16xf32>
      %c0_46 = arith.constant 0 : index
      %c0_47 = arith.constant 0 : index
      %73 = vector.load %arg13[%c0_46, %c0_47] : memref<1x16xf32, #tpu.memory_space<vmem>>, vector<1x16xf32>
      %cst_48 = arith.constant 0.000000e+00 : f32
      %74 = vector.broadcast %cst_48 : f32 to vector<1x8xf32>
      %75 = vector.extract_strided_slice %71 {offsets = [0, 0], sizes = [127, 8], strides = [1, 1]} : vector<128x8xf32> to vector<127x8xf32>
      %76 = tpu.concatenate %74, %75 in 0 : vector<1x8xf32>, vector<127x8xf32> -> vector<128x8xf32>
      %77 = vector.extract_strided_slice %71 {offsets = [1, 0], sizes = [127, 8], strides = [1, 1]} : vector<128x8xf32> to vector<127x8xf32>
      %78 = tpu.concatenate %77, %74 in 0 : vector<127x8xf32>, vector<1x8xf32> -> vector<128x8xf32>
      %79 = tpu.concatenate %76, %71, %78 in 1 : vector<128x8xf32>, vector<128x8xf32>, vector<128x8xf32> -> vector<128x24xf32>
      %cst_49 = arith.constant dense<0.000000e+00> : vector<128x16xf32>
      %80 = tpu.matmul %79, %72, %cst_49 {dimension_numbers = #tpu.dot_dimension_numbers<[1], [0], [0], [1], [0, 0, 1, 1], [], []>} : vector<128x24xf32>, vector<24x16xf32>, vector<128x16xf32> -> vector<128x16xf32>
      %81 = vector.broadcast %73 : vector<1x16xf32> to vector<128x16xf32>
      %82 = arith.addf %80, %81 : vector<128x16xf32>
      %cst_50 = arith.constant 0.000000e+00 : f32
      %83 = vector.broadcast %cst_50 : f32 to vector<128x16xf32>
      %84 = arith.maximumf %82, %83 : vector<128x16xf32>
      %c0_51 = arith.constant 0 : index
      %c0_52 = arith.constant 0 : index
      %85 = vector.load %arg14[%c0_51, %c0_52] : memref<16x16xf32, #tpu.memory_space<vmem>>, vector<16x16xf32>
      %cst_53 = arith.constant dense<0.000000e+00> : vector<128x16xf32>
      %86 = tpu.matmul %84, %85, %cst_53 {dimension_numbers = #tpu.dot_dimension_numbers<[1], [0], [0], [1], [0, 0, 1, 1], [], []>} : vector<128x16xf32>, vector<16x16xf32>, vector<128x16xf32> -> vector<128x16xf32>
      %c0_54 = arith.constant 0 : index
      %c0_55 = arith.constant 0 : index
      %87 = vector.load %arg15[%c0_54, %c0_55] : memref<1x16xf32, #tpu.memory_space<vmem>>, vector<1x16xf32>
      %88 = vector.broadcast %87 : vector<1x16xf32> to vector<128x16xf32>
      %89 = arith.addf %86, %88 : vector<128x16xf32>
      %90 = arith.mulf %69, %69 : vector<128x16xf32>
      %cst_56 = arith.constant dense<0.000000e+00> : vector<128xf32>
      %91 = vector.multi_reduction <add>, %90, %cst_56 [1] : vector<128x16xf32> to vector<128xf32>
      %92 = vector.shape_cast %91 : vector<128xf32> to vector<128x1xf32>
      %93 = arith.mulf %89, %89 : vector<128x16xf32>
      %cst_57 = arith.constant dense<0.000000e+00> : vector<128xf32>
      %94 = vector.multi_reduction <add>, %93, %cst_57 [1] : vector<128x16xf32> to vector<128xf32>
      %95 = vector.shape_cast %94 : vector<128xf32> to vector<128x1xf32>
      %cst_58 = arith.constant 1.000000e+00 : f32
      %96 = vector.broadcast %cst_58 : f32 to vector<128x1xf32>
      %97 = tpu.concatenate %69, %92, %96 in 1 : vector<128x16xf32>, vector<128x1xf32>, vector<128x1xf32> -> vector<128x18xf32>
      %c0_59 = arith.constant 0 : index
      %c0_60 = arith.constant 0 : index
      %98 = vector.load %arg18[%c0_59, %c0_60] : memref<128x18xf32, #tpu.memory_space<vmem>>, vector<128x18xf32>
      tpu.vector_store %arg18[%c0_59, %c0_60], %97 {strides = array<i32>} : memref<128x18xf32, #tpu.memory_space<vmem>>, vector<128x18xf32>,
      %cst_61 = arith.constant 1.000000e-03 : f32
      %99 = vector.broadcast %cst_61 : f32 to vector<128x16xf32>
      %100 = arith.mulf %99, %89 : vector<128x16xf32>
      %cst_62 = arith.constant 1.000000e+00 : f32
      %101 = vector.broadcast %cst_62 : f32 to vector<128x1xf32>
      %cst_63 = arith.constant -5.000000e-04 : f32
      %102 = vector.broadcast %cst_63 : f32 to vector<128x1xf32>
      %103 = arith.mulf %102, %101 : vector<128x1xf32>
      %cst_64 = arith.constant -5.000000e-04 : f32
      %104 = vector.broadcast %cst_64 : f32 to vector<128x1xf32>
      %105 = arith.mulf %104, %95 : vector<128x1xf32>
      %106 = tpu.concatenate %100, %103, %105 in 1 : vector<128x16xf32>, vector<128x1xf32>, vector<128x1xf32> -> vector<128x18xf32>
      %c0_65 = arith.constant 0 : index
      %c0_66 = arith.constant 0 : index
      %107 = vector.load %arg19[%c0_65, %c0_66] : memref<128x18xf32, #tpu.memory_space<vmem>>, vector<128x18xf32>
      tpu.vector_store %arg19[%c0_65, %c0_66], %106 {strides = array<i32>} : memref<128x18xf32, #tpu.memory_space<vmem>>, vector<128x18xf32>,
    } else {
    }
    %c128_i32 = arith.constant 128 : i32
    %3 = arith.muli %arg1, %c128_i32 : i32
    %4 = arith.index_cast %3 : i32 to index
    %c0 = arith.constant 0 : index
    %5 = vector.load %arg18[%4, %c0] : memref<128x18xf32, #tpu.memory_space<vmem>>, vector<128x18xf32>
    %c0_1 = arith.constant 0 : index
    %c0_2 = arith.constant 0 : index
    %6 = vector.load %arg19[%c0_1, %c0_2] : memref<128x18xf32, #tpu.memory_space<vmem>>, vector<128x18xf32>
    %cst = arith.constant dense<0.000000e+00> : vector<128x128xf32>
    %7 = tpu.matmul %5, %6, %cst {dimension_numbers = #tpu.dot_dimension_numbers<[1], [1], [0], [0], [0, 0, 1, 0], [], []>} : vector<128x18xf32>, vector<128x18xf32>, vector<128x128xf32> -> vector<128x128xf32>
    %c0_3 = arith.constant 0 : index
    %c0_4 = arith.constant 0 : index
    %c0_5 = arith.constant 0 : index
    %8 = vector.load %arg4[%c0_3, %c0_4, %c0_5] : memref<1x128x128xf32, #tpu.memory_space<vmem>>, vector<1x128x128xf32>
    %9 = vector.shape_cast %8 : vector<1x128x128xf32> to vector<128x128xf32>
    %cst_6 = arith.constant 9.99999993E-9 : f32
    %10 = vector.broadcast %cst_6 : f32 to vector<128x128xf32>
    %11 = arith.addf %9, %10 : vector<128x128xf32>
    %c0_7 = arith.constant 0 : index
    %c0_8 = arith.constant 0 : index
    %c0_9 = arith.constant 0 : index
    %12 = vector.load %arg5[%c0_7, %c0_8, %c0_9] : memref<1x1x128xf32, #tpu.memory_space<vmem>>, vector<1x1x128xf32>
    %13 = vector.shape_cast %12 : vector<1x1x128xf32> to vector<1x128xf32>
    %cst_10 = arith.constant dense<0xFF800000> : vector<128xf32>
    %14 = vector.multi_reduction <maximumf>, %7, %cst_10 [1] : vector<128x128xf32> to vector<128xf32>
    %15 = vector.shape_cast %14 : vector<128xf32> to vector<128x1xf32>
    %16 = vector.broadcast %15 : vector<128x1xf32> to vector<128x128xf32>
    %17 = arith.subf %7, %16 : vector<128x128xf32>
    %18 = math.exp %17 : vector<128x128xf32>
    %cst_11 = arith.constant dense<0.000000e+00> : vector<128xf32>
    %19 = vector.multi_reduction <add>, %18, %cst_11 [1] : vector<128x128xf32> to vector<128xf32>
    %20 = vector.shape_cast %19 : vector<128xf32> to vector<128x1xf32>
    %21 = vector.broadcast %15 : vector<128x1xf32> to vector<128x128xf32>
    %22 = arith.subf %7, %21 : vector<128x128xf32>
    %23 = math.log %20 : vector<128x1xf32>
    %24 = vector.broadcast %23 : vector<128x1xf32> to vector<128x128xf32>
    %25 = arith.subf %22, %24 : vector<128x128xf32>
    %26 = math.log %11 : vector<128x128xf32>
    %27 = arith.addf %25, %26 : vector<128x128xf32>
    %c0_12 = arith.constant 0 : index
    %c0_13 = arith.constant 0 : index
    %c0_14 = arith.constant 0 : index
    %28 = vector.load %arg17[%c0_12, %c0_13, %c0_14] : memref<1x128x128xf32, #tpu.memory_space<vmem>>, vector<1x128x128xf32>
    %29 = vector.shape_cast %28 : vector<1x128x128xf32> to vector<128x128xf32>
    %30 = vector.shape_cast %27 : vector<128x128xf32> to vector<1x128x128xf32>
    tpu.vector_store %arg17[%c0_12, %c0_13, %c0_14], %30 {strides = array<i32>} : memref<1x128x128xf32, #tpu.memory_space<vmem>>, vector<1x128x128xf32>,
    %31 = arith.mulf %18, %11 : vector<128x128xf32>
    %32 = vector.broadcast %13 : vector<1x128xf32> to vector<128x128xf32>
    %33 = arith.mulf %31, %32 : vector<128x128xf32>
    %cst_15 = arith.constant dense<0.000000e+00> : vector<128xf32>
    %34 = vector.multi_reduction <add>, %33, %cst_15 [1] : vector<128x128xf32> to vector<128xf32>
    %35 = vector.shape_cast %34 : vector<128xf32> to vector<128x1xf32>
    %cst_16 = arith.constant 1.000000e+00 : f32
    %36 = vector.broadcast %cst_16 : f32 to vector<128x1xf32>
    %37 = arith.divf %36, %35 : vector<128x1xf32>
    %38 = vector.broadcast %37 : vector<128x1xf32> to vector<128x128xf32>
    %39 = arith.mulf %33, %38 : vector<128x128xf32>
    %c0_17 = arith.constant 0 : index
    %c0_18 = arith.constant 0 : index
    %c0_19 = arith.constant 0 : index
    %40 = vector.load %arg16[%c0_17, %c0_18, %c0_19] : memref<1x128x128xf32, #tpu.memory_space<vmem>>, vector<1x128x128xf32>
    %41 = vector.shape_cast %40 : vector<1x128x128xf32> to vector<128x128xf32>
    %42 = vector.shape_cast %39 : vector<128x128xf32> to vector<1x128x128xf32>
    tpu.vector_store %arg16[%c0_17, %c0_18, %c0_19], %42 {strides = array<i32>} : memref<1x128x128xf32, #tpu.memory_space<vmem>>, vector<1x128x128xf32>,
    return
  }
  func.func @transform_0(%arg0: i32, %arg1: i32) -> (i32, i32, i32) {
    %c0_i32 = arith.constant 0 : i32
    %c0_i32_0 = arith.constant 0 : i32
    %c0_i32_1 = arith.constant 0 : i32
    return %arg0, %c0_i32, %c0_i32_0 : i32, i32, i32
  }
  func.func @transform_1(%arg0: i32, %arg1: i32) -> (i32, i32, i32) {
    %c0_i32 = arith.constant 0 : i32
    %c0_i32_0 = arith.constant 0 : i32
    %c0_i32_1 = arith.constant 0 : i32
    return %arg0, %c0_i32, %c0_i32_0 : i32, i32, i32
  }
  func.func @transform_2(%arg0: i32, %arg1: i32) -> (i32, i32, i32) {
    %c0_i32 = arith.constant 0 : i32
    %c0_i32_0 = arith.constant 0 : i32
    return %arg0, %arg1, %c0_i32 : i32, i32, i32
  }
  func.func @transform_3(%arg0: i32, %arg1: i32) -> (i32, i32, i32) {
    %c0_i32 = arith.constant 0 : i32
    %c0_i32_0 = arith.constant 0 : i32
    %c0_i32_1 = arith.constant 0 : i32
    return %arg0, %c0_i32, %c0_i32_0 : i32, i32, i32
  }
  func.func @transform_4(%arg0: i32, %arg1: i32) -> (i32, i32) {
    %c0_i32 = arith.constant 0 : i32
    %c0_i32_0 = arith.constant 0 : i32
    %c0_i32_1 = arith.constant 0 : i32
    return %c0_i32, %c0_i32_0 : i32, i32
  }
  func.func @transform_5(%arg0: i32, %arg1: i32) -> (i32, i32) {
    %c0_i32 = arith.constant 0 : i32
    %c0_i32_0 = arith.constant 0 : i32
    %c0_i32_1 = arith.constant 0 : i32
    return %c0_i32, %c0_i32_0 : i32, i32
  }
  func.func @transform_6(%arg0: i32, %arg1: i32) -> (i32, i32) {
    %c0_i32 = arith.constant 0 : i32
    %c0_i32_0 = arith.constant 0 : i32
    %c0_i32_1 = arith.constant 0 : i32
    return %c0_i32, %c0_i32_0 : i32, i32
  }
  func.func @transform_7(%arg0: i32, %arg1: i32) -> (i32, i32) {
    %c0_i32 = arith.constant 0 : i32
    %c0_i32_0 = arith.constant 0 : i32
    %c0_i32_1 = arith.constant 0 : i32
    return %c0_i32, %c0_i32_0 : i32, i32
  }
  func.func @transform_8(%arg0: i32, %arg1: i32) -> (i32, i32) {
    %c0_i32 = arith.constant 0 : i32
    %c0_i32_0 = arith.constant 0 : i32
    %c0_i32_1 = arith.constant 0 : i32
    return %c0_i32, %c0_i32_0 : i32, i32
  }
  func.func @transform_9(%arg0: i32, %arg1: i32) -> (i32, i32) {
    %c0_i32 = arith.constant 0 : i32
    %c0_i32_0 = arith.constant 0 : i32
    %c0_i32_1 = arith.constant 0 : i32
    return %c0_i32, %c0_i32_0 : i32, i32
  }
  func.func @transform_10(%arg0: i32, %arg1: i32) -> (i32, i32) {
    %c0_i32 = arith.constant 0 : i32
    %c0_i32_0 = arith.constant 0 : i32
    %c0_i32_1 = arith.constant 0 : i32
    return %c0_i32, %c0_i32_0 : i32, i32
  }
  func.func @transform_11(%arg0: i32, %arg1: i32) -> (i32, i32) {
    %c0_i32 = arith.constant 0 : i32
    %c0_i32_0 = arith.constant 0 : i32
    %c0_i32_1 = arith.constant 0 : i32
    return %c0_i32, %c0_i32_0 : i32, i32
  }
  func.func @transform_12(%arg0: i32, %arg1: i32) -> (i32, i32) {
    %c0_i32 = arith.constant 0 : i32
    %c0_i32_0 = arith.constant 0 : i32
    %c0_i32_1 = arith.constant 0 : i32
    return %c0_i32, %c0_i32_0 : i32, i32
  }
  func.func @transform_13(%arg0: i32, %arg1: i32) -> (i32, i32) {
    %c0_i32 = arith.constant 0 : i32
    %c0_i32_0 = arith.constant 0 : i32
    %c0_i32_1 = arith.constant 0 : i32
    return %c0_i32, %c0_i32_0 : i32, i32
  }
  func.func @transform_14(%arg0: i32, %arg1: i32) -> (i32, i32, i32) {
    %c0_i32 = arith.constant 0 : i32
    %c0_i32_0 = arith.constant 0 : i32
    return %arg0, %arg1, %c0_i32 : i32, i32, i32
  }
  func.func @transform_15(%arg0: i32, %arg1: i32) -> (i32, i32, i32) {
    %c0_i32 = arith.constant 0 : i32
    %c0_i32_0 = arith.constant 0 : i32
    return %arg0, %arg1, %c0_i32 : i32, i32, i32
  }
}

</mosaic_0001>

<llo_original>
// kernel: tpu_custom_call.1
$region0: #{tpu_custom_call.1}
  #allocation0 [shape = 'u32[]', space=smem, size = 0x4, offset = 0x4, fixed_abs, tag = 'smem constant byte address 0x4 - core index']
  #allocation1 [shape = 'u32[144,128]{1,0:T(1,128)}', space=vmem, size = 0x12000, scoped, tag = 'internal scratch']
  #allocation2 [shape = 'f32[128,18]{1,0:T(8,128)}', space=vmem, size = 0x10000, scoped, tag = 'scratch operand']
  #allocation3 [shape = 'f32[128,18]{1,0:T(8,128)}', space=vmem, size = 0x10000, scoped, tag = 'scratch operand']
  %s0 = inlined_call_operand.vmem [shape: f32[2,128,16], index: 0, kind: input, shape index: {}]
  %s1 = inlined_call_operand.vmem [shape: f32[2,128,8], index: 1, kind: input, shape index: {}]
  %s2 = inlined_call_operand.vmem [shape: f32[2,128,128], index: 2, kind: input, shape index: {}]
  %s3 = inlined_call_operand.vmem [shape: f32[2,1,128], index: 3, kind: input, shape index: {}]
  %s4 = inlined_call_operand.vmem [shape: f32[48,32], index: 4, kind: input, shape index: {}]
  %s5 = inlined_call_operand.vmem [shape: f32[1,32], index: 5, kind: input, shape index: {}]
  %s6 = inlined_call_operand.vmem [shape: f32[32,16], index: 6, kind: input, shape index: {}]
  %s7 = inlined_call_operand.vmem [shape: f32[1,16], index: 7, kind: input, shape index: {}]
  %s8 = inlined_call_operand.vmem [shape: f32[16,16], index: 8, kind: input, shape index: {}]
  %s9 = inlined_call_operand.vmem [shape: f32[1,16], index: 9, kind: input, shape index: {}]
  %s10 = inlined_call_operand.vmem [shape: f32[24,16], index: 10, kind: input, shape index: {}]
  %s11 = inlined_call_operand.vmem [shape: f32[1,16], index: 11, kind: input, shape index: {}]
  %s12 = inlined_call_operand.vmem [shape: f32[16,16], index: 12, kind: input, shape index: {}]
  %s13 = inlined_call_operand.vmem [shape: f32[1,16], index: 13, kind: input, shape index: {}]
  %s14 = inlined_call_operand.hbm [shape: f32[2,128,128], index: 14, kind: output, shape index: {0}]
  %s15 = inlined_call_operand.hbm [shape: f32[2,128,128], index: 15, kind: output, shape index: {1}]
  %16 = xla_tuple %s14, %s15
  %s17 = sld [smem:[#allocation0]]
  $region101: #{tpu_custom_call.1} parent=0
    _
  %s19 = ssub.s32 1, %s17
  %s20 = scalar_select 0, %s19, %s17
  $region1: #{tpu_custom_call.1} parent=0
    #allocation4 [shape = 'u8[131072]{0}', space=vmem, size = 0x20000, scoped, tag = 'output window, operand 0']
    #allocation5 [shape = 's32[2]{0}', space=sflag, size = 0x8, scoped, tag = 'scoped memory for tpu_custom_call.1']
    #allocation6 [shape = 'u8[131072]{0}', space=vmem, size = 0x20000, scoped, tag = 'output window, operand 1']
    #allocation7 [shape = 's32[2]{0}', space=sflag, size = 0x8, scoped, tag = 'scoped memory for tpu_custom_call.1']
    %21 = vsyncpa [#allocation5], 0
    %s22 = scalar_lea.sflag [#allocation5], 1
    %23 = vsyncpa %s22, 0
    %24 = vsyncpa [#allocation7], 0
    %s25 = scalar_lea.sflag [#allocation7], 1
    %26 = vsyncpa %s25, 0
    loop: start=0, step=1, limit=4
    $region2: #{tpu_custom_call.1} parent=1 // loop_pre_header
      _
    $region3: #{tpu_custom_call.1} parent=1 // loop_header
      %s28 = sphi 0, %s32
      %p29 = scmp.ge.s32.totalorder %s28, 4
      %s35 = sphi 0, %s47
      %s36 = sphi 0, %s43
      %s37 = sphi 0, %s35
      %s38 = sphi 0, %s36
      %s39 = sphi 0, %s37
      %s40 = sphi 0, %s38
      %s50 = sphi 0, %s52
      %s53 = sphi 0, %s50
      %s54 = sphi 0, %s53
      %s70 = sphi 0, %s54
      %s76 = sphi 0, %s78
      %s79 = sphi 0, %s76
      %s80 = sphi 0, %s79
      %s96 = sphi 0, %s80
      %s104 = sphi 0, %s106
      %s107 = sphi 0, %s104
      %s108 = sphi 0, %s107
      %s124 = sphi 0, %s108
      %s130 = sphi 0, %s132
      %s133 = sphi 0, %s130
      %s134 = sphi 0, %s133
      %s150 = sphi 0, %s134
      %s154 = sphi 0, %s154
      %s156 = sphi 0, %s154
      %s157 = sphi 0, %s156
      %s171 = sphi 0, %s157
      %s175 = sphi 0, %s175
      %s177 = sphi 0, %s175
      %s178 = sphi 0, %s177
      %s192 = sphi 0, %s178
      %s196 = sphi 0, %s196
      %s198 = sphi 0, %s196
      %s199 = sphi 0, %s198
      %s213 = sphi 0, %s199
      %s217 = sphi 0, %s217
      %s219 = sphi 0, %s217
      %s220 = sphi 0, %s219
      %s234 = sphi 0, %s220
      %s238 = sphi 0, %s238
      %s240 = sphi 0, %s238
      %s241 = sphi 0, %s240
      %s255 = sphi 0, %s241
      %s259 = sphi 0, %s259
      %s261 = sphi 0, %s259
      %s262 = sphi 0, %s261
      %s276 = sphi 0, %s262
      %s280 = sphi 0, %s280
      %s282 = sphi 0, %s280
      %s283 = sphi 0, %s282
      %s297 = sphi 0, %s283
      %s301 = sphi 0, %s301
      %s303 = sphi 0, %s301
      %s304 = sphi 0, %s303
      %s318 = sphi 0, %s304
      %s322 = sphi 0, %s322
      %s324 = sphi 0, %s322
      %s325 = sphi 0, %s324
      %s339 = sphi 0, %s325
      %s343 = sphi 0, %s343
      %s345 = sphi 0, %s343
      %s346 = sphi 0, %s345
      %s360 = sphi 0, %s346
      %s368 = sphi 0, %s370
      %s371 = sphi 0, %s368
      %s372 = sphi 0, %s371
      %s388 = sphi 0, %s372
      %s396 = sphi 0, %s398
      %s399 = sphi 0, %s396
      %s400 = sphi 0, %s399
      %s416 = sphi 0, %s400
    $region4: #{tpu_custom_call.1} parent=1 // loop_header_branch
      %31 = sbr.rel (%p29) target = $region8
    $region5: #{tpu_custom_call.1} parent=1 // loop_body
      %s33 = ssub.s32 %s28, 1
      %s34 = ssub.s32 %s28, 2
      %s41 = sadd.s32 1, %s36
      %p42 = scmp.ge.s32.totalorder %s41, 1
      %s43 = scalar_select %p42, 0, %s41
      %s44 = sadd.s32 1, %s35
      %s45 = scalar_select %p42, %s44, %s35
      %p46 = scmp.ge.s32.totalorder %s45, 2
      %s47 = scalar_select %p46, 0, %s45
      %s48 = ssub.s32 %s35, %s47
      %p49 = scmp.eq.s32.totalorder %s48, 0
      %s51 = sadd.s32 %s50, 1
      %s52 = scalar_select %p49, %s50, %s51
      %p55 = pneg %p49
      %p56 = scmp.eq.s32.totalorder %s28, 1
      %p57 = por %p55, %p56
      %p58 = scmp.ne.s32.totalorder %s50, %s53
      %p59 = scmp.eq.s32.totalorder %s28, 0
      %p60 = por %p58, %p59
      %p61 = scmp.ne.s32.totalorder %s50, %s53
      %p62 = scmp.eq.s32.totalorder %s33, 1
      %p63 = por %p61, %p62
      %p64 = scmp.ne.s32.totalorder %s53, %s54
      %p65 = scmp.eq.s32.totalorder %s33, 0
      %p66 = por %p64, %p65
      %p67 = scmp.ne.s32.totalorder %s53, %s54
      %p68 = scmp.eq.s32.totalorder %s34, 1
      %p69 = por %p67, %p68
      %p71 = scmp.ne.s32.totalorder %s54, %s70
      %p72 = scmp.eq.s32.totalorder %s34, 0
      %p73 = por %p71, %p72
      %s74 = ssub.s32 %s35, %s47
      %p75 = scmp.eq.s32.totalorder %s74, 0
      %s77 = sadd.s32 %s76, 1
      %s78 = scalar_select %p75, %s76, %s77
      %p81 = pneg %p75
      %p82 = scmp.eq.s32.totalorder %s28, 1
      %p83 = por %p81, %p82
      %p84 = scmp.ne.s32.totalorder %s76, %s79
      %p85 = scmp.eq.s32.totalorder %s28, 0
      %p86 = por %p84, %p85
      %p87 = scmp.ne.s32.totalorder %s76, %s79
      %p88 = scmp.eq.s32.totalorder %s33, 1
      %p89 = por %p87, %p88
      %p90 = scmp.ne.s32.totalorder %s79, %s80
      %p91 = scmp.eq.s32.totalorder %s33, 0
      %p92 = por %p90, %p91
      %p93 = scmp.ne.s32.totalorder %s79, %s80
      %p94 = scmp.eq.s32.totalorder %s34, 1
      %p95 = por %p93, %p94
      %p97 = scmp.ne.s32.totalorder %s80, %s96
      %p98 = scmp.eq.s32.totalorder %s34, 0
      %p99 = por %p97, %p98
      %s100 = ssub.s32 %s35, %s47
      %s101 = ssub.s32 %s36, %s43
      %s102 = sor.u32 %s100, %s101
      %p103 = scmp.eq.s32.totalorder %s102, 0
      %s105 = sadd.s32 %s104, 1
      %s106 = scalar_select %p103, %s104, %s105
      %p109 = pneg %p103
      %p110 = scmp.eq.s32.totalorder %s28, 1
      %p111 = por %p109, %p110
      %p112 = scmp.ne.s32.totalorder %s104, %s107
      %p113 = scmp.eq.s32.totalorder %s28, 0
      %p114 = por %p112, %p113
      %p115 = scmp.ne.s32.totalorder %s104, %s107
      %p116 = scmp.eq.s32.totalorder %s33, 1
      %p117 = por %p115, %p116
      %p118 = scmp.ne.s32.totalorder %s107, %s108
      %p119 = scmp.eq.s32.totalorder %s33, 0
      %p120 = por %p118, %p119
      %p121 = scmp.ne.s32.totalorder %s107, %s108
      %p122 = scmp.eq.s32.totalorder %s34, 1
      %p123 = por %p121, %p122
      %p125 = scmp.ne.s32.totalorder %s108, %s124
      %p126 = scmp.eq.s32.totalorder %s34, 0
      %p127 = por %p125, %p126
      %s128 = ssub.s32 %s35, %s47
      %p129 = scmp.eq.s32.totalorder %s128, 0
      %s131 = sadd.s32 %s130, 1
      %s132 = scalar_select %p129, %s130, %s131
      %p135 = pneg %p129
      %p136 = scmp.eq.s32.totalorder %s28, 1
      %p137 = por %p135, %p136
      %p138 = scmp.ne.s32.totalorder %s130, %s133
      %p139 = scmp.eq.s32.totalorder %s28, 0
      %p140 = por %p138, %p139
      %p141 = scmp.ne.s32.totalorder %s130, %s133
      %p142 = scmp.eq.s32.totalorder %s33, 1
      %p143 = por %p141, %p142
      %p144 = scmp.ne.s32.totalorder %s133, %s134
      %p145 = scmp.eq.s32.totalorder %s33, 0
      %p146 = por %p144, %p145
      %p147 = scmp.ne.s32.totalorder %s133, %s134
      %p148 = scmp.eq.s32.totalorder %s34, 1
      %p149 = por %p147, %p148
      %p151 = scmp.ne.s32.totalorder %s134, %s150
      %p152 = scmp.eq.s32.totalorder %s34, 0
      %p153 = por %p151, %p152
      %s155 = sadd.s32 %s154, 1
      %p158 = scmp.eq.s32.totalorder %s28, 1
      %p159 = scmp.ne.s32.totalorder %s154, %s156
      %p160 = scmp.eq.s32.totalorder %s28, 0
      %p161 = por %p159, %p160
      %p162 = scmp.ne.s32.totalorder %s154, %s156
      %p163 = scmp.eq.s32.totalorder %s33, 1
      %p164 = por %p162, %p163
      %p165 = scmp.ne.s32.totalorder %s156, %s157
      %p166 = scmp.eq.s32.totalorder %s33, 0
      %p167 = por %p165, %p166
      %p168 = scmp.ne.s32.totalorder %s156, %s157
      %p169 = scmp.eq.s32.totalorder %s34, 1
      %p170 = por %p168, %p169
      %p172 = scmp.ne.s32.totalorder %s157, %s171
      %p173 = scmp.eq.s32.totalorder %s34, 0
      %p174 = por %p172, %p173
      %s176 = sadd.s32 %s175, 1
      %p179 = scmp.eq.s32.totalorder %s28, 1
      %p180 = scmp.ne.s32.totalorder %s175, %s177
      %p181 = scmp.eq.s32.totalorder %s28, 0
      %p182 = por %p180, %p181
      %p183 = scmp.ne.s32.totalorder %s175, %s177
      %p184 = scmp.eq.s32.totalorder %s33, 1
      %p185 = por %p183, %p184
      %p186 = scmp.ne.s32.totalorder %s177, %s178
      %p187 = scmp.eq.s32.totalorder %s33, 0
      %p188 = por %p186, %p187
      %p189 = scmp.ne.s32.totalorder %s177, %s178
      %p190 = scmp.eq.s32.totalorder %s34, 1
      %p191 = por %p189, %p190
      %p193 = scmp.ne.s32.totalorder %s178, %s192
      %p194 = scmp.eq.s32.totalorder %s34, 0
      %p195 = por %p193, %p194
      %s197 = sadd.s32 %s196, 1
      %p200 = scmp.eq.s32.totalorder %s28, 1
      %p201 = scmp.ne.s32.totalorder %s196, %s198
      %p202 = scmp.eq.s32.totalorder %s28, 0
      %p203 = por %p201, %p202
      %p204 = scmp.ne.s32.totalorder %s196, %s198
      %p205 = scmp.eq.s32.totalorder %s33, 1
      %p206 = por %p204, %p205
      %p207 = scmp.ne.s32.totalorder %s198, %s199
      %p208 = scmp.eq.s32.totalorder %s33, 0
      %p209 = por %p207, %p208
      %p210 = scmp.ne.s32.totalorder %s198, %s199
      %p211 = scmp.eq.s32.totalorder %s34, 1
      %p212 = por %p210, %p211
      %p214 = scmp.ne.s32.totalorder %s199, %s213
      %p215 = scmp.eq.s32.totalorder %s34, 0
      %p216 = por %p214, %p215
      %s218 = sadd.s32 %s217, 1
      %p221 = scmp.eq.s32.totalorder %s28, 1
      %p222 = scmp.ne.s32.totalorder %s217, %s219
      %p223 = scmp.eq.s32.totalorder %s28, 0
      %p224 = por %p222, %p223
      %p225 = scmp.ne.s32.totalorder %s217, %s219
      %p226 = scmp.eq.s32.totalorder %s33, 1
      %p227 = por %p225, %p226
      %p228 = scmp.ne.s32.totalorder %s219, %s220
      %p229 = scmp.eq.s32.totalorder %s33, 0
      %p230 = por %p228, %p229
      %p231 = scmp.ne.s32.totalorder %s219, %s220
      %p232 = scmp.eq.s32.totalorder %s34, 1
      %p233 = por %p231, %p232
      %p235 = scmp.ne.s32.totalorder %s220, %s234
      %p236 = scmp.eq.s32.totalorder %s34, 0
      %p237 = por %p235, %p236
      %s239 = sadd.s32 %s238, 1
      %p242 = scmp.eq.s32.totalorder %s28, 1
      %p243 = scmp.ne.s32.totalorder %s238, %s240
      %p244 = scmp.eq.s32.totalorder %s28, 0
      %p245 = por %p243, %p244
      %p246 = scmp.ne.s32.totalorder %s238, %s240
      %p247 = scmp.eq.s32.totalorder %s33, 1
      %p248 = por %p246, %p247
      %p249 = scmp.ne.s32.totalorder %s240, %s241
      %p250 = scmp.eq.s32.totalorder %s33, 0
      %p251 = por %p249, %p250
      %p252 = scmp.ne.s32.totalorder %s240, %s241
      %p253 = scmp.eq.s32.totalorder %s34, 1
      %p254 = por %p252, %p253
      %p256 = scmp.ne.s32.totalorder %s241, %s255
      %p257 = scmp.eq.s32.totalorder %s34, 0
      %p258 = por %p256, %p257
      %s260 = sadd.s32 %s259, 1
      %p263 = scmp.eq.s32.totalorder %s28, 1
      %p264 = scmp.ne.s32.totalorder %s259, %s261
      %p265 = scmp.eq.s32.totalorder %s28, 0
      %p266 = por %p264, %p265
      %p267 = scmp.ne.s32.totalorder %s259, %s261
      %p268 = scmp.eq.s32.totalorder %s33, 1
      %p269 = por %p267, %p268
      %p270 = scmp.ne.s32.totalorder %s261, %s262
      %p271 = scmp.eq.s32.totalorder %s33, 0
      %p272 = por %p270, %p271
      %p273 = scmp.ne.s32.totalorder %s261, %s262
      %p274 = scmp.eq.s32.totalorder %s34, 1
      %p275 = por %p273, %p274
      %p277 = scmp.ne.s32.totalorder %s262, %s276
      %p278 = scmp.eq.s32.totalorder %s34, 0
      %p279 = por %p277, %p278
      %s281 = sadd.s32 %s280, 1
      %p284 = scmp.eq.s32.totalorder %s28, 1
      %p285 = scmp.ne.s32.totalorder %s280, %s282
      %p286 = scmp.eq.s32.totalorder %s28, 0
      %p287 = por %p285, %p286
      %p288 = scmp.ne.s32.totalorder %s280, %s282
      %p289 = scmp.eq.s32.totalorder %s33, 1
      %p290 = por %p288, %p289
      %p291 = scmp.ne.s32.totalorder %s282, %s283
      %p292 = scmp.eq.s32.totalorder %s33, 0
      %p293 = por %p291, %p292
      %p294 = scmp.ne.s32.totalorder %s282, %s283
      %p295 = scmp.eq.s32.totalorder %s34, 1
      %p296 = por %p294, %p295
      %p298 = scmp.ne.s32.totalorder %s283, %s297
      %p299 = scmp.eq.s32.totalorder %s34, 0
      %p300 = por %p298, %p299
      %s302 = sadd.s32 %s301, 1
      %p305 = scmp.eq.s32.totalorder %s28, 1
      %p306 = scmp.ne.s32.totalorder %s301, %s303
      %p307 = scmp.eq.s32.totalorder %s28, 0
      %p308 = por %p306, %p307
      %p309 = scmp.ne.s32.totalorder %s301, %s303
      %p310 = scmp.eq.s32.totalorder %s33, 1
      %p311 = por %p309, %p310
      %p312 = scmp.ne.s32.totalorder %s303, %s304
      %p313 = scmp.eq.s32.totalorder %s33, 0
      %p314 = por %p312, %p313
      %p315 = scmp.ne.s32.totalorder %s303, %s304
      %p316 = scmp.eq.s32.totalorder %s34, 1
      %p317 = por %p315, %p316
      %p319 = scmp.ne.s32.totalorder %s304, %s318
      %p320 = scmp.eq.s32.totalorder %s34, 0
      %p321 = por %p319, %p320
      %s323 = sadd.s32 %s322, 1
      %p326 = scmp.eq.s32.totalorder %s28, 1
      %p327 = scmp.ne.s32.totalorder %s322, %s324
      %p328 = scmp.eq.s32.totalorder %s28, 0
      %p329 = por %p327, %p328
      %p330 = scmp.ne.s32.totalorder %s322, %s324
      %p331 = scmp.eq.s32.totalorder %s33, 1
      %p332 = por %p330, %p331
      %p333 = scmp.ne.s32.totalorder %s324, %s325
      %p334 = scmp.eq.s32.totalorder %s33, 0
      %p335 = por %p333, %p334
      %p336 = scmp.ne.s32.totalorder %s324, %s325
      %p337 = scmp.eq.s32.totalorder %s34, 1
      %p338 = por %p336, %p337
      %p340 = scmp.ne.s32.totalorder %s325, %s339
      %p341 = scmp.eq.s32.totalorder %s34, 0
      %p342 = por %p340, %p341
      %s344 = sadd.s32 %s343, 1
      %p347 = scmp.eq.s32.totalorder %s28, 1
      %p348 = scmp.ne.s32.totalorder %s343, %s345
      %p349 = scmp.eq.s32.totalorder %s28, 0
      %p350 = por %p348, %p349
      %p351 = scmp.ne.s32.totalorder %s343, %s345
      %p352 = scmp.eq.s32.totalorder %s33, 1
      %p353 = por %p351, %p352
      %p354 = scmp.ne.s32.totalorder %s345, %s346
      %p355 = scmp.eq.s32.totalorder %s33, 0
      %p356 = por %p354, %p355
      %p357 = scmp.ne.s32.totalorder %s345, %s346
      %p358 = scmp.eq.s32.totalorder %s34, 1
      %p359 = por %p357, %p358
      %p361 = scmp.ne.s32.totalorder %s346, %s360
      %p362 = scmp.eq.s32.totalorder %s34, 0
      %p363 = por %p361, %p362
      %s364 = ssub.s32 %s35, %s47
      %s365 = ssub.s32 %s36, %s43
      %s366 = sor.u32 %s364, %s365
      %p367 = scmp.eq.s32.totalorder %s366, 0
      %s369 = sadd.s32 %s368, 1
      %s370 = scalar_select %p367, %s368, %s369
      %p373 = pneg %p367
      %p374 = scmp.eq.s32.totalorder %s28, 1
      %p375 = por %p373, %p374
      %p376 = scmp.ne.s32.totalorder %s368, %s371
      %p377 = scmp.eq.s32.totalorder %s28, 0
      %p378 = por %p376, %p377
      %p379 = scmp.ne.s32.totalorder %s368, %s371
      %p380 = scmp.eq.s32.totalorder %s33, 1
      %p381 = por %p379, %p380
      %p382 = scmp.ne.s32.totalorder %s371, %s372
      %p383 = scmp.eq.s32.totalorder %s33, 0
      %p384 = por %p382, %p383
      %p385 = scmp.ne.s32.totalorder %s371, %s372
      %p386 = scmp.eq.s32.totalorder %s34, 1
      %p387 = por %p385, %p386
      %p389 = scmp.ne.s32.totalorder %s372, %s388
      %p390 = scmp.eq.s32.totalorder %s34, 0
      %p391 = por %p389, %p390
      %s392 = ssub.s32 %s35, %s47
      %s393 = ssub.s32 %s36, %s43
      %s394 = sor.u32 %s392, %s393
      %p395 = scmp.eq.s32.totalorder %s394, 0
      %s397 = sadd.s32 %s396, 1
      %s398 = scalar_select %p395, %s396, %s397
      %p401 = pneg %p395
      %p402 = scmp.eq.s32.totalorder %s28, 1
      %p403 = por %p401, %p402
      %p404 = scmp.ne.s32.totalorder %s396, %s399
      %p405 = scmp.eq.s32.totalorder %s28, 0
      %p406 = por %p404, %p405
      %p407 = scmp.ne.s32.totalorder %s396, %s399
      %p408 = scmp.eq.s32.totalorder %s33, 1
      %p409 = por %p407, %p408
      %p410 = scmp.ne.s32.totalorder %s399, %s400
      %p411 = scmp.eq.s32.totalorder %s33, 0
      %p412 = por %p410, %p411
      %p413 = scmp.ne.s32.totalorder %s399, %s400
      %p414 = scmp.eq.s32.totalorder %s34, 1
      %p415 = por %p413, %p414
      %p417 = scmp.ne.s32.totalorder %s400, %s416
      %p418 = scmp.eq.s32.totalorder %s34, 0
      %p419 = por %p417, %p418
      %p420 = scmp.le.s32.totalorder 1, %s28
      %p421 = scmp.lt.s32.totalorder %s28, 3
      %p422 = pnand %p420, %p421
      %p423 = pneg %p422
      // Predicated region
      $region9: #{tpu_custom_call.1} parent=5 // pred_check
        _
      $region10: #{tpu_custom_call.1} parent=5 // pred_check_branch
        %425 = sbr.rel (%p422) target = $region12
      $region11: #{tpu_custom_call.1} parent=5 // pred_region
        %s426 = ssub.s32 %s28, 1
        // Predicated region
        $region13: #{tpu_custom_call.1} parent=11 // pred_check
          %p427 = pneg %p167
        $region14: #{tpu_custom_call.1} parent=11 // pred_check_branch
          %429 = sbr.rel (%p427) target = $region16
        $region15: #{tpu_custom_call.1} parent=11 // pred_region
          _
        $region16: #{tpu_custom_call.1} parent=11 // pred_fallthru
          _
        // Predicated region
        $region17: #{tpu_custom_call.1} parent=11 // pred_check
          %p430 = pneg %p188
        $region18: #{tpu_custom_call.1} parent=11 // pred_check_branch
          %432 = sbr.rel (%p430) target = $region20
        $region19: #{tpu_custom_call.1} parent=11 // pred_region
          _
        $region20: #{tpu_custom_call.1} parent=11 // pred_fallthru
          _
        // Predicated region
        $region21: #{tpu_custom_call.1} parent=11 // pred_check
          %p433 = pneg %p209
        $region22: #{tpu_custom_call.1} parent=11 // pred_check_branch
          %435 = sbr.rel (%p433) target = $region24
        $region23: #{tpu_custom_call.1} parent=11 // pred_region
          _
        $region24: #{tpu_custom_call.1} parent=11 // pred_fallthru
          _
        // Predicated region
        $region25: #{tpu_custom_call.1} parent=11 // pred_check
          %p436 = pneg %p230
        $region26: #{tpu_custom_call.1} parent=11 // pred_check_branch
          %438 = sbr.rel (%p436) target = $region28
        $region27: #{tpu_custom_call.1} parent=11 // pred_region
          _
        $region28: #{tpu_custom_call.1} parent=11 // pred_fallthru
          _
        // Predicated region
        $region29: #{tpu_custom_call.1} parent=11 // pred_check
          %p439 = pneg %p251
        $region30: #{tpu_custom_call.1} parent=11 // pred_check_branch
          %441 = sbr.rel (%p439) target = $region32
        $region31: #{tpu_custom_call.1} parent=11 // pred_region
          _
        $region32: #{tpu_custom_call.1} parent=11 // pred_fallthru
          _
        // Predicated region
        $region33: #{tpu_custom_call.1} parent=11 // pred_check
          %p442 = pneg %p272
        $region34: #{tpu_custom_call.1} parent=11 // pred_check_branch
          %444 = sbr.rel (%p442) target = $region36
        $region35: #{tpu_custom_call.1} parent=11 // pred_region
          _
        $region36: #{tpu_custom_call.1} parent=11 // pred_fallthru
          _
        // Predicated region
        $region37: #{tpu_custom_call.1} parent=11 // pred_check
          %p445 = pneg %p293
        $region38: #{tpu_custom_call.1} parent=11 // pred_check_branch
          %447 = sbr.rel (%p445) target = $region40
        $region39: #{tpu_custom_call.1} parent=11 // pred_region
          _
        $region40: #{tpu_custom_call.1} parent=11 // pred_fallthru
          _
        // Predicated region
        $region41: #{tpu_custom_call.1} parent=11 // pred_check
          %p448 = pneg %p314
        $region42: #{tpu_custom_call.1} parent=11 // pred_check_branch
          %450 = sbr.rel (%p448) target = $region44
        $region43: #{tpu_custom_call.1} parent=11 // pred_region
          _
        $region44: #{tpu_custom_call.1} parent=11 // pred_fallthru
          _
        // Predicated region
        $region45: #{tpu_custom_call.1} parent=11 // pred_check
          %p451 = pneg %p335
        $region46: #{tpu_custom_call.1} parent=11 // pred_check_branch
          %453 = sbr.rel (%p451) target = $region48
        $region47: #{tpu_custom_call.1} parent=11 // pred_region
          _
        $region48: #{tpu_custom_call.1} parent=11 // pred_fallthru
          _
        // Predicated region
        $region49: #{tpu_custom_call.1} parent=11 // pred_check
          %p454 = pneg %p356
        $region50: #{tpu_custom_call.1} parent=11 // pred_check_branch
          %456 = sbr.rel (%p454) target = $region52
        $region51: #{tpu_custom_call.1} parent=11 // pred_region
          _
        $region52: #{tpu_custom_call.1} parent=11 // pred_fallthru
          _
      $region12: #{tpu_custom_call.1} parent=5 // pred_fallthru
        _
      %p457 = scmp.lt.s32.totalorder %s28, 2
      // Predicated region
      $region53: #{tpu_custom_call.1} parent=5 // pred_check
        %p458 = pneg %p457
      $region54: #{tpu_custom_call.1} parent=5 // pred_check_branch
        %460 = sbr.rel (%p458) target = $region56
      $region55: #{tpu_custom_call.1} parent=5 // pred_region
        // Predicated region
        $region57: #{tpu_custom_call.1} parent=55 // pred_check
          %p461 = pneg %p60
        $region58: #{tpu_custom_call.1} parent=55 // pred_check_branch
          %463 = sbr.rel (%p461) target = $region60
        $region59: #{tpu_custom_call.1} parent=55 // pred_region
          %p464 = scmp.lt.s32.totalorder %s35, 1
          %s465 = scalar_select %p464, %s35, 1
          %s466 = smul.addr %s465, 16
          %s467 = smul.addr %s466, 8
          %s468 = scalar_lea.vmem %s0, %s467
        $region60: #{tpu_custom_call.1} parent=55 // pred_fallthru
          _
        // Predicated region
        $region61: #{tpu_custom_call.1} parent=55 // pred_check
          %p469 = pneg %p86
        $region62: #{tpu_custom_call.1} parent=55 // pred_check_branch
          %471 = sbr.rel (%p469) target = $region64
        $region63: #{tpu_custom_call.1} parent=55 // pred_region
          %p472 = scmp.lt.s32.totalorder %s35, 1
          %s473 = scalar_select %p472, %s35, 1
          %s474 = smul.addr %s473, 16
          %s475 = smul.addr %s474, 8
          %s476 = scalar_lea.vmem %s1, %s475
        $region64: #{tpu_custom_call.1} parent=55 // pred_fallthru
          _
        // Predicated region
        $region65: #{tpu_custom_call.1} parent=55 // pred_check
          %p477 = pneg %p114
        $region66: #{tpu_custom_call.1} parent=55 // pred_check_branch
          %479 = sbr.rel (%p477) target = $region68
        $region67: #{tpu_custom_call.1} parent=55 // pred_region
          %s480 = smul.u32 16, %s36
          %p481 = scmp.lt.s32.totalorder %s35, 1
          %s482 = scalar_select %p481, %s35, 1
          %p483 = scmp.lt.s32.totalorder %s480, 15
          %s484 = scalar_select %p483, %s480, 15
          %s485 = smul.addr %s482, 16
          %s486 = sadd.s32 %s484, %s485
          %s487 = smul.addr %s486, 8
          %s488 = scalar_lea.vmem %s2, %s487
          %s489 = smul.u32 16, %s36
        $region68: #{tpu_custom_call.1} parent=55 // pred_fallthru
          _
        // Predicated region
        $region69: #{tpu_custom_call.1} parent=55 // pred_check
          %p490 = pneg %p140
        $region70: #{tpu_custom_call.1} parent=55 // pred_check_branch
          %492 = sbr.rel (%p490) target = $region72
        $region71: #{tpu_custom_call.1} parent=55 // pred_region
          %p493 = scmp.lt.s32.totalorder %s35, 1
          %s494 = scalar_select %p493, %s35, 1
          %s495 = scalar_lea.vmem %s3, %s494
        $region72: #{tpu_custom_call.1} parent=55 // pred_fallthru
          _
      $region56: #{tpu_custom_call.1} parent=5 // pred_fallthru
        _
      %p496 = scmp.le.s32.totalorder 1, %s28
      %p497 = scmp.lt.s32.totalorder %s28, 3
      %p498 = pnand %p496, %p497
      %p499 = pneg %p498
      // Predicated region
      $region73: #{tpu_custom_call.1} parent=5 // pred_check
        _
      $region74: #{tpu_custom_call.1} parent=5 // pred_check_branch
        %501 = sbr.rel (%p498) target = $region76
      $region75: #{tpu_custom_call.1} parent=5 // pred_region
        %s502 = ssub.s32 %s28, 1
        %p503 = scmp.lt.s32.totalorder %s37, 1
        %s504 = scalar_select %p503, %s37, 1
        %s505 = smul.addr %s504, 16
        %s506 = smul.addr %s505, 8
        %s507 = scalar_lea.vmem %s0, %s506
        %p508 = pneg %p66
        %p509 = pneg %p63
        %p510 = scmp.lt.s32.totalorder %s37, 1
        %s511 = scalar_select %p510, %s37, 1
        %s512 = smul.addr %s511, 16
        %s513 = smul.addr %s512, 8
        %s514 = scalar_lea.vmem %s1, %s513
        %p515 = pneg %p92
        %p516 = pneg %p89
        %s517 = smul.u32 16, %s38
        %p518 = scmp.lt.s32.totalorder %s37, 1
        %s519 = scalar_select %p518, %s37, 1
        %p520 = scmp.lt.s32.totalorder %s517, 15
        %s521 = scalar_select %p520, %s517, 15
        %s522 = smul.addr %s519, 16
        %s523 = sadd.s32 %s521, %s522
        %s524 = smul.addr %s523, 8
        %s525 = scalar_lea.vmem %s2, %s524
        %p526 = pneg %p120
        %p527 = pneg %p117
        %p528 = scmp.lt.s32.totalorder %s37, 1
        %s529 = scalar_select %p528, %s37, 1
        %s530 = scalar_lea.vmem %s3, %s529
        %p531 = pneg %p146
        %p532 = pneg %p143
        %p533 = pneg %p167
        %p534 = pneg %p164
        %p535 = pneg %p188
        %p536 = pneg %p185
        %p537 = pneg %p209
        %p538 = pneg %p206
        %p539 = pneg %p230
        %p540 = pneg %p227
        %p541 = pneg %p251
        %p542 = pneg %p248
        %p543 = pneg %p272
        %p544 = pneg %p269
        %p545 = pneg %p293
        %p546 = pneg %p290
        %p547 = pneg %p314
        %p548 = pneg %p311
        %p549 = pneg %p335
        %p550 = pneg %p332
        %p551 = pneg %p356
        %p552 = pneg %p353
        %p553 = pneg %p384
        %p554 = pneg %p381
        %s555 = sand.u32 %s371, 1
        %s556 = scalar_lea.sflag [#allocation5], %s555
        %s557 = sand.u32 %s371, 1
        %s558 = smul.addr %s557, 128
        %s559 = scalar_lea.vmem [#allocation4], %s558
        %p560 = pneg %p412
        %p561 = pneg %p409
        %s562 = sand.u32 %s399, 1
        %s563 = scalar_lea.sflag [#allocation7], %s562
        %s564 = sand.u32 %s399, 1
        %s565 = smul.addr %s564, 128
        %s566 = scalar_lea.vmem [#allocation6], %s565
        %p567 = scmp.lt.s32.totalorder %s37, 1
        %s568 = scalar_select %p567, %s37, 1
        %s569 = smul.addr %s568, 16
        %s570 = smul.addr %s569, 8
        %s571 = scalar_lea.vmem %s0, %s570
        %p572 = scmp.lt.s32.totalorder %s37, 1
        %s573 = scalar_select %p572, %s37, 1
        %s574 = smul.addr %s573, 16
        %s575 = smul.addr %s574, 8
        %s576 = scalar_lea.vmem %s1, %s575
        %s577 = smul.u32 16, %s38
        %p578 = scmp.lt.s32.totalorder %s37, 1
        %s579 = scalar_select %p578, %s37, 1
        %p580 = scmp.lt.s32.totalorder %s577, 15
        %s581 = scalar_select %p580, %s577, 15
        %s582 = smul.addr %s579, 16
        %s583 = sadd.s32 %s581, %s582
        %s584 = smul.addr %s583, 8
        %s585 = scalar_lea.vmem %s2, %s584
        %s586 = smul.u32 16, %s38
        %p587 = scmp.lt.s32.totalorder %s37, 1
        %s588 = scalar_select %p587, %s37, 1
        %s589 = scalar_lea.vmem %s3, %s588
        %s590 = smul.u32 16, %s38
        %s591 = smul.u32 16, %s38
        %p592 = scmp.eq.s32.totalorder %s38, 0
        // Predicated region
        $region77: #{tpu_custom_call.1} parent=75 // pred_check
          %p593 = pneg %p592
        $region78: #{tpu_custom_call.1} parent=75 // pred_check_branch
          %595 = sbr.rel (%p593) target = $region80
        $region79: #{tpu_custom_call.1} parent=75 // pred_region
          %v596 = vld [vmem:[%s571] sm:$0xff]
          %v597 = vld [vmem:[%s571 + $0x8] sm:$0xff]
          %v598 = vld [vmem:[%s571 + $0x10] sm:$0xff]
          %v599 = vld [vmem:[%s571 + $0x18] sm:$0xff]
          %v600 = vld [vmem:[%s571 + $0x20] sm:$0xff]
          %v601 = vld [vmem:[%s571 + $0x28] sm:$0xff]
          %v602 = vld [vmem:[%s571 + $0x30] sm:$0xff]
          %v603 = vld [vmem:[%s571 + $0x38] sm:$0xff]
          %v604 = vld [vmem:[%s571 + $0x40] sm:$0xff]
          %v605 = vld [vmem:[%s571 + $0x48] sm:$0xff]
          %v606 = vld [vmem:[%s571 + $0x50] sm:$0xff]
          %v607 = vld [vmem:[%s571 + $0x58] sm:$0xff]
          %v608 = vld [vmem:[%s571 + $0x60] sm:$0xff]
          %v609 = vld [vmem:[%s571 + $0x68] sm:$0xff]
          %v610 = vld [vmem:[%s571 + $0x70] sm:$0xff]
          %v611 = vld [vmem:[%s571 + $0x78] sm:$0xff]
          %v612 = vld [vmem:[%s4] sm:$0xff]
          %v613 = vld [vmem:[%s4 + $0x8] sm:$0xff]
          %v614 = vld [vmem:[%s4 + $0x10] sm:$0xff]
          %v615 = vld [vmem:[%s4 + $0x18] sm:$0xff]
          %v616 = vld [vmem:[%s4 + $0x20] sm:$0xff]
          %v617 = vld [vmem:[%s4 + $0x28] sm:$0xff]
          %v618 = vld [vmem:[%s5] sm:$0x1]
          %vm635 = vcmask 1040384
          %v636 = vrot.slane %v596, 7
          %v637 = vrot.slane %v597, 7
          %v638 = vsel %vm635, %v636, %v637
          %v639 = vrot.slane %v598, 7
          %v640 = vsel %vm635, %v637, %v639
          %v641 = vrot.slane %v599, 7
          %v642 = vsel %vm635, %v639, %v641
          %v643 = vrot.slane %v600, 7
          %v644 = vsel %vm635, %v641, %v643
          %v645 = vrot.slane %v601, 7
          %v646 = vsel %vm635, %v643, %v645
          %v647 = vrot.slane %v602, 7
          %v648 = vsel %vm635, %v645, %v647
          %v649 = vrot.slane %v603, 7
          %v650 = vsel %vm635, %v647, %v649
          %v651 = vrot.slane %v604, 7
          %v652 = vsel %vm635, %v649, %v651
          %v653 = vrot.slane %v605, 7
          %v654 = vsel %vm635, %v651, %v653
          %v655 = vrot.slane %v606, 7
          %v656 = vsel %vm635, %v653, %v655
          %v657 = vrot.slane %v607, 7
          %v658 = vsel %vm635, %v655, %v657
          %v659 = vrot.slane %v608, 7
          %v660 = vsel %vm635, %v657, %v659
          %v661 = vrot.slane %v609, 7
          %v662 = vsel %vm635, %v659, %v661
          %v663 = vrot.slane %v610, 7
          %v664 = vsel %vm635, %v661, %v663
          %v665 = vrot.slane %v611, 7
          %v666 = vsel %vm635, %v663, %v665
          %v683 = vsel %vm635, 0.0, %v636
          %vm684 = vcmask 1046528
          %v685 = vrot.slane %v596, 1
          %v686 = vrot.slane %v597, 1
          %v687 = vsel %vm684, %v685, %v686
          %v688 = vrot.slane %v598, 1
          %v689 = vsel %vm684, %v686, %v688
          %v690 = vrot.slane %v599, 1
          %v691 = vsel %vm684, %v688, %v690
          %v692 = vrot.slane %v600, 1
          %v693 = vsel %vm684, %v690, %v692
          %v694 = vrot.slane %v601, 1
          %v695 = vsel %vm684, %v692, %v694
          %v696 = vrot.slane %v602, 1
          %v697 = vsel %vm684, %v694, %v696
          %v698 = vrot.slane %v603, 1
          %v699 = vsel %vm684, %v696, %v698
          %v700 = vrot.slane %v604, 1
          %v701 = vsel %vm684, %v698, %v700
          %v702 = vrot.slane %v605, 1
          %v703 = vsel %vm684, %v700, %v702
          %v704 = vrot.slane %v606, 1
          %v705 = vsel %vm684, %v702, %v704
          %v706 = vrot.slane %v607, 1
          %v707 = vsel %vm684, %v704, %v706
          %v708 = vrot.slane %v608, 1
          %v709 = vsel %vm684, %v706, %v708
          %v710 = vrot.slane %v609, 1
          %v711 = vsel %vm684, %v708, %v710
          %v712 = vrot.slane %v610, 1
          %v713 = vsel %vm684, %v710, %v712
          %v714 = vrot.slane %v611, 1
          %v715 = vsel %vm684, %v712, %v714
          %v717 = vsel %vm684, %v714, 0.0
          %718 = vrot.lane.b32.xlu0 %v596, 16
          %v719 = vpop.permute.xlu0 %718
          %720 = vrot.lane.b32.xlu0 %v597, 16
          %v721 = vpop.permute.xlu0 %720
          %722 = vrot.lane.b32.xlu0 %v598, 16
          %v723 = vpop.permute.xlu0 %722
          %724 = vrot.lane.b32.xlu0 %v599, 16
          %v725 = vpop.permute.xlu0 %724
          %726 = vrot.lane.b32.xlu0 %v600, 16
          %v727 = vpop.permute.xlu0 %726
          %728 = vrot.lane.b32.xlu0 %v601, 16
          %v729 = vpop.permute.xlu0 %728
          %730 = vrot.lane.b32.xlu0 %v602, 16
          %v731 = vpop.permute.xlu0 %730
          %732 = vrot.lane.b32.xlu0 %v603, 16
          %v733 = vpop.permute.xlu0 %732
          %734 = vrot.lane.b32.xlu0 %v604, 16
          %v735 = vpop.permute.xlu0 %734
          %736 = vrot.lane.b32.xlu0 %v605, 16
          %v737 = vpop.permute.xlu0 %736
          %738 = vrot.lane.b32.xlu0 %v606, 16
          %v739 = vpop.permute.xlu0 %738
          %740 = vrot.lane.b32.xlu0 %v607, 16
          %v741 = vpop.permute.xlu0 %740
          %742 = vrot.lane.b32.xlu0 %v608, 16
          %v743 = vpop.permute.xlu0 %742
          %744 = vrot.lane.b32.xlu0 %v609, 16
          %v745 = vpop.permute.xlu0 %744
          %746 = vrot.lane.b32.xlu0 %v610, 16
          %v747 = vpop.permute.xlu0 %746
          %748 = vrot.lane.b32.xlu0 %v611, 16
          %v749 = vpop.permute.xlu0 %748
          %767 = vrot.lane.b32.xlu0 %v687, 32
          %v768 = vpop.permute.xlu0 %767
          %769 = vrot.lane.b32.xlu0 %v689, 32
          %v770 = vpop.permute.xlu0 %769
          %771 = vrot.lane.b32.xlu0 %v691, 32
          %v772 = vpop.permute.xlu0 %771
          %773 = vrot.lane.b32.xlu0 %v693, 32
          %v774 = vpop.permute.xlu0 %773
          %775 = vrot.lane.b32.xlu0 %v695, 32
          %v776 = vpop.permute.xlu0 %775
          %777 = vrot.lane.b32.xlu0 %v697, 32
          %v778 = vpop.permute.xlu0 %777
          %779 = vrot.lane.b32.xlu0 %v699, 32
          %v780 = vpop.permute.xlu0 %779
          %781 = vrot.lane.b32.xlu0 %v701, 32
          %v782 = vpop.permute.xlu0 %781
          %783 = vrot.lane.b32.xlu0 %v703, 32
          %v784 = vpop.permute.xlu0 %783
          %785 = vrot.lane.b32.xlu0 %v705, 32
          %v786 = vpop.permute.xlu0 %785
          %787 = vrot.lane.b32.xlu0 %v707, 32
          %v788 = vpop.permute.xlu0 %787
          %789 = vrot.lane.b32.xlu0 %v709, 32
          %v790 = vpop.permute.xlu0 %789
          %791 = vrot.lane.b32.xlu0 %v711, 32
          %v792 = vpop.permute.xlu0 %791
          %793 = vrot.lane.b32.xlu0 %v713, 32
          %v794 = vpop.permute.xlu0 %793
          %795 = vrot.lane.b32.xlu0 %v715, 32
          %v796 = vpop.permute.xlu0 %795
          %797 = vrot.lane.b32.xlu0 %v717, 32
          %v798 = vpop.permute.xlu0 %797
          %vm815 = vcmask 130048
          %v816 = vsel %vm815, %v683, %v719
          %v817 = vsel %vm815, %v638, %v721
          %v818 = vsel %vm815, %v640, %v723
          %v819 = vsel %vm815, %v642, %v725
          %v820 = vsel %vm815, %v644, %v727
          %v821 = vsel %vm815, %v646, %v729
          %v822 = vsel %vm815, %v648, %v731
          %v823 = vsel %vm815, %v650, %v733
          %v824 = vsel %vm815, %v652, %v735
          %v825 = vsel %vm815, %v654, %v737
          %v826 = vsel %vm815, %v656, %v739
          %v827 = vsel %vm815, %v658, %v741
          %v828 = vsel %vm815, %v660, %v743
          %v829 = vsel %vm815, %v662, %v745
          %v830 = vsel %vm815, %v664, %v747
          %v831 = vsel %vm815, %v666, %v749
          %vm832 = vcmask 261120
          %v833 = vsel %vm832, %v816, %v768
          %v834 = vsel %vm832, %v817, %v770
          %v835 = vsel %vm832, %v818, %v772
          %v836 = vsel %vm832, %v819, %v774
          %v837 = vsel %vm832, %v820, %v776
          %v838 = vsel %vm832, %v821, %v778
          %v839 = vsel %vm832, %v822, %v780
          %v840 = vsel %vm832, %v823, %v782
          %v841 = vsel %vm832, %v824, %v784
          %v842 = vsel %vm832, %v825, %v786
          %v843 = vsel %vm832, %v826, %v788
          %v844 = vsel %vm832, %v827, %v790
          %v845 = vsel %vm832, %v828, %v792
          %v846 = vsel %vm832, %v829, %v794
          %v847 = vsel %vm832, %v830, %v796
          %v848 = vsel %vm832, %v831, %v798
          %v850 = vlaneseq
          %v851 = vshrl.u32 %v850, 7
          %v852 = vsub.s32 0, %v851
          %v853 = vrot.slane %v618, %v852
          %vm855 = vcmask 392192
          %v857 = vsel %vm855, %v833, 0
          %v860 = vsel %vm855, %v834, 0
          %v863 = vsel %vm855, %v835, 0
          %v866 = vsel %vm855, %v836, 0
          %v869 = vsel %vm855, %v837, 0
          %v872 = vsel %vm855, %v838, 0
          %v875 = vsel %vm855, %v839, 0
          %v878 = vsel %vm855, %v840, 0
          %v881 = vsel %vm855, %v841, 0
          %v884 = vsel %vm855, %v842, 0
          %v887 = vsel %vm855, %v843, 0
          %v890 = vsel %vm855, %v844, 0
          %v893 = vsel %vm855, %v845, 0
          %v896 = vsel %vm855, %v846, 0
          %v899 = vsel %vm855, %v847, 0
          %v902 = vsel %vm855, %v848, 0
          %904 = vmatprep.subr.mxu0 0.0
          %905 = vmatpush1.msra.mxu0 %v612
          %906 = vmatprep.subr.mxu0 0.0
          %907 = vmatpush1.msra.mxu0 %v613
          %908 = vmatprep.subr.mxu0 0.0
          %909 = vmatpush1.msra.mxu0 %v614
          %910 = vmatprep.subr.mxu0 0.0
          %911 = vmatpush1.msra.mxu0 %v615
          %912 = vmatprep.subr.mxu0 0.0
          %913 = vmatpush1.msra.mxu0 %v616
          %914 = vmatprep.subr.mxu0 0.0
          %915 = vmatpush1.msra.mxu0 %v617
          %916 = vmatprep.subr.mxu0 0.0
          %917 = vmatpush1.msra.mxu0 0.0
          %918 = vmatprep.subr.mxu0 0.0
          %919 = vmatpush1.msra.mxu0 0.0
          %920 = vmatprep.subr.mxu0 0.0
          %921 = vmatpush1.msra.mxu0 0.0
          %922 = vmatprep.subr.mxu0 0.0
          %923 = vmatpush1.msra.mxu0 0.0
          %924 = vmatprep.subr.mxu0 0.0
          %925 = vmatpush1.msra.mxu0 0.0
          %926 = vmatprep.subr.mxu0 0.0
          %927 = vmatpush1.msra.mxu0 0.0
          %928 = vmatprep.subr.mxu0 0.0
          %929 = vmatpush1.msra.mxu0 0.0
          %930 = vmatprep.subr.mxu0 0.0
          %931 = vmatpush1.msra.mxu0 0.0
          %932 = vmatprep.subr.mxu0 0.0
          %933 = vmatpush1.msra.mxu0 0.0
          %934 = vmatprep.subr.mxu0 0.0
          %935 = vmatpush1.msra.mxu0 0.0
          %936 = vmatprep.subr.mxu0 0.0
          %937 = vmatpush1.msra.mxu0 0.0
          %938 = vmatprep.subr.mxu0 0.0
          %939 = vmatpush1.msra.mxu0 0.0
          %940 = vmatprep.subr.mxu0 0.0
          %941 = vmatpush1.msra.mxu0 0.0
          %942 = vmatprep.subr.mxu0 0.0
          %943 = vmatpush1.msra.mxu0 0.0
          %944 = vmatprep.subr.mxu0 0.0
          %945 = vmatpush1.msra.mxu0 0.0
          %946 = vmatprep.subr.mxu0 0.0
          %947 = vmatpush1.msra.mxu0 0.0
          %948 = vmatprep.subr.mxu0 0.0
          %949 = vmatpush1.msra.mxu0 0.0
          %950 = vmatprep.subr.mxu0 0.0
          %951 = vmatpush1.msra.mxu0 0.0
          %952 = vmatprep.subr.mxu0 0.0
          %953 = vmatpush1.msra.mxu0 0.0
          %954 = vmatprep.subr.mxu0 0.0
          %955 = vmatpush1.msra.mxu0 0.0
          %956 = vmatprep.subr.mxu0 0.0
          %957 = vmatpush1.msra.mxu0 0.0
          %958 = vmatprep.subr.mxu0 0.0
          %959 = vmatpush1.msra.mxu0 0.0
          %960 = vmatprep.subr.mxu0 0.0
          %961 = vmatpush1.msra.mxu0 0.0
          %962 = vmatprep.subr.mxu0 0.0
          %963 = vmatpush1.msra.mxu0 0.0
          %964 = vmatprep.subr.mxu0 0.0
          %965 = vmatpush1.msra.mxu0 0.0
          %966 = vmatprep.subr.mxu0 0.0
          %967 = vmatpush1.msra.mxu0 0.0
          %968 = vmatprep.mubr.f32.mxu0 0.0
          %969 = vmatmul.mubr.f32.gmra.mrb[0].mxu0 %v857
          %v970 = vpop.f32.mrb[0].mxu0
          %v971 = vadd.f32 %v853, %v970
          %v972 = vpop.f32.mrb[0].mxu0
          %973 = vmatprep.mubr.f32.mxu0 0.0
          %974 = vmatmul.mubr.f32.gmra.mrb[0].mxu0 %v860
          %v975 = vpop.f32.mrb[0].mxu0
          %v976 = vadd.f32 %v853, %v975
          %v977 = vpop.f32.mrb[0].mxu0
          %978 = vmatprep.mubr.f32.mxu0 0.0
          %979 = vmatmul.mubr.f32.gmra.mrb[0].mxu0 %v863
          %v980 = vpop.f32.mrb[0].mxu0
          %v981 = vadd.f32 %v853, %v980
          %v982 = vpop.f32.mrb[0].mxu0
          %983 = vmatprep.mubr.f32.mxu0 0.0
          %984 = vmatmul.mubr.f32.gmra.mrb[0].mxu0 %v866
          %v985 = vpop.f32.mrb[0].mxu0
          %v986 = vadd.f32 %v853, %v985
          %v987 = vpop.f32.mrb[0].mxu0
          %988 = vmatprep.mubr.f32.mxu0 0.0
          %989 = vmatmul.mubr.f32.gmra.mrb[0].mxu0 %v869
          %v990 = vpop.f32.mrb[0].mxu0
          %v991 = vadd.f32 %v853, %v990
          %v992 = vpop.f32.mrb[0].mxu0
          %993 = vmatprep.mubr.f32.mxu0 0.0
          %994 = vmatmul.mubr.f32.gmra.mrb[0].mxu0 %v872
          %v995 = vpop.f32.mrb[0].mxu0
          %v996 = vadd.f32 %v853, %v995
          %v997 = vpop.f32.mrb[0].mxu0
          %998 = vmatprep.mubr.f32.mxu0 0.0
          %999 = vmatmul.mubr.f32.gmra.mrb[0].mxu0 %v875
          %v1000 = vpop.f32.mrb[0].mxu0
          %v1001 = vadd.f32 %v853, %v1000
          %v1002 = vpop.f32.mrb[0].mxu0
          %1003 = vmatprep.mubr.f32.mxu0 0.0
          %1004 = vmatmul.mubr.f32.gmra.mrb[0].mxu0 %v878
          %v1005 = vpop.f32.mrb[0].mxu0
          %v1006 = vadd.f32 %v853, %v1005
          %v1007 = vpop.f32.mrb[0].mxu0
          %1008 = vmatprep.mubr.f32.mxu0 0.0
          %1009 = vmatmul.mubr.f32.gmra.mrb[0].mxu0 %v881
          %v1010 = vpop.f32.mrb[0].mxu0
          %v1011 = vadd.f32 %v853, %v1010
          %v1012 = vpop.f32.mrb[0].mxu0
          %1013 = vmatprep.mubr.f32.mxu0 0.0
          %1014 = vmatmul.mubr.f32.gmra.mrb[0].mxu0 %v884
          %v1015 = vpop.f32.mrb[0].mxu0
          %v1016 = vadd.f32 %v853, %v1015
          %v1017 = vpop.f32.mrb[0].mxu0
          %1018 = vmatprep.mubr.f32.mxu0 0.0
          %1019 = vmatmul.mubr.f32.gmra.mrb[0].mxu0 %v887
          %v1020 = vpop.f32.mrb[0].mxu0
          %v1021 = vadd.f32 %v853, %v1020
          %v1022 = vpop.f32.mrb[0].mxu0
          %1023 = vmatprep.mubr.f32.mxu0 0.0
          %1024 = vmatmul.mubr.f32.gmra.mrb[0].mxu0 %v890
          %v1025 = vpop.f32.mrb[0].mxu0
          %v1026 = vadd.f32 %v853, %v1025
          %v1027 = vpop.f32.mrb[0].mxu0
          %1028 = vmatprep.mubr.f32.mxu0 0.0
          %1029 = vmatmul.mubr.f32.gmra.mrb[0].mxu0 %v893
          %v1030 = vpop.f32.mrb[0].mxu0
          %v1031 = vadd.f32 %v853, %v1030
          %v1032 = vpop.f32.mrb[0].mxu0
          %1033 = vmatprep.mubr.f32.mxu0 0.0
          %1034 = vmatmul.mubr.f32.gmra.mrb[0].mxu0 %v896
          %v1035 = vpop.f32.mrb[0].mxu0
          %v1036 = vadd.f32 %v853, %v1035
          %v1037 = vpop.f32.mrb[0].mxu0
          %1038 = vmatprep.mubr.f32.mxu0 0.0
          %1039 = vmatmul.mubr.f32.gmra.mrb[0].mxu0 %v899
          %v1040 = vpop.f32.mrb[0].mxu0
          %v1041 = vadd.f32 %v853, %v1040
          %v1042 = vpop.f32.mrb[0].mxu0
          %1043 = vmatprep.mubr.f32.mxu0 0.0
          %1044 = vmatmul.mubr.f32.gmra.mrb[0].mxu0 %v902
          %v1045 = vpop.f32.mrb[0].mxu0
          %v1046 = vadd.f32 %v853, %v1045
          %v1047 = vpop.f32.mrb[0].mxu0
          %1048 = vdwg.mxu0
          %v1049 = vmax.f32 %v971, 0.0
          %v1050 = vmax.f32 %v976, 0.0
          %v1051 = vmax.f32 %v981, 0.0
          %v1052 = vmax.f32 %v986, 0.0
          %v1053 = vmax.f32 %v991, 0.0
          %v1054 = vmax.f32 %v996, 0.0
          %v1055 = vmax.f32 %v1001, 0.0
          %v1056 = vmax.f32 %v1006, 0.0
          %v1057 = vmax.f32 %v1011, 0.0
          %v1058 = vmax.f32 %v1016, 0.0
          %v1059 = vmax.f32 %v1021, 0.0
          %v1060 = vmax.f32 %v1026, 0.0
          %v1061 = vmax.f32 %v1031, 0.0
          %v1062 = vmax.f32 %v1036, 0.0
          %v1063 = vmax.f32 %v1041, 0.0
          %v1064 = vmax.f32 %v1046, 0.0
          %v1065 = vld [vmem:[%s6] sm:$0xff]
          %v1066 = vld [vmem:[%s6 + $0x8] sm:$0xff]
          %v1067 = vld [vmem:[%s6 + $0x10] sm:$0xff]
          %v1068 = vld [vmem:[%s6 + $0x18] sm:$0xff]
          %v1069 = vld [vmem:[%s7] sm:$0x1]
          %v1071 = vlaneseq
          %v1072 = vshrl.u32 %v1071, 7
          %v1073 = vsub.s32 0, %v1072
          %v1074 = vrot.slane %v1069, %v1073
          %v1077 = vsel %vm832, %v1049, 0
          %v1080 = vsel %vm832, %v1050, 0
          %v1083 = vsel %vm832, %v1051, 0
          %v1086 = vsel %vm832, %v1052, 0
          %v1089 = vsel %vm832, %v1053, 0
          %v1092 = vsel %vm832, %v1054, 0
          %v1095 = vsel %vm832, %v1055, 0
          %v1098 = vsel %vm832, %v1056, 0
          %v1101 = vsel %vm832, %v1057, 0
          %v1104 = vsel %vm832, %v1058, 0
          %v1107 = vsel %vm832, %v1059, 0
          %v1110 = vsel %vm832, %v1060, 0
          %v1113 = vsel %vm832, %v1061, 0
          %v1116 = vsel %vm832, %v1062, 0
          %v1119 = vsel %vm832, %v1063, 0
          %v1122 = vsel %vm832, %v1064, 0
          %1124 = vmatprep.subr.mxu0 0.0
          %1125 = vmatpush1.msra.mxu0 %v1065
          %1126 = vmatprep.subr.mxu0 0.0
          %1127 = vmatpush1.msra.mxu0 %v1066
          %1128 = vmatprep.subr.mxu0 0.0
          %1129 = vmatpush1.msra.mxu0 %v1067
          %1130 = vmatprep.subr.mxu0 0.0
          %1131 = vmatpush1.msra.mxu0 %v1068
          %1132 = vmatprep.subr.mxu0 0.0
          %1133 = vmatpush1.msra.mxu0 0.0
          %1134 = vmatprep.subr.mxu0 0.0
          %1135 = vmatpush1.msra.mxu0 0.0
          %1136 = vmatprep.subr.mxu0 0.0
          %1137 = vmatpush1.msra.mxu0 0.0
          %1138 = vmatprep.subr.mxu0 0.0
          %1139 = vmatpush1.msra.mxu0 0.0
          %1140 = vmatprep.subr.mxu0 0.0
          %1141 = vmatpush1.msra.mxu0 0.0
          %1142 = vmatprep.subr.mxu0 0.0
          %1143 = vmatpush1.msra.mxu0 0.0
          %1144 = vmatprep.subr.mxu0 0.0
          %1145 = vmatpush1.msra.mxu0 0.0
          %1146 = vmatprep.subr.mxu0 0.0
          %1147 = vmatpush1.msra.mxu0 0.0
          %1148 = vmatprep.subr.mxu0 0.0
          %1149 = vmatpush1.msra.mxu0 0.0
          %1150 = vmatprep.subr.mxu0 0.0
          %1151 = vmatpush1.msra.mxu0 0.0
          %1152 = vmatprep.subr.mxu0 0.0
          %1153 = vmatpush1.msra.mxu0 0.0
          %1154 = vmatprep.subr.mxu0 0.0
          %1155 = vmatpush1.msra.mxu0 0.0
          %1156 = vmatprep.subr.mxu0 0.0
          %1157 = vmatpush1.msra.mxu0 0.0
          %1158 = vmatprep.subr.mxu0 0.0
          %1159 = vmatpush1.msra.mxu0 0.0
          %1160 = vmatprep.subr.mxu0 0.0
          %1161 = vmatpush1.msra.mxu0 0.0
          %1162 = vmatprep.subr.mxu0 0.0
          %1163 = vmatpush1.msra.mxu0 0.0
          %1164 = vmatprep.subr.mxu0 0.0
          %1165 = vmatpush1.msra.mxu0 0.0
          %1166 = vmatprep.subr.mxu0 0.0
          %1167 = vmatpush1.msra.mxu0 0.0
          %1168 = vmatprep.subr.mxu0 0.0
          %1169 = vmatpush1.msra.mxu0 0.0
          %1170 = vmatprep.subr.mxu0 0.0
          %1171 = vmatpush1.msra.mxu0 0.0
          %1172 = vmatprep.subr.mxu0 0.0
          %1173 = vmatpush1.msra.mxu0 0.0
          %1174 = vmatprep.subr.mxu0 0.0
          %1175 = vmatpush1.msra.mxu0 0.0
          %1176 = vmatprep.subr.mxu0 0.0
          %1177 = vmatpush1.msra.mxu0 0.0
          %1178 = vmatprep.subr.mxu0 0.0
          %1179 = vmatpush1.msra.mxu0 0.0
          %1180 = vmatprep.subr.mxu0 0.0
          %1181 = vmatpush1.msra.mxu0 0.0
          %1182 = vmatprep.subr.mxu0 0.0
          %1183 = vmatpush1.msra.mxu0 0.0
          %1184 = vmatprep.subr.mxu0 0.0
          %1185 = vmatpush1.msra.mxu0 0.0
          %1186 = vmatprep.subr.mxu0 0.0
          %1187 = vmatpush1.msra.mxu0 0.0
          %1188 = vmatprep.mubr.f32.mxu0 0.0
          %1189 = vmatmul.mubr.f32.gmra.mrb[0].mxu0 %v1077
          %v1190 = vpop.f32.mrb[0].mxu0
          %v1191 = vadd.f32 %v1074, %v1190
          %v1192 = vpop.f32.mrb[0].mxu0
          %1193 = vmatprep.mubr.f32.mxu0 0.0
          %1194 = vmatmul.mubr.f32.gmra.mrb[0].mxu0 %v1080
          %v1195 = vpop.f32.mrb[0].mxu0
          %v1196 = vadd.f32 %v1074, %v1195
          %v1197 = vpop.f32.mrb[0].mxu0
          %1198 = vmatprep.mubr.f32.mxu0 0.0
          %1199 = vmatmul.mubr.f32.gmra.mrb[0].mxu0 %v1083
          %v1200 = vpop.f32.mrb[0].mxu0
          %v1201 = vadd.f32 %v1074, %v1200
          %v1202 = vpop.f32.mrb[0].mxu0
          %1203 = vmatprep.mubr.f32.mxu0 0.0
          %1204 = vmatmul.mubr.f32.gmra.mrb[0].mxu0 %v1086
          %v1205 = vpop.f32.mrb[0].mxu0
          %v1206 = vadd.f32 %v1074, %v1205
          %v1207 = vpop.f32.mrb[0].mxu0
          %1208 = vmatprep.mubr.f32.mxu0 0.0
          %1209 = vmatmul.mubr.f32.gmra.mrb[0].mxu0 %v1089
          %v1210 = vpop.f32.mrb[0].mxu0
          %v1211 = vadd.f32 %v1074, %v1210
          %v1212 = vpop.f32.mrb[0].mxu0
          %1213 = vmatprep.mubr.f32.mxu0 0.0
          %1214 = vmatmul.mubr.f32.gmra.mrb[0].mxu0 %v1092
          %v1215 = vpop.f32.mrb[0].mxu0
          %v1216 = vadd.f32 %v1074, %v1215
          %v1217 = vpop.f32.mrb[0].mxu0
          %1218 = vmatprep.mubr.f32.mxu0 0.0
          %1219 = vmatmul.mubr.f32.gmra.mrb[0].mxu0 %v1095
          %v1220 = vpop.f32.mrb[0].mxu0
          %v1221 = vadd.f32 %v1074, %v1220
          %v1222 = vpop.f32.mrb[0].mxu0
          %1223 = vmatprep.mubr.f32.mxu0 0.0
          %1224 = vmatmul.mubr.f32.gmra.mrb[0].mxu0 %v1098
          %v1225 = vpop.f32.mrb[0].mxu0
          %v1226 = vadd.f32 %v1074, %v1225
          %v1227 = vpop.f32.mrb[0].mxu0
          %1228 = vmatprep.mubr.f32.mxu0 0.0
          %1229 = vmatmul.mubr.f32.gmra.mrb[0].mxu0 %v1101
          %v1230 = vpop.f32.mrb[0].mxu0
          %v1231 = vadd.f32 %v1074, %v1230
          %v1232 = vpop.f32.mrb[0].mxu0
          %1233 = vmatprep.mubr.f32.mxu0 0.0
          %1234 = vmatmul.mubr.f32.gmra.mrb[0].mxu0 %v1104
          %v1235 = vpop.f32.mrb[0].mxu0
          %v1236 = vadd.f32 %v1074, %v1235
          %v1237 = vpop.f32.mrb[0].mxu0
          %1238 = vmatprep.mubr.f32.mxu0 0.0
          %1239 = vmatmul.mubr.f32.gmra.mrb[0].mxu0 %v1107
          %v1240 = vpop.f32.mrb[0].mxu0
          %v1241 = vadd.f32 %v1074, %v1240
          %v1242 = vpop.f32.mrb[0].mxu0
          %1243 = vmatprep.mubr.f32.mxu0 0.0
          %1244 = vmatmul.mubr.f32.gmra.mrb[0].mxu0 %v1110
          %v1245 = vpop.f32.mrb[0].mxu0
          %v1246 = vadd.f32 %v1074, %v1245
          %v1247 = vpop.f32.mrb[0].mxu0
          %1248 = vmatprep.mubr.f32.mxu0 0.0
          %1249 = vmatmul.mubr.f32.gmra.mrb[0].mxu0 %v1113
          %v1250 = vpop.f32.mrb[0].mxu0
          %v1251 = vadd.f32 %v1074, %v1250
          %v1252 = vpop.f32.mrb[0].mxu0
          %1253 = vmatprep.mubr.f32.mxu0 0.0
          %1254 = vmatmul.mubr.f32.gmra.mrb[0].mxu0 %v1116
          %v1255 = vpop.f32.mrb[0].mxu0
          %v1256 = vadd.f32 %v1074, %v1255
          %v1257 = vpop.f32.mrb[0].mxu0
          %1258 = vmatprep.mubr.f32.mxu0 0.0
          %1259 = vmatmul.mubr.f32.gmra.mrb[0].mxu0 %v1119
          %v1260 = vpop.f32.mrb[0].mxu0
          %v1261 = vadd.f32 %v1074, %v1260
          %v1262 = vpop.f32.mrb[0].mxu0
          %1263 = vmatprep.mubr.f32.mxu0 0.0
          %1264 = vmatmul.mubr.f32.gmra.mrb[0].mxu0 %v1122
          %v1265 = vpop.f32.mrb[0].mxu0
          %v1266 = vadd.f32 %v1074, %v1265
          %v1267 = vpop.f32.mrb[0].mxu0
          %1268 = vdwg.mxu0
          %v1269 = vmax.f32 %v1191, 0.0
          %v1270 = vmax.f32 %v1196, 0.0
          %v1271 = vmax.f32 %v1201, 0.0
          %v1272 = vmax.f32 %v1206, 0.0
          %v1273 = vmax.f32 %v1211, 0.0
          %v1274 = vmax.f32 %v1216, 0.0
          %v1275 = vmax.f32 %v1221, 0.0
          %v1276 = vmax.f32 %v1226, 0.0
          %v1277 = vmax.f32 %v1231, 0.0
          %v1278 = vmax.f32 %v1236, 0.0
          %v1279 = vmax.f32 %v1241, 0.0
          %v1280 = vmax.f32 %v1246, 0.0
          %v1281 = vmax.f32 %v1251, 0.0
          %v1282 = vmax.f32 %v1256, 0.0
          %v1283 = vmax.f32 %v1261, 0.0
          %v1284 = vmax.f32 %v1266, 0.0
          %v1285 = vld [vmem:[%s8] sm:$0xff]
          %v1286 = vld [vmem:[%s8 + $0x8] sm:$0xff]
          %v1287 = vld [vmem:[%s9] sm:$0x1]
          %v1289 = vlaneseq
          %v1290 = vshrl.u32 %v1289, 7
          %v1291 = vsub.s32 0, %v1290
          %v1292 = vrot.slane %v1287, %v1291
          %v1295 = vsel %vm815, %v1269, 0
          %v1298 = vsel %vm815, %v1270, 0
          %v1301 = vsel %vm815, %v1271, 0
          %v1304 = vsel %vm815, %v1272, 0
          %v1307 = vsel %vm815, %v1273, 0
          %v1310 = vsel %vm815, %v1274, 0
          %v1313 = vsel %vm815, %v1275, 0
          %v1316 = vsel %vm815, %v1276, 0
          %v1319 = vsel %vm815, %v1277, 0
          %v1322 = vsel %vm815, %v1278, 0
          %v1325 = vsel %vm815, %v1279, 0
          %v1328 = vsel %vm815, %v1280, 0
          %v1331 = vsel %vm815, %v1281, 0
          %v1334 = vsel %vm815, %v1282, 0
          %v1337 = vsel %vm815, %v1283, 0
          %v1340 = vsel %vm815, %v1284, 0
          %1342 = vmatprep.subr.mxu0 0.0
          %1343 = vmatpush1.msra.mxu0 %v1285
          %1344 = vmatprep.subr.mxu0 0.0
          %1345 = vmatpush1.msra.mxu0 %v1286
          %1346 = vmatprep.subr.mxu0 0.0
          %1347 = vmatpush1.msra.mxu0 0.0
          %1348 = vmatprep.subr.mxu0 0.0
          %1349 = vmatpush1.msra.mxu0 0.0
          %1350 = vmatprep.subr.mxu0 0.0
          %1351 = vmatpush1.msra.mxu0 0.0
          %1352 = vmatprep.subr.mxu0 0.0
          %1353 = vmatpush1.msra.mxu0 0.0
          %1354 = vmatprep.subr.mxu0 0.0
          %1355 = vmatpush1.msra.mxu0 0.0
          %1356 = vmatprep.subr.mxu0 0.0
          %1357 = vmatpush1.msra.mxu0 0.0
          %1358 = vmatprep.subr.mxu0 0.0
          %1359 = vmatpush1.msra.mxu0 0.0
          %1360 = vmatprep.subr.mxu0 0.0
          %1361 = vmatpush1.msra.mxu0 0.0
          %1362 = vmatprep.subr.mxu0 0.0
          %1363 = vmatpush1.msra.mxu0 0.0
          %1364 = vmatprep.subr.mxu0 0.0
          %1365 = vmatpush1.msra.mxu0 0.0
          %1366 = vmatprep.subr.mxu0 0.0
          %1367 = vmatpush1.msra.mxu0 0.0
          %1368 = vmatprep.subr.mxu0 0.0
          %1369 = vmatpush1.msra.mxu0 0.0
          %1370 = vmatprep.subr.mxu0 0.0
          %1371 = vmatpush1.msra.mxu0 0.0
          %1372 = vmatprep.subr.mxu0 0.0
          %1373 = vmatpush1.msra.mxu0 0.0
          %1374 = vmatprep.subr.mxu0 0.0
          %1375 = vmatpush1.msra.mxu0 0.0
          %1376 = vmatprep.subr.mxu0 0.0
          %1377 = vmatpush1.msra.mxu0 0.0
          %1378 = vmatprep.subr.mxu0 0.0
          %1379 = vmatpush1.msra.mxu0 0.0
          %1380 = vmatprep.subr.mxu0 0.0
          %1381 = vmatpush1.msra.mxu0 0.0
          %1382 = vmatprep.subr.mxu0 0.0
          %1383 = vmatpush1.msra.mxu0 0.0
          %1384 = vmatprep.subr.mxu0 0.0
          %1385 = vmatpush1.msra.mxu0 0.0
          %1386 = vmatprep.subr.mxu0 0.0
          %1387 = vmatpush1.msra.mxu0 0.0
          %1388 = vmatprep.subr.mxu0 0.0
          %1389 = vmatpush1.msra.mxu0 0.0
          %1390 = vmatprep.subr.mxu0 0.0
          %1391 = vmatpush1.msra.mxu0 0.0
          %1392 = vmatprep.subr.mxu0 0.0
          %1393 = vmatpush1.msra.mxu0 0.0
          %1394 = vmatprep.subr.mxu0 0.0
          %1395 = vmatpush1.msra.mxu0 0.0
          %1396 = vmatprep.subr.mxu0 0.0
          %1397 = vmatpush1.msra.mxu0 0.0
          %1398 = vmatprep.subr.mxu0 0.0
          %1399 = vmatpush1.msra.mxu0 0.0
          %1400 = vmatprep.subr.mxu0 0.0
          %1401 = vmatpush1.msra.mxu0 0.0
          %1402 = vmatprep.subr.mxu0 0.0
          %1403 = vmatpush1.msra.mxu0 0.0
          %1404 = vmatprep.subr.mxu0 0.0
          %1405 = vmatpush1.msra.mxu0 0.0
          %1406 = vmatprep.mubr.f32.mxu0 0.0
          %1407 = vmatmul.mubr.f32.gmra.mrb[0].mxu0 %v1295
          %v1408 = vpop.f32.mrb[0].mxu0
          %v1409 = vadd.f32 %v1292, %v1408
          %v1410 = vpop.f32.mrb[0].mxu0
          %1411 = vmatprep.mubr.f32.mxu0 0.0
          %1412 = vmatmul.mubr.f32.gmra.mrb[0].mxu0 %v1298
          %v1413 = vpop.f32.mrb[0].mxu0
          %v1414 = vadd.f32 %v1292, %v1413
          %v1415 = vpop.f32.mrb[0].mxu0
          %1416 = vmatprep.mubr.f32.mxu0 0.0
          %1417 = vmatmul.mubr.f32.gmra.mrb[0].mxu0 %v1301
          %v1418 = vpop.f32.mrb[0].mxu0
          %v1419 = vadd.f32 %v1292, %v1418
          %v1420 = vpop.f32.mrb[0].mxu0
          %1421 = vmatprep.mubr.f32.mxu0 0.0
          %1422 = vmatmul.mubr.f32.gmra.mrb[0].mxu0 %v1304
          %v1423 = vpop.f32.mrb[0].mxu0
          %v1424 = vadd.f32 %v1292, %v1423
          %v1425 = vpop.f32.mrb[0].mxu0
          %1426 = vmatprep.mubr.f32.mxu0 0.0
          %1427 = vmatmul.mubr.f32.gmra.mrb[0].mxu0 %v1307
          %v1428 = vpop.f32.mrb[0].mxu0
          %v1429 = vadd.f32 %v1292, %v1428
          %v1430 = vpop.f32.mrb[0].mxu0
          %1431 = vmatprep.mubr.f32.mxu0 0.0
          %1432 = vmatmul.mubr.f32.gmra.mrb[0].mxu0 %v1310
          %v1433 = vpop.f32.mrb[0].mxu0
          %v1434 = vadd.f32 %v1292, %v1433
          %v1435 = vpop.f32.mrb[0].mxu0
          %1436 = vmatprep.mubr.f32.mxu0 0.0
          %1437 = vmatmul.mubr.f32.gmra.mrb[0].mxu0 %v1313
          %v1438 = vpop.f32.mrb[0].mxu0
          %v1439 = vadd.f32 %v1292, %v1438
          %v1440 = vpop.f32.mrb[0].mxu0
          %1441 = vmatprep.mubr.f32.mxu0 0.0
          %1442 = vmatmul.mubr.f32.gmra.mrb[0].mxu0 %v1316
          %v1443 = vpop.f32.mrb[0].mxu0
          %v1444 = vadd.f32 %v1292, %v1443
          %v1445 = vpop.f32.mrb[0].mxu0
          %1446 = vmatprep.mubr.f32.mxu0 0.0
          %1447 = vmatmul.mubr.f32.gmra.mrb[0].mxu0 %v1319
          %v1448 = vpop.f32.mrb[0].mxu0
          %v1449 = vadd.f32 %v1292, %v1448
          %v1450 = vpop.f32.mrb[0].mxu0
          %1451 = vmatprep.mubr.f32.mxu0 0.0
          %1452 = vmatmul.mubr.f32.gmra.mrb[0].mxu0 %v1322
          %v1453 = vpop.f32.mrb[0].mxu0
          %v1454 = vadd.f32 %v1292, %v1453
          %v1455 = vpop.f32.mrb[0].mxu0
          %1456 = vmatprep.mubr.f32.mxu0 0.0
          %1457 = vmatmul.mubr.f32.gmra.mrb[0].mxu0 %v1325
          %v1458 = vpop.f32.mrb[0].mxu0
          %v1459 = vadd.f32 %v1292, %v1458
          %v1460 = vpop.f32.mrb[0].mxu0
          %1461 = vmatprep.mubr.f32.mxu0 0.0
          %1462 = vmatmul.mubr.f32.gmra.mrb[0].mxu0 %v1328
          %v1463 = vpop.f32.mrb[0].mxu0
          %v1464 = vadd.f32 %v1292, %v1463
          %v1465 = vpop.f32.mrb[0].mxu0
          %1466 = vmatprep.mubr.f32.mxu0 0.0
          %1467 = vmatmul.mubr.f32.gmra.mrb[0].mxu0 %v1331
          %v1468 = vpop.f32.mrb[0].mxu0
          %v1469 = vadd.f32 %v1292, %v1468
          %v1470 = vpop.f32.mrb[0].mxu0
          %1471 = vmatprep.mubr.f32.mxu0 0.0
          %1472 = vmatmul.mubr.f32.gmra.mrb[0].mxu0 %v1334
          %v1473 = vpop.f32.mrb[0].mxu0
          %v1474 = vadd.f32 %v1292, %v1473
          %v1475 = vpop.f32.mrb[0].mxu0
          %1476 = vmatprep.mubr.f32.mxu0 0.0
          %1477 = vmatmul.mubr.f32.gmra.mrb[0].mxu0 %v1337
          %v1478 = vpop.f32.mrb[0].mxu0
          %v1479 = vadd.f32 %v1292, %v1478
          %v1480 = vpop.f32.mrb[0].mxu0
          %1481 = vmatprep.mubr.f32.mxu0 0.0
          %1482 = vmatmul.mubr.f32.gmra.mrb[0].mxu0 %v1340
          %v1483 = vpop.f32.mrb[0].mxu0
          %v1484 = vadd.f32 %v1292, %v1483
          %v1485 = vpop.f32.mrb[0].mxu0
          %1486 = vdwg.mxu0
          %v1487 = vld [vmem:[%s576] sm:$0xff]
          %v1488 = vld [vmem:[%s576 + $0x8] sm:$0xff]
          %v1489 = vld [vmem:[%s576 + $0x10] sm:$0xff]
          %v1490 = vld [vmem:[%s576 + $0x18] sm:$0xff]
          %v1491 = vld [vmem:[%s576 + $0x20] sm:$0xff]
          %v1492 = vld [vmem:[%s576 + $0x28] sm:$0xff]
          %v1493 = vld [vmem:[%s576 + $0x30] sm:$0xff]
          %v1494 = vld [vmem:[%s576 + $0x38] sm:$0xff]
          %v1495 = vld [vmem:[%s576 + $0x40] sm:$0xff]
          %v1496 = vld [vmem:[%s576 + $0x48] sm:$0xff]
          %v1497 = vld [vmem:[%s576 + $0x50] sm:$0xff]
          %v1498 = vld [vmem:[%s576 + $0x58] sm:$0xff]
          %v1499 = vld [vmem:[%s576 + $0x60] sm:$0xff]
          %v1500 = vld [vmem:[%s576 + $0x68] sm:$0xff]
          %v1501 = vld [vmem:[%s576 + $0x70] sm:$0xff]
          %v1502 = vld [vmem:[%s576 + $0x78] sm:$0xff]
          %v1503 = vld [vmem:[%s10] sm:$0xff]
          %v1504 = vld [vmem:[%s10 + $0x8] sm:$0xff]
          %v1505 = vld [vmem:[%s10 + $0x10] sm:$0xff]
          %v1506 = vld [vmem:[%s11] sm:$0x1]
          %v1523 = vrot.slane %v1487, 7
          %v1524 = vrot.slane %v1488, 7
          %v1525 = vsel %vm635, %v1523, %v1524
          %v1526 = vrot.slane %v1489, 7
          %v1527 = vsel %vm635, %v1524, %v1526
          %v1528 = vrot.slane %v1490, 7
          %v1529 = vsel %vm635, %v1526, %v1528
          %v1530 = vrot.slane %v1491, 7
          %v1531 = vsel %vm635, %v1528, %v1530
          %v1532 = vrot.slane %v1492, 7
          %v1533 = vsel %vm635, %v1530, %v1532
          %v1534 = vrot.slane %v1493, 7
          %v1535 = vsel %vm635, %v1532, %v1534
          %v1536 = vrot.slane %v1494, 7
          %v1537 = vsel %vm635, %v1534, %v1536
          %v1538 = vrot.slane %v1495, 7
          %v1539 = vsel %vm635, %v1536, %v1538
          %v1540 = vrot.slane %v1496, 7
          %v1541 = vsel %vm635, %v1538, %v1540
          %v1542 = vrot.slane %v1497, 7
          %v1543 = vsel %vm635, %v1540, %v1542
          %v1544 = vrot.slane %v1498, 7
          %v1545 = vsel %vm635, %v1542, %v1544
          %v1546 = vrot.slane %v1499, 7
          %v1547 = vsel %vm635, %v1544, %v1546
          %v1548 = vrot.slane %v1500, 7
          %v1549 = vsel %vm635, %v1546, %v1548
          %v1550 = vrot.slane %v1501, 7
          %v1551 = vsel %vm635, %v1548, %v1550
          %v1552 = vrot.slane %v1502, 7
          %v1553 = vsel %vm635, %v1550, %v1552
          %v1570 = vsel %vm635, 0.0, %v1523
          %v1571 = vrot.slane %v1487, 1
          %v1572 = vrot.slane %v1488, 1
          %v1573 = vsel %vm684, %v1571, %v1572
          %v1574 = vrot.slane %v1489, 1
          %v1575 = vsel %vm684, %v1572, %v1574
          %v1576 = vrot.slane %v1490, 1
          %v1577 = vsel %vm684, %v1574, %v1576
          %v1578 = vrot.slane %v1491, 1
          %v1579 = vsel %vm684, %v1576, %v1578
          %v1580 = vrot.slane %v1492, 1
          %v1581 = vsel %vm684, %v1578, %v1580
          %v1582 = vrot.slane %v1493, 1
          %v1583 = vsel %vm684, %v1580, %v1582
          %v1584 = vrot.slane %v1494, 1
          %v1585 = vsel %vm684, %v1582, %v1584
          %v1586 = vrot.slane %v1495, 1
          %v1587 = vsel %vm684, %v1584, %v1586
          %v1588 = vrot.slane %v1496, 1
          %v1589 = vsel %vm684, %v1586, %v1588
          %v1590 = vrot.slane %v1497, 1
          %v1591 = vsel %vm684, %v1588, %v1590
          %v1592 = vrot.slane %v1498, 1
          %v1593 = vsel %vm684, %v1590, %v1592
          %v1594 = vrot.slane %v1499, 1
          %v1595 = vsel %vm684, %v1592, %v1594
          %v1596 = vrot.slane %v1500, 1
          %v1597 = vsel %vm684, %v1594, %v1596
          %v1598 = vrot.slane %v1501, 1
          %v1599 = vsel %vm684, %v1596, %v1598
          %v1600 = vrot.slane %v1502, 1
          %v1601 = vsel %vm684, %v1598, %v1600
          %v1603 = vsel %vm684, %v1600, 0.0
          %1604 = vrot.lane.b32.xlu0 %v1487, 8
          %v1605 = vpop.permute.xlu0 %1604
          %1606 = vrot.lane.b32.xlu0 %v1488, 8
          %v1607 = vpop.permute.xlu0 %1606
          %1608 = vrot.lane.b32.xlu0 %v1489, 8
          %v1609 = vpop.permute.xlu0 %1608
          %1610 = vrot.lane.b32.xlu0 %v1490, 8
          %v1611 = vpop.permute.xlu0 %1610
          %1612 = vrot.lane.b32.xlu0 %v1491, 8
          %v1613 = vpop.permute.xlu0 %1612
          %1614 = vrot.lane.b32.xlu0 %v1492, 8
          %v1615 = vpop.permute.xlu0 %1614
          %1616 = vrot.lane.b32.xlu0 %v1493, 8
          %v1617 = vpop.permute.xlu0 %1616
          %1618 = vrot.lane.b32.xlu0 %v1494, 8
          %v1619 = vpop.permute.xlu0 %1618
          %1620 = vrot.lane.b32.xlu0 %v1495, 8
          %v1621 = vpop.permute.xlu0 %1620
          %1622 = vrot.lane.b32.xlu0 %v1496, 8
          %v1623 = vpop.permute.xlu0 %1622
          %1624 = vrot.lane.b32.xlu0 %v1497, 8
          %v1625 = vpop.permute.xlu0 %1624
          %1626 = vrot.lane.b32.xlu0 %v1498, 8
          %v1627 = vpop.permute.xlu0 %1626
          %1628 = vrot.lane.b32.xlu0 %v1499, 8
          %v1629 = vpop.permute.xlu0 %1628
          %1630 = vrot.lane.b32.xlu0 %v1500, 8
          %v1631 = vpop.permute.xlu0 %1630
          %1632 = vrot.lane.b32.xlu0 %v1501, 8
          %v1633 = vpop.permute.xlu0 %1632
          %1634 = vrot.lane.b32.xlu0 %v1502, 8
          %v1635 = vpop.permute.xlu0 %1634
          %1653 = vrot.lane.b32.xlu0 %v1573, 16
          %v1654 = vpop.permute.xlu0 %1653
          %1655 = vrot.lane.b32.xlu0 %v1575, 16
          %v1656 = vpop.permute.xlu0 %1655
          %1657 = vrot.lane.b32.xlu0 %v1577, 16
          %v1658 = vpop.permute.xlu0 %1657
          %1659 = vrot.lane.b32.xlu0 %v1579, 16
          %v1660 = vpop.permute.xlu0 %1659
          %1661 = vrot.lane.b32.xlu0 %v1581, 16
          %v1662 = vpop.permute.xlu0 %1661
          %1663 = vrot.lane.b32.xlu0 %v1583, 16
          %v1664 = vpop.permute.xlu0 %1663
          %1665 = vrot.lane.b32.xlu0 %v1585, 16
          %v1666 = vpop.permute.xlu0 %1665
          %1667 = vrot.lane.b32.xlu0 %v1587, 16
          %v1668 = vpop.permute.xlu0 %1667
          %1669 = vrot.lane.b32.xlu0 %v1589, 16
          %v1670 = vpop.permute.xlu0 %1669
          %1671 = vrot.lane.b32.xlu0 %v1591, 16
          %v1672 = vpop.permute.xlu0 %1671
          %1673 = vrot.lane.b32.xlu0 %v1593, 16
          %v1674 = vpop.permute.xlu0 %1673
          %1675 = vrot.lane.b32.xlu0 %v1595, 16
          %v1676 = vpop.permute.xlu0 %1675
          %1677 = vrot.lane.b32.xlu0 %v1597, 16
          %v1678 = vpop.permute.xlu0 %1677
          %1679 = vrot.lane.b32.xlu0 %v1599, 16
          %v1680 = vpop.permute.xlu0 %1679
          %1681 = vrot.lane.b32.xlu0 %v1601, 16
          %v1682 = vpop.permute.xlu0 %1681
          %1683 = vrot.lane.b32.xlu0 %v1603, 16
          %v1684 = vpop.permute.xlu0 %1683
          %vm1701 = vcmask 64512
          %v1702 = vsel %vm1701, %v1570, %v1605
          %v1703 = vsel %vm1701, %v1525, %v1607
          %v1704 = vsel %vm1701, %v1527, %v1609
          %v1705 = vsel %vm1701, %v1529, %v1611
          %v1706 = vsel %vm1701, %v1531, %v1613
          %v1707 = vsel %vm1701, %v1533, %v1615
          %v1708 = vsel %vm1701, %v1535, %v1617
          %v1709 = vsel %vm1701, %v1537, %v1619
          %v1710 = vsel %vm1701, %v1539, %v1621
          %v1711 = vsel %vm1701, %v1541, %v1623
          %v1712 = vsel %vm1701, %v1543, %v1625
          %v1713 = vsel %vm1701, %v1545, %v1627
          %v1714 = vsel %vm1701, %v1547, %v1629
          %v1715 = vsel %vm1701, %v1549, %v1631
          %v1716 = vsel %vm1701, %v1551, %v1633
          %v1717 = vsel %vm1701, %v1553, %v1635
          %v1718 = vsel %vm815, %v1702, %v1654
          %v1719 = vsel %vm815, %v1703, %v1656
          %v1720 = vsel %vm815, %v1704, %v1658
          %v1721 = vsel %vm815, %v1705, %v1660
          %v1722 = vsel %vm815, %v1706, %v1662
          %v1723 = vsel %vm815, %v1707, %v1664
          %v1724 = vsel %vm815, %v1708, %v1666
          %v1725 = vsel %vm815, %v1709, %v1668
          %v1726 = vsel %vm815, %v1710, %v1670
          %v1727 = vsel %vm815, %v1711, %v1672
          %v1728 = vsel %vm815, %v1712, %v1674
          %v1729 = vsel %vm815, %v1713, %v1676
          %v1730 = vsel %vm815, %v1714, %v1678
          %v1731 = vsel %vm815, %v1715, %v1680
          %v1732 = vsel %vm815, %v1716, %v1682
          %v1733 = vsel %vm815, %v1717, %v1684
          %v1735 = vlaneseq
          %v1736 = vshrl.u32 %v1735, 7
          %v1737 = vsub.s32 0, %v1736
          %v1738 = vrot.slane %v1506, %v1737
          %vm1740 = vcmask 195584
          %v1742 = vsel %vm1740, %v1718, 0
          %v1745 = vsel %vm1740, %v1719, 0
          %v1748 = vsel %vm1740, %v1720, 0
          %v1751 = vsel %vm1740, %v1721, 0
          %v1754 = vsel %vm1740, %v1722, 0
          %v1757 = vsel %vm1740, %v1723, 0
          %v1760 = vsel %vm1740, %v1724, 0
          %v1763 = vsel %vm1740, %v1725, 0
          %v1766 = vsel %vm1740, %v1726, 0
          %v1769 = vsel %vm1740, %v1727, 0
          %v1772 = vsel %vm1740, %v1728, 0
          %v1775 = vsel %vm1740, %v1729, 0
          %v1778 = vsel %vm1740, %v1730, 0
          %v1781 = vsel %vm1740, %v1731, 0
          %v1784 = vsel %vm1740, %v1732, 0
          %v1787 = vsel %vm1740, %v1733, 0
          %1789 = vmatprep.subr.mxu0 0.0
          %1790 = vmatpush1.msra.mxu0 %v1503
          %1791 = vmatprep.subr.mxu0 0.0
          %1792 = vmatpush1.msra.mxu0 %v1504
          %1793 = vmatprep.subr.mxu0 0.0
          %1794 = vmatpush1.msra.mxu0 %v1505
          %1795 = vmatprep.subr.mxu0 0.0
          %1796 = vmatpush1.msra.mxu0 0.0
          %1797 = vmatprep.subr.mxu0 0.0
          %1798 = vmatpush1.msra.mxu0 0.0
          %1799 = vmatprep.subr.mxu0 0.0
          %1800 = vmatpush1.msra.mxu0 0.0
          %1801 = vmatprep.subr.mxu0 0.0
          %1802 = vmatpush1.msra.mxu0 0.0
          %1803 = vmatprep.subr.mxu0 0.0
          %1804 = vmatpush1.msra.mxu0 0.0
          %1805 = vmatprep.subr.mxu0 0.0
          %1806 = vmatpush1.msra.mxu0 0.0
          %1807 = vmatprep.subr.mxu0 0.0
          %1808 = vmatpush1.msra.mxu0 0.0
          %1809 = vmatprep.subr.mxu0 0.0
          %1810 = vmatpush1.msra.mxu0 0.0
          %1811 = vmatprep.subr.mxu0 0.0
          %1812 = vmatpush1.msra.mxu0 0.0
          %1813 = vmatprep.subr.mxu0 0.0
          %1814 = vmatpush1.msra.mxu0 0.0
          %1815 = vmatprep.subr.mxu0 0.0
          %1816 = vmatpush1.msra.mxu0 0.0
          %1817 = vmatprep.subr.mxu0 0.0
          %1818 = vmatpush1.msra.mxu0 0.0
          %1819 = vmatprep.subr.mxu0 0.0
          %1820 = vmatpush1.msra.mxu0 0.0
          %1821 = vmatprep.subr.mxu0 0.0
          %1822 = vmatpush1.msra.mxu0 0.0
          %1823 = vmatprep.subr.mxu0 0.0
          %1824 = vmatpush1.msra.mxu0 0.0
          %1825 = vmatprep.subr.mxu0 0.0
          %1826 = vmatpush1.msra.mxu0 0.0
          %1827 = vmatprep.subr.mxu0 0.0
          %1828 = vmatpush1.msra.mxu0 0.0
          %1829 = vmatprep.subr.mxu0 0.0
          %1830 = vmatpush1.msra.mxu0 0.0
          %1831 = vmatprep.subr.mxu0 0.0
          %1832 = vmatpush1.msra.mxu0 0.0
          %1833 = vmatprep.subr.mxu0 0.0
          %1834 = vmatpush1.msra.mxu0 0.0
          %1835 = vmatprep.subr.mxu0 0.0
          %1836 = vmatpush1.msra.mxu0 0.0
          %1837 = vmatprep.subr.mxu0 0.0
          %1838 = vmatpush1.msra.mxu0 0.0
          %1839 = vmatprep.subr.mxu0 0.0
          %1840 = vmatpush1.msra.mxu0 0.0
          %1841 = vmatprep.subr.mxu0 0.0
          %1842 = vmatpush1.msra.mxu0 0.0
          %1843 = vmatprep.subr.mxu0 0.0
          %1844 = vmatpush1.msra.mxu0 0.0
          %1845 = vmatprep.subr.mxu0 0.0
          %1846 = vmatpush1.msra.mxu0 0.0
          %1847 = vmatprep.subr.mxu0 0.0
          %1848 = vmatpush1.msra.mxu0 0.0
          %1849 = vmatprep.subr.mxu0 0.0
          %1850 = vmatpush1.msra.mxu0 0.0
          %1851 = vmatprep.subr.mxu0 0.0
          %1852 = vmatpush1.msra.mxu0 0.0
          %1853 = vmatprep.mubr.f32.mxu0 0.0
          %1854 = vmatmul.mubr.f32.gmra.mrb[0].mxu0 %v1742
          %v1855 = vpop.f32.mrb[0].mxu0
          %v1856 = vadd.f32 %v1738, %v1855
          %v1857 = vpop.f32.mrb[0].mxu0
          %1858 = vmatprep.mubr.f32.mxu0 0.0
          %1859 = vmatmul.mubr.f32.gmra.mrb[0].mxu0 %v1745
          %v1860 = vpop.f32.mrb[0].mxu0
          %v1861 = vadd.f32 %v1738, %v1860
          %v1862 = vpop.f32.mrb[0].mxu0
          %1863 = vmatprep.mubr.f32.mxu0 0.0
          %1864 = vmatmul.mubr.f32.gmra.mrb[0].mxu0 %v1748
          %v1865 = vpop.f32.mrb[0].mxu0
          %v1866 = vadd.f32 %v1738, %v1865
          %v1867 = vpop.f32.mrb[0].mxu0
          %1868 = vmatprep.mubr.f32.mxu0 0.0
          %1869 = vmatmul.mubr.f32.gmra.mrb[0].mxu0 %v1751
          %v1870 = vpop.f32.mrb[0].mxu0
          %v1871 = vadd.f32 %v1738, %v1870
          %v1872 = vpop.f32.mrb[0].mxu0
          %1873 = vmatprep.mubr.f32.mxu0 0.0
          %1874 = vmatmul.mubr.f32.gmra.mrb[0].mxu0 %v1754
          %v1875 = vpop.f32.mrb[0].mxu0
          %v1876 = vadd.f32 %v1738, %v1875
          %v1877 = vpop.f32.mrb[0].mxu0
          %1878 = vmatprep.mubr.f32.mxu0 0.0
          %1879 = vmatmul.mubr.f32.gmra.mrb[0].mxu0 %v1757
          %v1880 = vpop.f32.mrb[0].mxu0
          %v1881 = vadd.f32 %v1738, %v1880
          %v1882 = vpop.f32.mrb[0].mxu0
          %1883 = vmatprep.mubr.f32.mxu0 0.0
          %1884 = vmatmul.mubr.f32.gmra.mrb[0].mxu0 %v1760
          %v1885 = vpop.f32.mrb[0].mxu0
          %v1886 = vadd.f32 %v1738, %v1885
          %v1887 = vpop.f32.mrb[0].mxu0
          %1888 = vmatprep.mubr.f32.mxu0 0.0
          %1889 = vmatmul.mubr.f32.gmra.mrb[0].mxu0 %v1763
          %v1890 = vpop.f32.mrb[0].mxu0
          %v1891 = vadd.f32 %v1738, %v1890
          %v1892 = vpop.f32.mrb[0].mxu0
          %1893 = vmatprep.mubr.f32.mxu0 0.0
          %1894 = vmatmul.mubr.f32.gmra.mrb[0].mxu0 %v1766
          %v1895 = vpop.f32.mrb[0].mxu0
          %v1896 = vadd.f32 %v1738, %v1895
          %v1897 = vpop.f32.mrb[0].mxu0
          %1898 = vmatprep.mubr.f32.mxu0 0.0
          %1899 = vmatmul.mubr.f32.gmra.mrb[0].mxu0 %v1769
          %v1900 = vpop.f32.mrb[0].mxu0
          %v1901 = vadd.f32 %v1738, %v1900
          %v1902 = vpop.f32.mrb[0].mxu0
          %1903 = vmatprep.mubr.f32.mxu0 0.0
          %1904 = vmatmul.mubr.f32.gmra.mrb[0].mxu0 %v1772
          %v1905 = vpop.f32.mrb[0].mxu0
          %v1906 = vadd.f32 %v1738, %v1905
          %v1907 = vpop.f32.mrb[0].mxu0
          %1908 = vmatprep.mubr.f32.mxu0 0.0
          %1909 = vmatmul.mubr.f32.gmra.mrb[0].mxu0 %v1775
          %v1910 = vpop.f32.mrb[0].mxu0
          %v1911 = vadd.f32 %v1738, %v1910
          %v1912 = vpop.f32.mrb[0].mxu0
          %1913 = vmatprep.mubr.f32.mxu0 0.0
          %1914 = vmatmul.mubr.f32.gmra.mrb[0].mxu0 %v1778
          %v1915 = vpop.f32.mrb[0].mxu0
          %v1916 = vadd.f32 %v1738, %v1915
          %v1917 = vpop.f32.mrb[0].mxu0
          %1918 = vmatprep.mubr.f32.mxu0 0.0
          %1919 = vmatmul.mubr.f32.gmra.mrb[0].mxu0 %v1781
          %v1920 = vpop.f32.mrb[0].mxu0
          %v1921 = vadd.f32 %v1738, %v1920
          %v1922 = vpop.f32.mrb[0].mxu0
          %1923 = vmatprep.mubr.f32.mxu0 0.0
          %1924 = vmatmul.mubr.f32.gmra.mrb[0].mxu0 %v1784
          %v1925 = vpop.f32.mrb[0].mxu0
          %v1926 = vadd.f32 %v1738, %v1925
          %v1927 = vpop.f32.mrb[0].mxu0
          %1928 = vmatprep.mubr.f32.mxu0 0.0
          %1929 = vmatmul.mubr.f32.gmra.mrb[0].mxu0 %v1787
          %v1930 = vpop.f32.mrb[0].mxu0
          %v1931 = vadd.f32 %v1738, %v1930
          %v1932 = vpop.f32.mrb[0].mxu0
          %1933 = vdwg.mxu0
          %v1934 = vmax.f32 %v1856, 0.0
          %v1935 = vmax.f32 %v1861, 0.0
          %v1936 = vmax.f32 %v1866, 0.0
          %v1937 = vmax.f32 %v1871, 0.0
          %v1938 = vmax.f32 %v1876, 0.0
          %v1939 = vmax.f32 %v1881, 0.0
          %v1940 = vmax.f32 %v1886, 0.0
          %v1941 = vmax.f32 %v1891, 0.0
          %v1942 = vmax.f32 %v1896, 0.0
          %v1943 = vmax.f32 %v1901, 0.0
          %v1944 = vmax.f32 %v1906, 0.0
          %v1945 = vmax.f32 %v1911, 0.0
          %v1946 = vmax.f32 %v1916, 0.0
          %v1947 = vmax.f32 %v1921, 0.0
          %v1948 = vmax.f32 %v1926, 0.0
          %v1949 = vmax.f32 %v1931, 0.0
          %v1950 = vld [vmem:[%s12] sm:$0xff]
          %v1951 = vld [vmem:[%s12 + $0x8] sm:$0xff]
          %v1952 = vld [vmem:[%s13] sm:$0x1]
          %v1954 = vlaneseq
          %v1955 = vshrl.u32 %v1954, 7
          %v1956 = vsub.s32 0, %v1955
          %v1957 = vrot.slane %v1952, %v1956
          %v1960 = vsel %vm815, %v1934, 0
          %v1963 = vsel %vm815, %v1935, 0
          %v1966 = vsel %vm815, %v1936, 0
          %v1969 = vsel %vm815, %v1937, 0
          %v1972 = vsel %vm815, %v1938, 0
          %v1975 = vsel %vm815, %v1939, 0
          %v1978 = vsel %vm815, %v1940, 0
          %v1981 = vsel %vm815, %v1941, 0
          %v1984 = vsel %vm815, %v1942, 0
          %v1987 = vsel %vm815, %v1943, 0
          %v1990 = vsel %vm815, %v1944, 0
          %v1993 = vsel %vm815, %v1945, 0
          %v1996 = vsel %vm815, %v1946, 0
          %v1999 = vsel %vm815, %v1947, 0
          %v2002 = vsel %vm815, %v1948, 0
          %v2005 = vsel %vm815, %v1949, 0
          %2007 = vmatprep.subr.mxu0 0.0
          %2008 = vmatpush1.msra.mxu0 %v1950
          %2009 = vmatprep.subr.mxu0 0.0
          %2010 = vmatpush1.msra.mxu0 %v1951
          %2011 = vmatprep.subr.mxu0 0.0
          %2012 = vmatpush1.msra.mxu0 0.0
          %2013 = vmatprep.subr.mxu0 0.0
          %2014 = vmatpush1.msra.mxu0 0.0
          %2015 = vmatprep.subr.mxu0 0.0
          %2016 = vmatpush1.msra.mxu0 0.0
          %2017 = vmatprep.subr.mxu0 0.0
          %2018 = vmatpush1.msra.mxu0 0.0
          %2019 = vmatprep.subr.mxu0 0.0
          %2020 = vmatpush1.msra.mxu0 0.0
          %2021 = vmatprep.subr.mxu0 0.0
          %2022 = vmatpush1.msra.mxu0 0.0
          %2023 = vmatprep.subr.mxu0 0.0
          %2024 = vmatpush1.msra.mxu0 0.0
          %2025 = vmatprep.subr.mxu0 0.0
          %2026 = vmatpush1.msra.mxu0 0.0
          %2027 = vmatprep.subr.mxu0 0.0
          %2028 = vmatpush1.msra.mxu0 0.0
          %2029 = vmatprep.subr.mxu0 0.0
          %2030 = vmatpush1.msra.mxu0 0.0
          %2031 = vmatprep.subr.mxu0 0.0
          %2032 = vmatpush1.msra.mxu0 0.0
          %2033 = vmatprep.subr.mxu0 0.0
          %2034 = vmatpush1.msra.mxu0 0.0
          %2035 = vmatprep.subr.mxu0 0.0
          %2036 = vmatpush1.msra.mxu0 0.0
          %2037 = vmatprep.subr.mxu0 0.0
          %2038 = vmatpush1.msra.mxu0 0.0
          %2039 = vmatprep.subr.mxu0 0.0
          %2040 = vmatpush1.msra.mxu0 0.0
          %2041 = vmatprep.subr.mxu0 0.0
          %2042 = vmatpush1.msra.mxu0 0.0
          %2043 = vmatprep.subr.mxu0 0.0
          %2044 = vmatpush1.msra.mxu0 0.0
          %2045 = vmatprep.subr.mxu0 0.0
          %2046 = vmatpush1.msra.mxu0 0.0
          %2047 = vmatprep.subr.mxu0 0.0
          %2048 = vmatpush1.msra.mxu0 0.0
          %2049 = vmatprep.subr.mxu0 0.0
          %2050 = vmatpush1.msra.mxu0 0.0
          %2051 = vmatprep.subr.mxu0 0.0
          %2052 = vmatpush1.msra.mxu0 0.0
          %2053 = vmatprep.subr.mxu0 0.0
          %2054 = vmatpush1.msra.mxu0 0.0
          %2055 = vmatprep.subr.mxu0 0.0
          %2056 = vmatpush1.msra.mxu0 0.0
          %2057 = vmatprep.subr.mxu0 0.0
          %2058 = vmatpush1.msra.mxu0 0.0
          %2059 = vmatprep.subr.mxu0 0.0
          %2060 = vmatpush1.msra.mxu0 0.0
          %2061 = vmatprep.subr.mxu0 0.0
          %2062 = vmatpush1.msra.mxu0 0.0
          %2063 = vmatprep.subr.mxu0 0.0
          %2064 = vmatpush1.msra.mxu0 0.0
          %2065 = vmatprep.subr.mxu0 0.0
          %2066 = vmatpush1.msra.mxu0 0.0
          %2067 = vmatprep.subr.mxu0 0.0
          %2068 = vmatpush1.msra.mxu0 0.0
          %2069 = vmatprep.subr.mxu0 0.0
          %2070 = vmatpush1.msra.mxu0 0.0
          %2071 = vmatprep.mubr.f32.mxu0 0.0
          %2072 = vmatmul.mubr.f32.gmra.mrb[0].mxu0 %v1960
          %v2073 = vpop.f32.mrb[0].mxu0
          %v2074 = vadd.f32 %v1957, %v2073
          %v2075 = vpop.f32.mrb[0].mxu0
          %2076 = vmatprep.mubr.f32.mxu0 0.0
          %2077 = vmatmul.mubr.f32.gmra.mrb[0].mxu0 %v1963
          %v2078 = vpop.f32.mrb[0].mxu0
          %v2079 = vadd.f32 %v1957, %v2078
          %v2080 = vpop.f32.mrb[0].mxu0
          %2081 = vmatprep.mubr.f32.mxu0 0.0
          %2082 = vmatmul.mubr.f32.gmra.mrb[0].mxu0 %v1966
          %v2083 = vpop.f32.mrb[0].mxu0
          %v2084 = vadd.f32 %v1957, %v2083
          %v2085 = vpop.f32.mrb[0].mxu0
          %2086 = vmatprep.mubr.f32.mxu0 0.0
          %2087 = vmatmul.mubr.f32.gmra.mrb[0].mxu0 %v1969
          %v2088 = vpop.f32.mrb[0].mxu0
          %v2089 = vadd.f32 %v1957, %v2088
          %v2090 = vpop.f32.mrb[0].mxu0
          %2091 = vmatprep.mubr.f32.mxu0 0.0
          %2092 = vmatmul.mubr.f32.gmra.mrb[0].mxu0 %v1972
          %v2093 = vpop.f32.mrb[0].mxu0
          %v2094 = vadd.f32 %v1957, %v2093
          %v2095 = vpop.f32.mrb[0].mxu0
          %2096 = vmatprep.mubr.f32.mxu0 0.0
          %2097 = vmatmul.mubr.f32.gmra.mrb[0].mxu0 %v1975
          %v2098 = vpop.f32.mrb[0].mxu0
          %v2099 = vadd.f32 %v1957, %v2098
          %v2100 = vpop.f32.mrb[0].mxu0
          %2101 = vmatprep.mubr.f32.mxu0 0.0
          %2102 = vmatmul.mubr.f32.gmra.mrb[0].mxu0 %v1978
          %v2103 = vpop.f32.mrb[0].mxu0
          %v2104 = vadd.f32 %v1957, %v2103
          %v2105 = vpop.f32.mrb[0].mxu0
          %2106 = vmatprep.mubr.f32.mxu0 0.0
          %2107 = vmatmul.mubr.f32.gmra.mrb[0].mxu0 %v1981
          %v2108 = vpop.f32.mrb[0].mxu0
          %v2109 = vadd.f32 %v1957, %v2108
          %v2110 = vpop.f32.mrb[0].mxu0
          %2111 = vmatprep.mubr.f32.mxu0 0.0
          %2112 = vmatmul.mubr.f32.gmra.mrb[0].mxu0 %v1984
          %v2113 = vpop.f32.mrb[0].mxu0
          %v2114 = vadd.f32 %v1957, %v2113
          %v2115 = vpop.f32.mrb[0].mxu0
          %2116 = vmatprep.mubr.f32.mxu0 0.0
          %2117 = vmatmul.mubr.f32.gmra.mrb[0].mxu0 %v1987
          %v2118 = vpop.f32.mrb[0].mxu0
          %v2119 = vadd.f32 %v1957, %v2118
          %v2120 = vpop.f32.mrb[0].mxu0
          %2121 = vmatprep.mubr.f32.mxu0 0.0
          %2122 = vmatmul.mubr.f32.gmra.mrb[0].mxu0 %v1990
          %v2123 = vpop.f32.mrb[0].mxu0
          %v2124 = vadd.f32 %v1957, %v2123
          %v2125 = vpop.f32.mrb[0].mxu0
          %2126 = vmatprep.mubr.f32.mxu0 0.0
          %2127 = vmatmul.mubr.f32.gmra.mrb[0].mxu0 %v1993
          %v2128 = vpop.f32.mrb[0].mxu0
          %v2129 = vadd.f32 %v1957, %v2128
          %v2130 = vpop.f32.mrb[0].mxu0
          %2131 = vmatprep.mubr.f32.mxu0 0.0
          %2132 = vmatmul.mubr.f32.gmra.mrb[0].mxu0 %v1996
          %v2133 = vpop.f32.mrb[0].mxu0
          %v2134 = vadd.f32 %v1957, %v2133
          %v2135 = vpop.f32.mrb[0].mxu0
          %2136 = vmatprep.mubr.f32.mxu0 0.0
          %2137 = vmatmul.mubr.f32.gmra.mrb[0].mxu0 %v1999
          %v2138 = vpop.f32.mrb[0].mxu0
          %v2139 = vadd.f32 %v1957, %v2138
          %v2140 = vpop.f32.mrb[0].mxu0
          %2141 = vmatprep.mubr.f32.mxu0 0.0
          %2142 = vmatmul.mubr.f32.gmra.mrb[0].mxu0 %v2002
          %v2143 = vpop.f32.mrb[0].mxu0
          %v2144 = vadd.f32 %v1957, %v2143
          %v2145 = vpop.f32.mrb[0].mxu0
          %2146 = vmatprep.mubr.f32.mxu0 0.0
          %2147 = vmatmul.mubr.f32.gmra.mrb[0].mxu0 %v2005
          %v2148 = vpop.f32.mrb[0].mxu0
          %v2149 = vadd.f32 %v1957, %v2148
          %v2150 = vpop.f32.mrb[0].mxu0
          %2151 = vdwg.mxu0
          %v2152 = vmul.f32 %v1409, %v1409
          %v2153 = vmul.f32 %v1414, %v1414
          %v2154 = vmul.f32 %v1419, %v1419
          %v2155 = vmul.f32 %v1424, %v1424
          %v2156 = vmul.f32 %v1429, %v1429
          %v2157 = vmul.f32 %v1434, %v1434
          %v2158 = vmul.f32 %v1439, %v1439
          %v2159 = vmul.f32 %v1444, %v1444
          %v2160 = vmul.f32 %v1449, %v1449
          %v2161 = vmul.f32 %v1454, %v1454
          %v2162 = vmul.f32 %v1459, %v1459
          %v2163 = vmul.f32 %v1464, %v1464
          %v2164 = vmul.f32 %v1469, %v1469
          %v2165 = vmul.f32 %v1474, %v1474
          %v2166 = vmul.f32 %v1479, %v1479
          %v2167 = vmul.f32 %v1484, %v1484
          %v2168 = vsel %vm815, %v2152, 0.0
          %2169 = vadd.xlane.f32.xlu0 %v2168
          %v2170 = vpop.xlane.xlu0 %2169
          %v2171 = vsel %vm815, %v2153, 0.0
          %2172 = vadd.xlane.f32.xlu0 %v2171
          %v2173 = vpop.xlane.xlu0 %2172
          %v2174 = vsel %vm815, %v2154, 0.0
          %2175 = vadd.xlane.f32.xlu0 %v2174
          %v2176 = vpop.xlane.xlu0 %2175
          %v2177 = vsel %vm815, %v2155, 0.0
          %2178 = vadd.xlane.f32.xlu0 %v2177
          %v2179 = vpop.xlane.xlu0 %2178
          %v2180 = vsel %vm815, %v2156, 0.0
          %2181 = vadd.xlane.f32.xlu0 %v2180
          %v2182 = vpop.xlane.xlu0 %2181
          %v2183 = vsel %vm815, %v2157, 0.0
          %2184 = vadd.xlane.f32.xlu0 %v2183
          %v2185 = vpop.xlane.xlu0 %2184
          %v2186 = vsel %vm815, %v2158, 0.0
          %2187 = vadd.xlane.f32.xlu0 %v2186
          %v2188 = vpop.xlane.xlu0 %2187
          %v2189 = vsel %vm815, %v2159, 0.0
          %2190 = vadd.xlane.f32.xlu0 %v2189
          %v2191 = vpop.xlane.xlu0 %2190
          %v2192 = vsel %vm815, %v2160, 0.0
          %2193 = vadd.xlane.f32.xlu0 %v2192
          %v2194 = vpop.xlane.xlu0 %2193
          %v2195 = vsel %vm815, %v2161, 0.0
          %2196 = vadd.xlane.f32.xlu0 %v2195
          %v2197 = vpop.xlane.xlu0 %2196
          %v2198 = vsel %vm815, %v2162, 0.0
          %2199 = vadd.xlane.f32.xlu0 %v2198
          %v2200 = vpop.xlane.xlu0 %2199
          %v2201 = vsel %vm815, %v2163, 0.0
          %2202 = vadd.xlane.f32.xlu0 %v2201
          %v2203 = vpop.xlane.xlu0 %2202
          %v2204 = vsel %vm815, %v2164, 0.0
          %2205 = vadd.xlane.f32.xlu0 %v2204
          %v2206 = vpop.xlane.xlu0 %2205
          %v2207 = vsel %vm815, %v2165, 0.0
          %2208 = vadd.xlane.f32.xlu0 %v2207
          %v2209 = vpop.xlane.xlu0 %2208
          %v2210 = vsel %vm815, %v2166, 0.0
          %2211 = vadd.xlane.f32.xlu0 %v2210
          %v2212 = vpop.xlane.xlu0 %2211
          %v2213 = vsel %vm815, %v2167, 0.0
          %2214 = vadd.xlane.f32.xlu0 %v2213
          %v2215 = vpop.xlane.xlu0 %2214
          %v2216 = vmul.f32 %v2074, %v2074
          %v2217 = vmul.f32 %v2079, %v2079
          %v2218 = vmul.f32 %v2084, %v2084
          %v2219 = vmul.f32 %v2089, %v2089
          %v2220 = vmul.f32 %v2094, %v2094
          %v2221 = vmul.f32 %v2099, %v2099
          %v2222 = vmul.f32 %v2104, %v2104
          %v2223 = vmul.f32 %v2109, %v2109
          %v2224 = vmul.f32 %v2114, %v2114
          %v2225 = vmul.f32 %v2119, %v2119
          %v2226 = vmul.f32 %v2124, %v2124
          %v2227 = vmul.f32 %v2129, %v2129
          %v2228 = vmul.f32 %v2134, %v2134
          %v2229 = vmul.f32 %v2139, %v2139
          %v2230 = vmul.f32 %v2144, %v2144
          %v2231 = vmul.f32 %v2149, %v2149
          %v2232 = vsel %vm815, %v2216, 0.0
          %2233 = vadd.xlane.f32.xlu0 %v2232
          %v2234 = vpop.xlane.xlu0 %2233
          %v2235 = vsel %vm815, %v2217, 0.0
          %2236 = vadd.xlane.f32.xlu0 %v2235
          %v2237 = vpop.xlane.xlu0 %2236
          %v2238 = vsel %vm815, %v2218, 0.0
          %2239 = vadd.xlane.f32.xlu0 %v2238
          %v2240 = vpop.xlane.xlu0 %2239
          %v2241 = vsel %vm815, %v2219, 0.0
          %2242 = vadd.xlane.f32.xlu0 %v2241
          %v2243 = vpop.xlane.xlu0 %2242
          %v2244 = vsel %vm815, %v2220, 0.0
          %2245 = vadd.xlane.f32.xlu0 %v2244
          %v2246 = vpop.xlane.xlu0 %2245
          %v2247 = vsel %vm815, %v2221, 0.0
          %2248 = vadd.xlane.f32.xlu0 %v2247
          %v2249 = vpop.xlane.xlu0 %2248
          %v2250 = vsel %vm815, %v2222, 0.0
          %2251 = vadd.xlane.f32.xlu0 %v2250
          %v2252 = vpop.xlane.xlu0 %2251
          %v2253 = vsel %vm815, %v2223, 0.0
          %2254 = vadd.xlane.f32.xlu0 %v2253
          %v2255 = vpop.xlane.xlu0 %2254
          %v2256 = vsel %vm815, %v2224, 0.0
          %2257 = vadd.xlane.f32.xlu0 %v2256
          %v2258 = vpop.xlane.xlu0 %2257
          %v2259 = vsel %vm815, %v2225, 0.0
          %2260 = vadd.xlane.f32.xlu0 %v2259
          %v2261 = vpop.xlane.xlu0 %2260
          %v2262 = vsel %vm815, %v2226, 0.0
          %2263 = vadd.xlane.f32.xlu0 %v2262
          %v2264 = vpop.xlane.xlu0 %2263
          %v2265 = vsel %vm815, %v2227, 0.0
          %2266 = vadd.xlane.f32.xlu0 %v2265
          %v2267 = vpop.xlane.xlu0 %2266
          %v2268 = vsel %vm815, %v2228, 0.0
          %2269 = vadd.xlane.f32.xlu0 %v2268
          %v2270 = vpop.xlane.xlu0 %2269
          %v2271 = vsel %vm815, %v2229, 0.0
          %2272 = vadd.xlane.f32.xlu0 %v2271
          %v2273 = vpop.xlane.xlu0 %2272
          %v2274 = vsel %vm815, %v2230, 0.0
          %2275 = vadd.xlane.f32.xlu0 %v2274
          %v2276 = vpop.xlane.xlu0 %2275
          %v2277 = vsel %vm815, %v2231, 0.0
          %2278 = vadd.xlane.f32.xlu0 %v2277
          %v2279 = vpop.xlane.xlu0 %2278
          %v2280 = vsel %vm815, %v1409, %v2170
          %v2281 = vsel %vm815, %v1414, %v2173
          %v2282 = vsel %vm815, %v1419, %v2176
          %v2283 = vsel %vm815, %v1424, %v2179
          %v2284 = vsel %vm815, %v1429, %v2182
          %v2285 = vsel %vm815, %v1434, %v2185
          %v2286 = vsel %vm815, %v1439, %v2188
          %v2287 = vsel %vm815, %v1444, %v2191
          %v2288 = vsel %vm815, %v1449, %v2194
          %v2289 = vsel %vm815, %v1454, %v2197
          %v2290 = vsel %vm815, %v1459, %v2200
          %v2291 = vsel %vm815, %v1464, %v2203
          %v2292 = vsel %vm815, %v1469, %v2206
          %v2293 = vsel %vm815, %v1474, %v2209
          %v2294 = vsel %vm815, %v1479, %v2212
          %v2295 = vsel %vm815, %v1484, %v2215
          %vm2296 = vcmask 138240
          %v2297 = vsel %vm2296, %v2280, 1.0
          %v2298 = vsel %vm2296, %v2281, 1.0
          %v2299 = vsel %vm2296, %v2282, 1.0
          %v2300 = vsel %vm2296, %v2283, 1.0
          %v2301 = vsel %vm2296, %v2284, 1.0
          %v2302 = vsel %vm2296, %v2285, 1.0
          %v2303 = vsel %vm2296, %v2286, 1.0
          %v2304 = vsel %vm2296, %v2287, 1.0
          %v2305 = vsel %vm2296, %v2288, 1.0
          %v2306 = vsel %vm2296, %v2289, 1.0
          %v2307 = vsel %vm2296, %v2290, 1.0
          %v2308 = vsel %vm2296, %v2291, 1.0
          %v2309 = vsel %vm2296, %v2292, 1.0
          %v2310 = vsel %vm2296, %v2293, 1.0
          %v2311 = vsel %vm2296, %v2294, 1.0
          %v2312 = vsel %vm2296, %v2295, 1.0
          %vm2313 = vcmask 146432
          %2314 = vst.msk [vmem:[#allocation2] sm:$0xff] %vm2313, %v2297
          %2315 = vst.msk [vmem:[#allocation2 + $0x8] sm:$0xff] %vm2313, %v2298
          %2316 = vst.msk [vmem:[#allocation2 + $0x10] sm:$0xff] %vm2313, %v2299
          %2317 = vst.msk [vmem:[#allocation2 + $0x18] sm:$0xff] %vm2313, %v2300
          %2318 = vst.msk [vmem:[#allocation2 + $0x20] sm:$0xff] %vm2313, %v2301
          %2319 = vst.msk [vmem:[#allocation2 + $0x28] sm:$0xff] %vm2313, %v2302
          %2320 = vst.msk [vmem:[#allocation2 + $0x30] sm:$0xff] %vm2313, %v2303
          %2321 = vst.msk [vmem:[#allocation2 + $0x38] sm:$0xff] %vm2313, %v2304
          %2322 = vst.msk [vmem:[#allocation2 + $0x40] sm:$0xff] %vm2313, %v2305
          %2323 = vst.msk [vmem:[#allocation2 + $0x48] sm:$0xff] %vm2313, %v2306
          %2324 = vst.msk [vmem:[#allocation2 + $0x50] sm:$0xff] %vm2313, %v2307
          %2325 = vst.msk [vmem:[#allocation2 + $0x58] sm:$0xff] %vm2313, %v2308
          %2326 = vst.msk [vmem:[#allocation2 + $0x60] sm:$0xff] %vm2313, %v2309
          %2327 = vst.msk [vmem:[#allocation2 + $0x68] sm:$0xff] %vm2313, %v2310
          %2328 = vst.msk [vmem:[#allocation2 + $0x70] sm:$0xff] %vm2313, %v2311
          %2329 = vst.msk [vmem:[#allocation2 + $0x78] sm:$0xff] %vm2313, %v2312
          %v2330 = vmul.f32 %v2074, 0.001
          %v2331 = vmul.f32 %v2079, 0.001
          %v2332 = vmul.f32 %v2084, 0.001
          %v2333 = vmul.f32 %v2089, 0.001
          %v2334 = vmul.f32 %v2094, 0.001
          %v2335 = vmul.f32 %v2099, 0.001
          %v2336 = vmul.f32 %v2104, 0.001
          %v2337 = vmul.f32 %v2109, 0.001
          %v2338 = vmul.f32 %v2114, 0.001
          %v2339 = vmul.f32 %v2119, 0.001
          %v2340 = vmul.f32 %v2124, 0.001
          %v2341 = vmul.f32 %v2129, 0.001
          %v2342 = vmul.f32 %v2134, 0.001
          %v2343 = vmul.f32 %v2139, 0.001
          %v2344 = vmul.f32 %v2144, 0.001
          %v2345 = vmul.f32 %v2149, 0.001
          %v2346 = vmul.f32 %v2234, -0.0005
          %v2347 = vmul.f32 %v2237, -0.0005
          %v2348 = vmul.f32 %v2240, -0.0005
          %v2349 = vmul.f32 %v2243, -0.0005
          %v2350 = vmul.f32 %v2246, -0.0005
          %v2351 = vmul.f32 %v2249, -0.0005
          %v2352 = vmul.f32 %v2252, -0.0005
          %v2353 = vmul.f32 %v2255, -0.0005
          %v2354 = vmul.f32 %v2258, -0.0005
          %v2355 = vmul.f32 %v2261, -0.0005
          %v2356 = vmul.f32 %v2264, -0.0005
          %v2357 = vmul.f32 %v2267, -0.0005
          %v2358 = vmul.f32 %v2270, -0.0005
          %v2359 = vmul.f32 %v2273, -0.0005
          %v2360 = vmul.f32 %v2276, -0.0005
          %v2361 = vmul.f32 %v2279, -0.0005
          %v2362 = vsel %vm815, %v2330, -0.0005
          %v2363 = vsel %vm815, %v2331, -0.0005
          %v2364 = vsel %vm815, %v2332, -0.0005
          %v2365 = vsel %vm815, %v2333, -0.0005
          %v2366 = vsel %vm815, %v2334, -0.0005
          %v2367 = vsel %vm815, %v2335, -0.0005
          %v2368 = vsel %vm815, %v2336, -0.0005
          %v2369 = vsel %vm815, %v2337, -0.0005
          %v2370 = vsel %vm815, %v2338, -0.0005
          %v2371 = vsel %vm815, %v2339, -0.0005
          %v2372 = vsel %vm815, %v2340, -0.0005
          %v2373 = vsel %vm815, %v2341, -0.0005
          %v2374 = vsel %vm815, %v2342, -0.0005
          %v2375 = vsel %vm815, %v2343, -0.0005
          %v2376 = vsel %vm815, %v2344, -0.0005
          %v2377 = vsel %vm815, %v2345, -0.0005
          %v2378 = vsel %vm2296, %v2362, %v2346
          %v2379 = vsel %vm2296, %v2363, %v2347
          %v2380 = vsel %vm2296, %v2364, %v2348
          %v2381 = vsel %vm2296, %v2365, %v2349
          %v2382 = vsel %vm2296, %v2366, %v2350
          %v2383 = vsel %vm2296, %v2367, %v2351
          %v2384 = vsel %vm2296, %v2368, %v2352
          %v2385 = vsel %vm2296, %v2369, %v2353
          %v2386 = vsel %vm2296, %v2370, %v2354
          %v2387 = vsel %vm2296, %v2371, %v2355
          %v2388 = vsel %vm2296, %v2372, %v2356
          %v2389 = vsel %vm2296, %v2373, %v2357
          %v2390 = vsel %vm2296, %v2374, %v2358
          %v2391 = vsel %vm2296, %v2375, %v2359
          %v2392 = vsel %vm2296, %v2376, %v2360
          %v2393 = vsel %vm2296, %v2377, %v2361
          %2394 = vst.msk [vmem:[#allocation3] sm:$0xff] %vm2313, %v2378
          %2395 = vst.msk [vmem:[#allocation3 + $0x8] sm:$0xff] %vm2313, %v2379
          %2396 = vst.msk [vmem:[#allocation3 + $0x10] sm:$0xff] %vm2313, %v2380
          %2397 = vst.msk [vmem:[#allocation3 + $0x18] sm:$0xff] %vm2313, %v2381
          %2398 = vst.msk [vmem:[#allocation3 + $0x20] sm:$0xff] %vm2313, %v2382
          %2399 = vst.msk [vmem:[#allocation3 + $0x28] sm:$0xff] %vm2313, %v2383
          %2400 = vst.msk [vmem:[#allocation3 + $0x30] sm:$0xff] %vm2313, %v2384
          %2401 = vst.msk [vmem:[#allocation3 + $0x38] sm:$0xff] %vm2313, %v2385
          %2402 = vst.msk [vmem:[#allocation3 + $0x40] sm:$0xff] %vm2313, %v2386
          %2403 = vst.msk [vmem:[#allocation3 + $0x48] sm:$0xff] %vm2313, %v2387
          %2404 = vst.msk [vmem:[#allocation3 + $0x50] sm:$0xff] %vm2313, %v2388
          %2405 = vst.msk [vmem:[#allocation3 + $0x58] sm:$0xff] %vm2313, %v2389
          %2406 = vst.msk [vmem:[#allocation3 + $0x60] sm:$0xff] %vm2313, %v2390
          %2407 = vst.msk [vmem:[#allocation3 + $0x68] sm:$0xff] %vm2313, %v2391
          %2408 = vst.msk [vmem:[#allocation3 + $0x70] sm:$0xff] %vm2313, %v2392
          %2409 = vst.msk [vmem:[#allocation3 + $0x78] sm:$0xff] %vm2313, %v2393
        $region80: #{tpu_custom_call.1} parent=75 // pred_fallthru
          _
        %s2410 = smul.u32 %s38, 128
        %s2411 = scalar_lea.vmem [#allocation2], %s2410
        %v2412 = vld [vmem:[%s2411] sm:$0xff]
        %v2413 = vld [vmem:[%s2411 + $0x8] sm:$0xff]
        %v2414 = vld [vmem:[%s2411 + $0x10] sm:$0xff]
        %v2415 = vld [vmem:[%s2411 + $0x18] sm:$0xff]
        %v2416 = vld [vmem:[%s2411 + $0x20] sm:$0xff]
        %v2417 = vld [vmem:[%s2411 + $0x28] sm:$0xff]
        %v2418 = vld [vmem:[%s2411 + $0x30] sm:$0xff]
        %v2419 = vld [vmem:[%s2411 + $0x38] sm:$0xff]
        %v2420 = vld [vmem:[%s2411 + $0x40] sm:$0xff]
        %v2421 = vld [vmem:[%s2411 + $0x48] sm:$0xff]
        %v2422 = vld [vmem:[%s2411 + $0x50] sm:$0xff]
        %v2423 = vld [vmem:[%s2411 + $0x58] sm:$0xff]
        %v2424 = vld [vmem:[%s2411 + $0x60] sm:$0xff]
        %v2425 = vld [vmem:[%s2411 + $0x68] sm:$0xff]
        %v2426 = vld [vmem:[%s2411 + $0x70] sm:$0xff]
        %v2427 = vld [vmem:[%s2411 + $0x78] sm:$0xff]
        %v2428 = vld [vmem:[#allocation3] sm:$0xff]
        %v2429 = vld [vmem:[#allocation3 + $0x8] sm:$0xff]
        %v2430 = vld [vmem:[#allocation3 + $0x10] sm:$0xff]
        %v2431 = vld [vmem:[#allocation3 + $0x18] sm:$0xff]
        %v2432 = vld [vmem:[#allocation3 + $0x20] sm:$0xff]
        %v2433 = vld [vmem:[#allocation3 + $0x28] sm:$0xff]
        %v2434 = vld [vmem:[#allocation3 + $0x30] sm:$0xff]
        %v2435 = vld [vmem:[#allocation3 + $0x38] sm:$0xff]
        %v2436 = vld [vmem:[#allocation3 + $0x40] sm:$0xff]
        %v2437 = vld [vmem:[#allocation3 + $0x48] sm:$0xff]
        %v2438 = vld [vmem:[#allocation3 + $0x50] sm:$0xff]
        %v2439 = vld [vmem:[#allocation3 + $0x58] sm:$0xff]
        %v2440 = vld [vmem:[#allocation3 + $0x60] sm:$0xff]
        %v2441 = vld [vmem:[#allocation3 + $0x68] sm:$0xff]
        %v2442 = vld [vmem:[#allocation3 + $0x70] sm:$0xff]
        %v2443 = vld [vmem:[#allocation3 + $0x78] sm:$0xff]
        %vm2444 = vcmask 146432
        %v2446 = vsel %vm2444, %v2412, 0
        %v2449 = vsel %vm2444, %v2413, 0
        %v2452 = vsel %vm2444, %v2414, 0
        %v2455 = vsel %vm2444, %v2415, 0
        %v2458 = vsel %vm2444, %v2416, 0
        %v2461 = vsel %vm2444, %v2417, 0
        %v2464 = vsel %vm2444, %v2418, 0
        %v2467 = vsel %vm2444, %v2419, 0
        %v2470 = vsel %vm2444, %v2420, 0
        %v2473 = vsel %vm2444, %v2421, 0
        %v2476 = vsel %vm2444, %v2422, 0
        %v2479 = vsel %vm2444, %v2423, 0
        %v2482 = vsel %vm2444, %v2424, 0
        %v2485 = vsel %vm2444, %v2425, 0
        %v2488 = vsel %vm2444, %v2426, 0
        %v2491 = vsel %vm2444, %v2427, 0
        %v2494 = vsel %vm2444, %v2428, 0
        %v2497 = vsel %vm2444, %v2429, 0
        %v2500 = vsel %vm2444, %v2430, 0
        %v2503 = vsel %vm2444, %v2431, 0
        %v2506 = vsel %vm2444, %v2432, 0
        %v2509 = vsel %vm2444, %v2433, 0
        %v2512 = vsel %vm2444, %v2434, 0
        %v2515 = vsel %vm2444, %v2435, 0
        %v2518 = vsel %vm2444, %v2436, 0
        %v2521 = vsel %vm2444, %v2437, 0
        %v2524 = vsel %vm2444, %v2438, 0
        %v2527 = vsel %vm2444, %v2439, 0
        %v2530 = vsel %vm2444, %v2440, 0
        %v2533 = vsel %vm2444, %v2441, 0
        %v2536 = vsel %vm2444, %v2442, 0
        %v2539 = vsel %vm2444, %v2443, 0
        %2541 = vmatprep.subr.mxu0 0.0
        %2542 = vmatpush1.xpose.msra.mxu0 %v2494
        %2543 = vmatprep.subr.mxu0 0.0
        %2544 = vmatpush1.xpose.msra.mxu0 %v2497
        %2545 = vmatprep.subr.mxu0 0.0
        %2546 = vmatpush1.xpose.msra.mxu0 %v2500
        %2547 = vmatprep.subr.mxu0 0.0
        %2548 = vmatpush1.xpose.msra.mxu0 %v2503
        %2549 = vmatprep.subr.mxu0 0.0
        %2550 = vmatpush1.xpose.msra.mxu0 %v2506
        %2551 = vmatprep.subr.mxu0 0.0
        %2552 = vmatpush1.xpose.msra.mxu0 %v2509
        %2553 = vmatprep.subr.mxu0 0.0
        %2554 = vmatpush1.xpose.msra.mxu0 %v2512
        %2555 = vmatprep.subr.mxu0 0.0
        %2556 = vmatpush1.xpose.msra.mxu0 %v2515
        %2557 = vmatprep.subr.mxu0 0.0
        %2558 = vmatpush1.xpose.msra.mxu0 %v2518
        %2559 = vmatprep.subr.mxu0 0.0
        %2560 = vmatpush1.xpose.msra.mxu0 %v2521
        %2561 = vmatprep.subr.mxu0 0.0
        %2562 = vmatpush1.xpose.msra.mxu0 %v2524
        %2563 = vmatprep.subr.mxu0 0.0
        %2564 = vmatpush1.xpose.msra.mxu0 %v2527
        %2565 = vmatprep.subr.mxu0 0.0
        %2566 = vmatpush1.xpose.msra.mxu0 %v2530
        %2567 = vmatprep.subr.mxu0 0.0
        %2568 = vmatpush1.xpose.msra.mxu0 %v2533
        %2569 = vmatprep.subr.mxu0 0.0
        %2570 = vmatpush1.xpose.msra.mxu0 %v2536
        %2571 = vmatprep.subr.mxu0 0.0
        %2572 = vmatpush1.xpose.msra.mxu0 %v2539
        %2573 = vmatprep.subr.mxu0 0.0
        %2574 = vmatpush1.xpose.msra.mxu0 0.0
        %2575 = vmatprep.subr.mxu0 0.0
        %2576 = vmatpush1.xpose.msra.mxu0 0.0
        %2577 = vmatprep.subr.mxu0 0.0
        %2578 = vmatpush1.xpose.msra.mxu0 0.0
        %2579 = vmatprep.subr.mxu0 0.0
        %2580 = vmatpush1.xpose.msra.mxu0 0.0
        %2581 = vmatprep.subr.mxu0 0.0
        %2582 = vmatpush1.xpose.msra.mxu0 0.0
        %2583 = vmatprep.subr.mxu0 0.0
        %2584 = vmatpush1.xpose.msra.mxu0 0.0
        %2585 = vmatprep.subr.mxu0 0.0
        %2586 = vmatpush1.xpose.msra.mxu0 0.0
        %2587 = vmatprep.subr.mxu0 0.0
        %2588 = vmatpush1.xpose.msra.mxu0 0.0
        %2589 = vmatprep.subr.mxu0 0.0
        %2590 = vmatpush1.xpose.msra.mxu0 0.0
        %2591 = vmatprep.subr.mxu0 0.0
        %2592 = vmatpush1.xpose.msra.mxu0 0.0
        %2593 = vmatprep.subr.mxu0 0.0
        %2594 = vmatpush1.xpose.msra.mxu0 0.0
        %2595 = vmatprep.subr.mxu0 0.0
        %2596 = vmatpush1.xpose.msra.mxu0 0.0
        %2597 = vmatprep.subr.mxu0 0.0
        %2598 = vmatpush1.xpose.msra.mxu0 0.0
        %2599 = vmatprep.subr.mxu0 0.0
        %2600 = vmatpush1.xpose.msra.mxu0 0.0
        %2601 = vmatprep.subr.mxu0 0.0
        %2602 = vmatpush1.xpose.msra.mxu0 0.0
        %2603 = vmatprep.subr.mxu0 0.0
        %2604 = vmatpush1.xpose.msra.mxu0 0.0
        %2605 = vmatprep.mubr.f32.mxu0 0.0
        %2606 = vmatmul.mubr.f32.gmra.mrb[0].mxu0 %v2446
        %v2607 = vpop.f32.mrb[0].mxu0
        %v2608 = vadd.f32 0.0, %v2607
        %v2609 = vpop.f32.mrb[0].mxu0
        %2610 = vmatprep.mubr.f32.mxu0 0.0
        %2611 = vmatmul.mubr.f32.gmra.mrb[0].mxu0 %v2449
        %v2612 = vpop.f32.mrb[0].mxu0
        %v2613 = vadd.f32 0.0, %v2612
        %v2614 = vpop.f32.mrb[0].mxu0
        %2615 = vmatprep.mubr.f32.mxu0 0.0
        %2616 = vmatmul.mubr.f32.gmra.mrb[0].mxu0 %v2452
        %v2617 = vpop.f32.mrb[0].mxu0
        %v2618 = vadd.f32 0.0, %v2617
        %v2619 = vpop.f32.mrb[0].mxu0
        %2620 = vmatprep.mubr.f32.mxu0 0.0
        %2621 = vmatmul.mubr.f32.gmra.mrb[0].mxu0 %v2455
        %v2622 = vpop.f32.mrb[0].mxu0
        %v2623 = vadd.f32 0.0, %v2622
        %v2624 = vpop.f32.mrb[0].mxu0
        %2625 = vmatprep.mubr.f32.mxu0 0.0
        %2626 = vmatmul.mubr.f32.gmra.mrb[0].mxu0 %v2458
        %v2627 = vpop.f32.mrb[0].mxu0
        %v2628 = vadd.f32 0.0, %v2627
        %v2629 = vpop.f32.mrb[0].mxu0
        %2630 = vmatprep.mubr.f32.mxu0 0.0
        %2631 = vmatmul.mubr.f32.gmra.mrb[0].mxu0 %v2461
        %v2632 = vpop.f32.mrb[0].mxu0
        %v2633 = vadd.f32 0.0, %v2632
        %v2634 = vpop.f32.mrb[0].mxu0
        %2635 = vmatprep.mubr.f32.mxu0 0.0
        %2636 = vmatmul.mubr.f32.gmra.mrb[0].mxu0 %v2464
        %v2637 = vpop.f32.mrb[0].mxu0
        %v2638 = vadd.f32 0.0, %v2637
        %v2639 = vpop.f32.mrb[0].mxu0
        %2640 = vmatprep.mubr.f32.mxu0 0.0
        %2641 = vmatmul.mubr.f32.gmra.mrb[0].mxu0 %v2467
        %v2642 = vpop.f32.mrb[0].mxu0
        %v2643 = vadd.f32 0.0, %v2642
        %v2644 = vpop.f32.mrb[0].mxu0
        %2645 = vmatprep.mubr.f32.mxu0 0.0
        %2646 = vmatmul.mubr.f32.gmra.mrb[0].mxu0 %v2470
        %v2647 = vpop.f32.mrb[0].mxu0
        %v2648 = vadd.f32 0.0, %v2647
        %v2649 = vpop.f32.mrb[0].mxu0
        %2650 = vmatprep.mubr.f32.mxu0 0.0
        %2651 = vmatmul.mubr.f32.gmra.mrb[0].mxu0 %v2473
        %v2652 = vpop.f32.mrb[0].mxu0
        %v2653 = vadd.f32 0.0, %v2652
        %v2654 = vpop.f32.mrb[0].mxu0
        %2655 = vmatprep.mubr.f32.mxu0 0.0
        %2656 = vmatmul.mubr.f32.gmra.mrb[0].mxu0 %v2476
        %v2657 = vpop.f32.mrb[0].mxu0
        %v2658 = vadd.f32 0.0, %v2657
        %v2659 = vpop.f32.mrb[0].mxu0
        %2660 = vmatprep.mubr.f32.mxu0 0.0
        %2661 = vmatmul.mubr.f32.gmra.mrb[0].mxu0 %v2479
        %v2662 = vpop.f32.mrb[0].mxu0
        %v2663 = vadd.f32 0.0, %v2662
        %v2664 = vpop.f32.mrb[0].mxu0
        %2665 = vmatprep.mubr.f32.mxu0 0.0
        %2666 = vmatmul.mubr.f32.gmra.mrb[0].mxu0 %v2482
        %v2667 = vpop.f32.mrb[0].mxu0
        %v2668 = vadd.f32 0.0, %v2667
        %v2669 = vpop.f32.mrb[0].mxu0
        %2670 = vmatprep.mubr.f32.mxu0 0.0
        %2671 = vmatmul.mubr.f32.gmra.mrb[0].mxu0 %v2485
        %v2672 = vpop.f32.mrb[0].mxu0
        %v2673 = vadd.f32 0.0, %v2672
        %v2674 = vpop.f32.mrb[0].mxu0
        %2675 = vmatprep.mubr.f32.mxu0 0.0
        %2676 = vmatmul.mubr.f32.gmra.mrb[0].mxu0 %v2488
        %v2677 = vpop.f32.mrb[0].mxu0
        %v2678 = vadd.f32 0.0, %v2677
        %v2679 = vpop.f32.mrb[0].mxu0
        %2680 = vmatprep.mubr.f32.mxu0 0.0
        %2681 = vmatmul.mubr.f32.gmra.mrb[0].mxu0 %v2491
        %v2682 = vpop.f32.mrb[0].mxu0
        %v2683 = vadd.f32 0.0, %v2682
        %v2684 = vpop.f32.mrb[0].mxu0
        %2685 = vdwg.mxu0
        %v2686 = vld [vmem:[%s585] sm:$0xff]
        %v2687 = vld [vmem:[%s585 + $0x8] sm:$0xff]
        %v2688 = vld [vmem:[%s585 + $0x10] sm:$0xff]
        %v2689 = vld [vmem:[%s585 + $0x18] sm:$0xff]
        %v2690 = vld [vmem:[%s585 + $0x20] sm:$0xff]
        %v2691 = vld [vmem:[%s585 + $0x28] sm:$0xff]
        %v2692 = vld [vmem:[%s585 + $0x30] sm:$0xff]
        %v2693 = vld [vmem:[%s585 + $0x38] sm:$0xff]
        %v2694 = vld [vmem:[%s585 + $0x40] sm:$0xff]
        %v2695 = vld [vmem:[%s585 + $0x48] sm:$0xff]
        %v2696 = vld [vmem:[%s585 + $0x50] sm:$0xff]
        %v2697 = vld [vmem:[%s585 + $0x58] sm:$0xff]
        %v2698 = vld [vmem:[%s585 + $0x60] sm:$0xff]
        %v2699 = vld [vmem:[%s585 + $0x68] sm:$0xff]
        %v2700 = vld [vmem:[%s585 + $0x70] sm:$0xff]
        %v2701 = vld [vmem:[%s585 + $0x78] sm:$0xff]
        %v2702 = vadd.f32 %v2686, 1e-08
        %v2703 = vadd.f32 %v2687, 1e-08
        %v2704 = vadd.f32 %v2688, 1e-08
        %v2705 = vadd.f32 %v2689, 1e-08
        %v2706 = vadd.f32 %v2690, 1e-08
        %v2707 = vadd.f32 %v2691, 1e-08
        %v2708 = vadd.f32 %v2692, 1e-08
        %v2709 = vadd.f32 %v2693, 1e-08
        %v2710 = vadd.f32 %v2694, 1e-08
        %v2711 = vadd.f32 %v2695, 1e-08
        %v2712 = vadd.f32 %v2696, 1e-08
        %v2713 = vadd.f32 %v2697, 1e-08
        %v2714 = vadd.f32 %v2698, 1e-08
        %v2715 = vadd.f32 %v2699, 1e-08
        %v2716 = vadd.f32 %v2700, 1e-08
        %v2717 = vadd.f32 %v2701, 1e-08
        %v2718 = vld [vmem:[%s589] sm:$0x1]
        %2719 = vmax.xlane.f32.xlu0 %v2608
        %v2720 = vpop.xlane.xlu0 %2719
        %2721 = vmax.xlane.f32.xlu0 %v2613
        %v2722 = vpop.xlane.xlu0 %2721
        %2723 = vmax.xlane.f32.xlu0 %v2618
        %v2724 = vpop.xlane.xlu0 %2723
        %2725 = vmax.xlane.f32.xlu0 %v2623
        %v2726 = vpop.xlane.xlu0 %2725
        %2727 = vmax.xlane.f32.xlu0 %v2628
        %v2728 = vpop.xlane.xlu0 %2727
        %2729 = vmax.xlane.f32.xlu0 %v2633
        %v2730 = vpop.xlane.xlu0 %2729
        %2731 = vmax.xlane.f32.xlu0 %v2638
        %v2732 = vpop.xlane.xlu0 %2731
        %2733 = vmax.xlane.f32.xlu0 %v2643
        %v2734 = vpop.xlane.xlu0 %2733
        %2735 = vmax.xlane.f32.xlu0 %v2648
        %v2736 = vpop.xlane.xlu0 %2735
        %2737 = vmax.xlane.f32.xlu0 %v2653
        %v2738 = vpop.xlane.xlu0 %2737
        %2739 = vmax.xlane.f32.xlu0 %v2658
        %v2740 = vpop.xlane.xlu0 %2739
        %2741 = vmax.xlane.f32.xlu0 %v2663
        %v2742 = vpop.xlane.xlu0 %2741
        %2743 = vmax.xlane.f32.xlu0 %v2668
        %v2744 = vpop.xlane.xlu0 %2743
        %2745 = vmax.xlane.f32.xlu0 %v2673
        %v2746 = vpop.xlane.xlu0 %2745
        %2747 = vmax.xlane.f32.xlu0 %v2678
        %v2748 = vpop.xlane.xlu0 %2747
        %2749 = vmax.xlane.f32.xlu0 %v2683
        %v2750 = vpop.xlane.xlu0 %2749
        %v2751 = vsub.f32 %v2608, %v2720
        %v2752 = vsub.f32 %v2613, %v2722
        %v2753 = vsub.f32 %v2618, %v2724
        %v2754 = vsub.f32 %v2623, %v2726
        %v2755 = vsub.f32 %v2628, %v2728
        %v2756 = vsub.f32 %v2633, %v2730
        %v2757 = vsub.f32 %v2638, %v2732
        %v2758 = vsub.f32 %v2643, %v2734
        %v2759 = vsub.f32 %v2648, %v2736
        %v2760 = vsub.f32 %v2653, %v2738
        %v2761 = vsub.f32 %v2658, %v2740
        %v2762 = vsub.f32 %v2663, %v2742
        %v2763 = vsub.f32 %v2668, %v2744
        %v2764 = vsub.f32 %v2673, %v2746
        %v2765 = vsub.f32 %v2678, %v2748
        %v2766 = vsub.f32 %v2683, %v2750
        %v2767 = vmul.f32 %v2751, 1.442695
        %v2768 = vpow.pop %v2767
        %v2769 = vmul.f32 %v2752, 1.442695
        %v2770 = vpow.pop %v2769
        %v2771 = vmul.f32 %v2753, 1.442695
        %v2772 = vpow.pop %v2771
        %v2773 = vmul.f32 %v2754, 1.442695
        %v2774 = vpow.pop %v2773
        %v2775 = vmul.f32 %v2755, 1.442695
        %v2776 = vpow.pop %v2775
        %v2777 = vmul.f32 %v2756, 1.442695
        %v2778 = vpow.pop %v2777
        %v2779 = vmul.f32 %v2757, 1.442695
        %v2780 = vpow.pop %v2779
        %v2781 = vmul.f32 %v2758, 1.442695
        %v2782 = vpow.pop %v2781
        %v2783 = vmul.f32 %v2759, 1.442695
        %v2784 = vpow.pop %v2783
        %v2785 = vmul.f32 %v2760, 1.442695
        %v2786 = vpow.pop %v2785
        %v2787 = vmul.f32 %v2761, 1.442695
        %v2788 = vpow.pop %v2787
        %v2789 = vmul.f32 %v2762, 1.442695
        %v2790 = vpow.pop %v2789
        %v2791 = vmul.f32 %v2763, 1.442695
        %v2792 = vpow.pop %v2791
        %v2793 = vmul.f32 %v2764, 1.442695
        %v2794 = vpow.pop %v2793
        %v2795 = vmul.f32 %v2765, 1.442695
        %v2796 = vpow.pop %v2795
        %v2797 = vmul.f32 %v2766, 1.442695
        %v2798 = vpow.pop %v2797
        %2799 = vadd.xlane.f32.xlu0 %v2768
        %v2800 = vpop.xlane.xlu0 %2799
        %2801 = vadd.xlane.f32.xlu0 %v2770
        %v2802 = vpop.xlane.xlu0 %2801
        %2803 = vadd.xlane.f32.xlu0 %v2772
        %v2804 = vpop.xlane.xlu0 %2803
        %2805 = vadd.xlane.f32.xlu0 %v2774
        %v2806 = vpop.xlane.xlu0 %2805
        %2807 = vadd.xlane.f32.xlu0 %v2776
        %v2808 = vpop.xlane.xlu0 %2807
        %2809 = vadd.xlane.f32.xlu0 %v2778
        %v2810 = vpop.xlane.xlu0 %2809
        %2811 = vadd.xlane.f32.xlu0 %v2780
        %v2812 = vpop.xlane.xlu0 %2811
        %2813 = vadd.xlane.f32.xlu0 %v2782
        %v2814 = vpop.xlane.xlu0 %2813
        %2815 = vadd.xlane.f32.xlu0 %v2784
        %v2816 = vpop.xlane.xlu0 %2815
        %2817 = vadd.xlane.f32.xlu0 %v2786
        %v2818 = vpop.xlane.xlu0 %2817
        %2819 = vadd.xlane.f32.xlu0 %v2788
        %v2820 = vpop.xlane.xlu0 %2819
        %2821 = vadd.xlane.f32.xlu0 %v2790
        %v2822 = vpop.xlane.xlu0 %2821
        %2823 = vadd.xlane.f32.xlu0 %v2792
        %v2824 = vpop.xlane.xlu0 %2823
        %2825 = vadd.xlane.f32.xlu0 %v2794
        %v2826 = vpop.xlane.xlu0 %2825
        %2827 = vadd.xlane.f32.xlu0 %v2796
        %v2828 = vpop.xlane.xlu0 %2827
        %2829 = vadd.xlane.f32.xlu0 %v2798
        %v2830 = vpop.xlane.xlu0 %2829
        %v2831 = vlog2.pop %v2800
        %v2832 = vmul.f32 %v2831, 0.6931472
        %v2833 = vlog2.pop %v2802
        %v2834 = vmul.f32 %v2833, 0.6931472
        %v2835 = vlog2.pop %v2804
        %v2836 = vmul.f32 %v2835, 0.6931472
        %v2837 = vlog2.pop %v2806
        %v2838 = vmul.f32 %v2837, 0.6931472
        %v2839 = vlog2.pop %v2808
        %v2840 = vmul.f32 %v2839, 0.6931472
        %v2841 = vlog2.pop %v2810
        %v2842 = vmul.f32 %v2841, 0.6931472
        %v2843 = vlog2.pop %v2812
        %v2844 = vmul.f32 %v2843, 0.6931472
        %v2845 = vlog2.pop %v2814
        %v2846 = vmul.f32 %v2845, 0.6931472
        %v2847 = vlog2.pop %v2816
        %v2848 = vmul.f32 %v2847, 0.6931472
        %v2849 = vlog2.pop %v2818
        %v2850 = vmul.f32 %v2849, 0.6931472
        %v2851 = vlog2.pop %v2820
        %v2852 = vmul.f32 %v2851, 0.6931472
        %v2853 = vlog2.pop %v2822
        %v2854 = vmul.f32 %v2853, 0.6931472
        %v2855 = vlog2.pop %v2824
        %v2856 = vmul.f32 %v2855, 0.6931472
        %v2857 = vlog2.pop %v2826
        %v2858 = vmul.f32 %v2857, 0.6931472
        %v2859 = vlog2.pop %v2828
        %v2860 = vmul.f32 %v2859, 0.6931472
        %v2861 = vlog2.pop %v2830
        %v2862 = vmul.f32 %v2861, 0.6931472
        %v2863 = vsub.f32 %v2751, %v2832
        %v2864 = vsub.f32 %v2752, %v2834
        %v2865 = vsub.f32 %v2753, %v2836
        %v2866 = vsub.f32 %v2754, %v2838
        %v2867 = vsub.f32 %v2755, %v2840
        %v2868 = vsub.f32 %v2756, %v2842
        %v2869 = vsub.f32 %v2757, %v2844
        %v2870 = vsub.f32 %v2758, %v2846
        %v2871 = vsub.f32 %v2759, %v2848
        %v2872 = vsub.f32 %v2760, %v2850
        %v2873 = vsub.f32 %v2761, %v2852
        %v2874 = vsub.f32 %v2762, %v2854
        %v2875 = vsub.f32 %v2763, %v2856
        %v2876 = vsub.f32 %v2764, %v2858
        %v2877 = vsub.f32 %v2765, %v2860
        %v2878 = vsub.f32 %v2766, %v2862
        %v2879 = vlog2.pop %v2702
        %v2880 = vmul.f32 %v2879, 0.6931472
        %v2881 = vlog2.pop %v2703
        %v2882 = vmul.f32 %v2881, 0.6931472
        %v2883 = vlog2.pop %v2704
        %v2884 = vmul.f32 %v2883, 0.6931472
        %v2885 = vlog2.pop %v2705
        %v2886 = vmul.f32 %v2885, 0.6931472
        %v2887 = vlog2.pop %v2706
        %v2888 = vmul.f32 %v2887, 0.6931472
        %v2889 = vlog2.pop %v2707
        %v2890 = vmul.f32 %v2889, 0.6931472
        %v2891 = vlog2.pop %v2708
        %v2892 = vmul.f32 %v2891, 0.6931472
        %v2893 = vlog2.pop %v2709
        %v2894 = vmul.f32 %v2893, 0.6931472
        %v2895 = vlog2.pop %v2710
        %v2896 = vmul.f32 %v2895, 0.6931472
        %v2897 = vlog2.pop %v2711
        %v2898 = vmul.f32 %v2897, 0.6931472
        %v2899 = vlog2.pop %v2712
        %v2900 = vmul.f32 %v2899, 0.6931472
        %v2901 = vlog2.pop %v2713
        %v2902 = vmul.f32 %v2901, 0.6931472
        %v2903 = vlog2.pop %v2714
        %v2904 = vmul.f32 %v2903, 0.6931472
        %v2905 = vlog2.pop %v2715
        %v2906 = vmul.f32 %v2905, 0.6931472
        %v2907 = vlog2.pop %v2716
        %v2908 = vmul.f32 %v2907, 0.6931472
        %v2909 = vlog2.pop %v2717
        %v2910 = vmul.f32 %v2909, 0.6931472
        %v2911 = vadd.f32 %v2863, %v2880
        %v2912 = vadd.f32 %v2864, %v2882
        %v2913 = vadd.f32 %v2865, %v2884
        %v2914 = vadd.f32 %v2866, %v2886
        %v2915 = vadd.f32 %v2867, %v2888
        %v2916 = vadd.f32 %v2868, %v2890
        %v2917 = vadd.f32 %v2869, %v2892
        %v2918 = vadd.f32 %v2870, %v2894
        %v2919 = vadd.f32 %v2871, %v2896
        %v2920 = vadd.f32 %v2872, %v2898
        %v2921 = vadd.f32 %v2873, %v2900
        %v2922 = vadd.f32 %v2874, %v2902
        %v2923 = vadd.f32 %v2875, %v2904
        %v2924 = vadd.f32 %v2876, %v2906
        %v2925 = vadd.f32 %v2877, %v2908
        %v2926 = vadd.f32 %v2878, %v2910
        %2927 = vst [vmem:[%s566] sm:$0xff] %v2911
        %2928 = vst [vmem:[%s566 + $0x8] sm:$0xff] %v2912
        %2929 = vst [vmem:[%s566 + $0x10] sm:$0xff] %v2913
        %2930 = vst [vmem:[%s566 + $0x18] sm:$0xff] %v2914
        %2931 = vst [vmem:[%s566 + $0x20] sm:$0xff] %v2915
        %2932 = vst [vmem:[%s566 + $0x28] sm:$0xff] %v2916
        %2933 = vst [vmem:[%s566 + $0x30] sm:$0xff] %v2917
        %2934 = vst [vmem:[%s566 + $0x38] sm:$0xff] %v2918
        %2935 = vst [vmem:[%s566 + $0x40] sm:$0xff] %v2919
        %2936 = vst [vmem:[%s566 + $0x48] sm:$0xff] %v2920
        %2937 = vst [vmem:[%s566 + $0x50] sm:$0xff] %v2921
        %2938 = vst [vmem:[%s566 + $0x58] sm:$0xff] %v2922
        %2939 = vst [vmem:[%s566 + $0x60] sm:$0xff] %v2923
        %2940 = vst [vmem:[%s566 + $0x68] sm:$0xff] %v2924
        %2941 = vst [vmem:[%s566 + $0x70] sm:$0xff] %v2925
        %2942 = vst [vmem:[%s566 + $0x78] sm:$0xff] %v2926
        %v2943 = vmul.f32 %v2768, %v2702
        %v2944 = vmul.f32 %v2770, %v2703
        %v2945 = vmul.f32 %v2772, %v2704
        %v2946 = vmul.f32 %v2774, %v2705
        %v2947 = vmul.f32 %v2776, %v2706
        %v2948 = vmul.f32 %v2778, %v2707
        %v2949 = vmul.f32 %v2780, %v2708
        %v2950 = vmul.f32 %v2782, %v2709
        %v2951 = vmul.f32 %v2784, %v2710
        %v2952 = vmul.f32 %v2786, %v2711
        %v2953 = vmul.f32 %v2788, %v2712
        %v2954 = vmul.f32 %v2790, %v2713
        %v2955 = vmul.f32 %v2792, %v2714
        %v2956 = vmul.f32 %v2794, %v2715
        %v2957 = vmul.f32 %v2796, %v2716
        %v2958 = vmul.f32 %v2798, %v2717
        %v2960 = vlaneseq
        %v2961 = vshrl.u32 %v2960, 7
        %v2962 = vsub.s32 0, %v2961
        %v2963 = vrot.slane %v2718, %v2962
        %v2965 = vmul.f32 %v2943, %v2963
        %v2966 = vmul.f32 %v2944, %v2963
        %v2967 = vmul.f32 %v2945, %v2963
        %v2968 = vmul.f32 %v2946, %v2963
        %v2969 = vmul.f32 %v2947, %v2963
        %v2970 = vmul.f32 %v2948, %v2963
        %v2971 = vmul.f32 %v2949, %v2963
        %v2972 = vmul.f32 %v2950, %v2963
        %v2973 = vmul.f32 %v2951, %v2963
        %v2974 = vmul.f32 %v2952, %v2963
        %v2975 = vmul.f32 %v2953, %v2963
        %v2976 = vmul.f32 %v2954, %v2963
        %v2977 = vmul.f32 %v2955, %v2963
        %v2978 = vmul.f32 %v2956, %v2963
        %v2979 = vmul.f32 %v2957, %v2963
        %v2980 = vmul.f32 %v2958, %v2963
        %2981 = vadd.xlane.f32.xlu0 %v2965
        %v2982 = vpop.xlane.xlu0 %2981
        %2983 = vadd.xlane.f32.xlu0 %v2966
        %v2984 = vpop.xlane.xlu0 %2983
        %2985 = vadd.xlane.f32.xlu0 %v2967
        %v2986 = vpop.xlane.xlu0 %2985
        %2987 = vadd.xlane.f32.xlu0 %v2968
        %v2988 = vpop.xlane.xlu0 %2987
        %2989 = vadd.xlane.f32.xlu0 %v2969
        %v2990 = vpop.xlane.xlu0 %2989
        %2991 = vadd.xlane.f32.xlu0 %v2970
        %v2992 = vpop.xlane.xlu0 %2991
        %2993 = vadd.xlane.f32.xlu0 %v2971
        %v2994 = vpop.xlane.xlu0 %2993
        %2995 = vadd.xlane.f32.xlu0 %v2972
        %v2996 = vpop.xlane.xlu0 %2995
        %2997 = vadd.xlane.f32.xlu0 %v2973
        %v2998 = vpop.xlane.xlu0 %2997
        %2999 = vadd.xlane.f32.xlu0 %v2974
        %v3000 = vpop.xlane.xlu0 %2999
        %3001 = vadd.xlane.f32.xlu0 %v2975
        %v3002 = vpop.xlane.xlu0 %3001
        %3003 = vadd.xlane.f32.xlu0 %v2976
        %v3004 = vpop.xlane.xlu0 %3003
        %3005 = vadd.xlane.f32.xlu0 %v2977
        %v3006 = vpop.xlane.xlu0 %3005
        %3007 = vadd.xlane.f32.xlu0 %v2978
        %v3008 = vpop.xlane.xlu0 %3007
        %3009 = vadd.xlane.f32.xlu0 %v2979
        %v3010 = vpop.xlane.xlu0 %3009
        %3011 = vadd.xlane.f32.xlu0 %v2980
        %v3012 = vpop.xlane.xlu0 %3011
        %v3013 = vrcp.pop %v2982
        %v3014 = vmul.f32 1.0, %v3013
        %v3015 = vrcp.pop %v2984
        %v3016 = vmul.f32 1.0, %v3015
        %v3017 = vrcp.pop %v2986
        %v3018 = vmul.f32 1.0, %v3017
        %v3019 = vrcp.pop %v2988
        %v3020 = vmul.f32 1.0, %v3019
        %v3021 = vrcp.pop %v2990
        %v3022 = vmul.f32 1.0, %v3021
        %v3023 = vrcp.pop %v2992
        %v3024 = vmul.f32 1.0, %v3023
        %v3025 = vrcp.pop %v2994
        %v3026 = vmul.f32 1.0, %v3025
        %v3027 = vrcp.pop %v2996
        %v3028 = vmul.f32 1.0, %v3027
        %v3029 = vrcp.pop %v2998
        %v3030 = vmul.f32 1.0, %v3029
        %v3031 = vrcp.pop %v3000
        %v3032 = vmul.f32 1.0, %v3031
        %v3033 = vrcp.pop %v3002
        %v3034 = vmul.f32 1.0, %v3033
        %v3035 = vrcp.pop %v3004
        %v3036 = vmul.f32 1.0, %v3035
        %v3037 = vrcp.pop %v3006
        %v3038 = vmul.f32 1.0, %v3037
        %v3039 = vrcp.pop %v3008
        %v3040 = vmul.f32 1.0, %v3039
        %v3041 = vrcp.pop %v3010
        %v3042 = vmul.f32 1.0, %v3041
        %v3043 = vrcp.pop %v3012
        %v3044 = vmul.f32 1.0, %v3043
        %v3045 = vmul.f32 %v2965, %v3014
        %v3046 = vmul.f32 %v2966, %v3016
        %v3047 = vmul.f32 %v2967, %v3018
        %v3048 = vmul.f32 %v2968, %v3020
        %v3049 = vmul.f32 %v2969, %v3022
        %v3050 = vmul.f32 %v2970, %v3024
        %v3051 = vmul.f32 %v2971, %v3026
        %v3052 = vmul.f32 %v2972, %v3028
        %v3053 = vmul.f32 %v2973, %v3030
        %v3054 = vmul.f32 %v2974, %v3032
        %v3055 = vmul.f32 %v2975, %v3034
        %v3056 = vmul.f32 %v2976, %v3036
        %v3057 = vmul.f32 %v2977, %v3038
        %v3058 = vmul.f32 %v2978, %v3040
        %v3059 = vmul.f32 %v2979, %v3042
        %v3060 = vmul.f32 %v2980, %v3044
        %3061 = vst [vmem:[%s559] sm:$0xff] %v3045
        %3062 = vst [vmem:[%s559 + $0x8] sm:$0xff] %v3046
        %3063 = vst [vmem:[%s559 + $0x10] sm:$0xff] %v3047
        %3064 = vst [vmem:[%s559 + $0x18] sm:$0xff] %v3048
        %3065 = vst [vmem:[%s559 + $0x20] sm:$0xff] %v3049
        %3066 = vst [vmem:[%s559 + $0x28] sm:$0xff] %v3050
        %3067 = vst [vmem:[%s559 + $0x30] sm:$0xff] %v3051
        %3068 = vst [vmem:[%s559 + $0x38] sm:$0xff] %v3052
        %3069 = vst [vmem:[%s559 + $0x40] sm:$0xff] %v3053
        %3070 = vst [vmem:[%s559 + $0x48] sm:$0xff] %v3054
        %3071 = vst [vmem:[%s559 + $0x50] sm:$0xff] %v3055
        %3072 = vst [vmem:[%s559 + $0x58] sm:$0xff] %v3056
        %3073 = vst [vmem:[%s559 + $0x60] sm:$0xff] %v3057
        %3074 = vst [vmem:[%s559 + $0x68] sm:$0xff] %v3058
        %3075 = vst [vmem:[%s559 + $0x70] sm:$0xff] %v3059
        %3076 = vst [vmem:[%s559 + $0x78] sm:$0xff] %v3060
        %s3077 = sand.u32 %s371, 1
        %s3078 = scalar_lea.sflag [#allocation5], %s3077
        %s3079 = sand.u32 %s371, 1
        %s3080 = smul.addr %s3079, 128
        %s3081 = scalar_lea.vmem [#allocation4], %s3080
        %s3082 = sand.u32 %s399, 1
        %s3083 = scalar_lea.sflag [#allocation7], %s3082
        %s3084 = sand.u32 %s399, 1
        %s3085 = smul.addr %s3084, 128
        %s3086 = scalar_lea.vmem [#allocation6], %s3085
        // Predicated region
        $region81: #{tpu_custom_call.1} parent=75 // pred_check
          %p3087 = pneg %p381
        $region82: #{tpu_custom_call.1} parent=75 // pred_check_branch
          %3089 = sbr.rel (%p3087) target = $region84
        $region83: #{tpu_custom_call.1} parent=75 // pred_region
          %s3090 = smul.u32 16, %s38
          %s3092 = ssub.s32 2048, 2048
          %3093 = vsyncadd %s3078, %s3092
          %s3094 = smul.addr %s37, 16
          %s3095 = sadd.s32 %s3090, %s3094
          %s3096 = smul.addr %s3095, 128
          %s3097 = scalar_lea.hbm %s14, %s3096
          %s3098 = sshll.u32 %s3081, 4
          %s3099 = int_to_ptr.vmem [resolvable:$true] %s3098
          %3104 = dma.vmem_to_hbm [thread:$0]  %s3099, 2048, %s3097, %s3078, 128, 128, 8
        $region84: #{tpu_custom_call.1} parent=75 // pred_fallthru
          _
        // Predicated region
        $region85: #{tpu_custom_call.1} parent=75 // pred_check
          %p3105 = pneg %p409
        $region86: #{tpu_custom_call.1} parent=75 // pred_check_branch
          %3107 = sbr.rel (%p3105) target = $region88
        $region87: #{tpu_custom_call.1} parent=75 // pred_region
          %s3108 = smul.u32 16, %s38
          %s3110 = ssub.s32 2048, 2048
          %3111 = vsyncadd %s3083, %s3110
          %s3112 = smul.addr %s37, 16
          %s3113 = sadd.s32 %s3108, %s3112
          %s3114 = smul.addr %s3113, 128
          %s3115 = scalar_lea.hbm %s15, %s3114
          %s3116 = sshll.u32 %s3086, 4
          %s3117 = int_to_ptr.vmem [resolvable:$true] %s3116
          %3122 = dma.vmem_to_hbm [thread:$0]  %s3117, 2048, %s3115, %s3083, 128, 128, 8
        $region88: #{tpu_custom_call.1} parent=75 // pred_fallthru
          _
      $region76: #{tpu_custom_call.1} parent=5 // pred_fallthru
        _
      %p3123 = scmp.le.s32.totalorder 2, %s28
      // Predicated region
      $region89: #{tpu_custom_call.1} parent=5 // pred_check
        %p3124 = pneg %p3123
      $region90: #{tpu_custom_call.1} parent=5 // pred_check_branch
        %3126 = sbr.rel (%p3124) target = $region92
      $region91: #{tpu_custom_call.1} parent=5 // pred_region
        %s3127 = ssub.s32 %s28, 2
        // Predicated region
        $region93: #{tpu_custom_call.1} parent=91 // pred_check
          %p3128 = pneg %p387
        $region94: #{tpu_custom_call.1} parent=91 // pred_check_branch
          %3130 = sbr.rel (%p3128) target = $region96
        $region95: #{tpu_custom_call.1} parent=91 // pred_region
          %s3131 = sand.u32 %s372, 1
          %s3132 = scalar_lea.sflag [#allocation5], %s3131
          %s3133 = sand.u32 %s372, 1
          %s3134 = smul.addr %s3133, 128
          %s3135 = scalar_lea.vmem [#allocation4], %s3134
          %3136 = dma.done %s3132, 2048
        $region96: #{tpu_custom_call.1} parent=91 // pred_fallthru
          _
        // Predicated region
        $region97: #{tpu_custom_call.1} parent=91 // pred_check
          %p3137 = pneg %p415
        $region98: #{tpu_custom_call.1} parent=91 // pred_check_branch
          %3139 = sbr.rel (%p3137) target = $region100
        $region99: #{tpu_custom_call.1} parent=91 // pred_region
          %s3140 = sand.u32 %s400, 1
          %s3141 = scalar_lea.sflag [#allocation7], %s3140
          %s3142 = sand.u32 %s400, 1
          %s3143 = smul.addr %s3142, 128
          %s3144 = scalar_lea.vmem [#allocation6], %s3143
          %3145 = dma.done %s3141, 2048
        $region100: #{tpu_custom_call.1} parent=91 // pred_fallthru
          _
      $region92: #{tpu_custom_call.1} parent=5 // pred_fallthru
        _
    $region6: #{tpu_custom_call.1} parent=1 // loop_footer
      %s32 = sadd.s32 1, %s28
    $region7: #{tpu_custom_call.1} parent=1 // loop_footer_branch
      %27 = sbr.rel target = $region3
    $region8: #{tpu_custom_call.1} parent=1 // loop_exit
      _
    %3146 = vsyncpa [#allocation5], 1
    %s3147 = scalar_lea.sflag [#allocation5], 1
    %3148 = vsyncpa %s3147, 1
    %3149 = vsyncpa [#allocation7], 1
    %s3150 = scalar_lea.sflag [#allocation7], 1
    %3151 = vsyncpa %s3150, 1

</llo_original>
